<compile_context>
chip_gen: v7x
topology: tpu7x:2x2x1
jax: 0.10.0
libtpu: 0.0.40
codegen_flags: <defaults>
</compile_context>

<pallas_src>
import numpy as np
import jax
import jax.numpy as jnp
from jax import lax
from jax.experimental import pallas as pl
from jax.experimental.pallas import tpu as pltpu


# ----------------------------------------------------------------------------
# Kernel helpers.
# ----------------------------------------------------------------------------
def _fill_im2col3(im_ref, act):
    """Write the dw-tap im2col of `act` into `im_ref`.

    act:    (H, W, C)   f32 activation (already BN+ReLU'd).
    im_ref: (H+2, W, 3C) f32 scratch.  After this call:
        im_ref[1+r, c, dw*C + ci] == act[r, c + dw - 1, ci]   (zero outside W)
        im_ref[0]  == im_ref[H+1] == 0                        (H halo rows)
    so a 3x3 SAME conv becomes 3 matmuls (one per dh) with K = 3*C.
    """
    H, W, C = act.shape
    zcol = jnp.zeros((H, 1, C), jnp.float32)
    zrow = jnp.zeros((1, W, 3 * C), jnp.float32)

    # dw = 1 (center tap)
    im_ref[1:H + 1, :, C:2 * C] = act
    # dw = 0 (input at x-1): shift right by one column, zero column 0
    im_ref[1:H + 1, 1:W, 0:C] = act[:, :W - 1, :]
    im_ref[1:H + 1, 0:1, 0:C] = zcol
    # dw = 2 (input at x+1): shift left by one column, zero column W-1
    im_ref[1:H + 1, 0:W - 1, 2 * C:3 * C] = act[:, 1:, :]
    im_ref[1:H + 1, W - 1:W, 2 * C:3 * C] = zcol
    # H halo rows.  Zeroed every step: scratch is per-core and the batch axis
    # is "parallel", so a one-time program_id==0 init would miss the 2nd core.
    im_ref[0:1, :, :] = zrow
    im_ref[H + 1:H + 2, :, :] = zrow


def _conv3x3_acc(im_ref, w_ref, acc_ref, H, W, K):
    """acc_ref[...] = sum_dh im_ref[dh:dh+H].reshape(H*W, K) @ w_ref[dh].

    bf16 MXU operands, f32 accumulation in VMEM scratch.
    """
    for dh in range(3):
        win = im_ref[dh:dh + H, :, :].reshape(H * W, K).astype(jnp.bfloat16)
        contrib = jnp.dot(win, w_ref[dh], preferred_element_type=jnp.float32)
        if dh == 0:
            acc_ref[...] = contrib
        else:
            acc_ref[...] += contrib


def _gblock_impl(x_ref, s1_ref, t1_ref, w1_ref, s2_ref, t2_ref, w2_ref,
                 wsc_ref, bsum_ref, out_ref, im1_ref, im2_ref, acc_ref):
    _, H, W, Cin = x_ref.shape
    Cout = out_ref.shape[3]

    x = x_ref[0]                                              # (H, W, Cin) f32

    # BN1 (running stats folded into scale/shift) + ReLU -- f32 VPU math.
    h1 = jnp.maximum(x * s1_ref[...] + t1_ref[...], 0.0)

    # conv1 (3x3, SAME): dw-folded im2col, 3 MXU matmuls with K = 3*Cin.
    _fill_im2col3(im1_ref, h1)
    _conv3x3_acc(im1_ref, w1_ref, acc_ref, H, W, 3 * Cin)

    # BN2 (+ conv1 bias folded into the shift) + ReLU.
    h2 = jnp.maximum(acc_ref[...] * s2_ref[...] + t2_ref[...], 0.0)
    h2 = h2.reshape(H, W, Cout)

    # conv2 (3x3, SAME): 3 MXU matmuls with K = 3*Cout.
    _fill_im2col3(im2_ref, h2)
    _conv3x3_acc(im2_ref, w2_ref, acc_ref, H, W, 3 * Cout)

    # Shortcut: spectrally-normalized 1x1 conv, or a plain identity add
    # (no identity-matrix matmul in the identity case).
    if wsc_ref is not None:
        sc = jnp.dot(x.reshape(H * W, Cin).astype(jnp.bfloat16), wsc_ref[...],
                     preferred_element_type=jnp.float32)
    else:
        sc = x.reshape(H * W, Cin)                            # Cin == Cout

    out = acc_ref[...] + sc + bsum_ref[...]                   # (H*W, Cout)
    out_ref[0] = out.reshape(H, W, Cout).astype(out_ref.dtype)


def _gblock_kernel_proj(x_ref, s1_ref, t1_ref, w1_ref, s2_ref, t2_ref, w2_ref,
                        wsc_ref, bsum_ref, out_ref, im1_ref, im2_ref, acc_ref):
    _gblock_impl(x_ref, s1_ref, t1_ref, w1_ref, s2_ref, t2_ref, w2_ref,
                 wsc_ref, bsum_ref, out_ref, im1_ref, im2_ref, acc_ref)


def _gblock_kernel_identity(x_ref, s1_ref, t1_ref, w1_ref, s2_ref, t2_ref,
                            w2_ref, bsum_ref, out_ref, im1_ref, im2_ref,
                            acc_ref):
    _gblock_impl(x_ref, s1_ref, t1_ref, w1_ref, s2_ref, t2_ref, w2_ref,
                 None, bsum_ref, out_ref, im1_ref, im2_ref, acc_ref)


# ----------------------------------------------------------------------------
# Glue: layout conversion, upsampling, parameter packing, pallas_call.
# ----------------------------------------------------------------------------
def _nearest_up2(x_nhwc):
    return jnp.repeat(jnp.repeat(x_nhwc, 2, axis=1), 2, axis=2)


def gblock_pallas(x_nchw, params):
    """GBlock forward.  Input/output use the PyTorch NCHW convention."""
    upsample = params["upsample"]
    # TODO(synk): fold the NCHW<->NHWC transposes and the nearest-x2 upsample
    # into the kernel (needs a C-major / sublane-interleave path); today they
    # are a fused XLA HBM pass outside the kernel.
    x = jnp.transpose(x_nchw, (0, 2, 3, 1)).astype(jnp.float32)   # NCHW -> NHWC
    if upsample:
        # nearest x2 commutes with the per-channel BN+ReLU that precedes it in
        # the PyTorch forward, so upsampling x up-front is exactly equivalent.
        x = _nearest_up2(x)
    B, H, W, Cin = x.shape
    Cout = params["w1_hwio"].shape[-1]

    # BN folded to per-channel scale/shift; conv biases folded into the
    # following shift / the final per-channel add.
    s1 = params["s1"].reshape(1, Cin)
    t1 = params["t1"].reshape(1, Cin)
    s2 = params["s2"].reshape(1, Cout)
    t2f = (params["s2"] * params["b1"] + params["t2"]).reshape(1, Cout)

    # Weights packed for the dw-folded im2col (K = 3*C) and cast to bf16 once
    # so the MXU runs its native bf16 path (f32 accumulation in the kernel).
    w1p = params["w1_hwio"].reshape(3, 3 * Cin, Cout).astype(jnp.bfloat16)
    w2p = params["w2_hwio"].reshape(3, 3 * Cout, Cout).astype(jnp.bfloat16)

    has_proj = params["wsc_hwio"] is not None
    if has_proj:
        wsc = params["wsc_hwio"].reshape(Cin, Cout).astype(jnp.bfloat16)
        bsc = params["bsc"]
    else:
        bsc = jnp.zeros((Cout,), jnp.float32)
    bsum = (params["b2"] + bsc).reshape(1, Cout)

    def full_spec(a):
        return pl.BlockSpec(a.shape, lambda b, n=a.ndim: (0,) * n)

    inputs = [x, s1, t1, w1p, s2, t2f, w2p]
    in_specs = [pl.BlockSpec((1, H, W, Cin), lambda b: (b, 0, 0, 0)),
                full_spec(s1), full_spec(t1), full_spec(w1p),
                full_spec(s2), full_spec(t2f), full_spec(w2p)]
    if has_proj:
        inputs.append(wsc)
        in_specs.append(full_spec(wsc))
        kernel = _gblock_kernel_proj
    else:
        kernel = _gblock_kernel_identity
    inputs.append(bsum)
    in_specs.append(full_spec(bsum))

    # TODO(synk): for DGMR-realistic H/W, add a spatial row-band grid axis
    # with a 1-row halo (sized per generation against VMEM) instead of whole
    # images, and a C-major layout for very small channel counts.
    out = pl.pallas_call(
        kernel,
        out_shape=jax.ShapeDtypeStruct((B, H, W, Cout), jnp.float32),
        grid_spec=pltpu.PrefetchScalarGridSpec(
            num_scalar_prefetch=0,
            grid=(B,),
            in_specs=in_specs,
            out_specs=pl.BlockSpec((1, H, W, Cout), lambda b: (b, 0, 0, 0)),
            scratch_shapes=[
                pltpu.VMEM((H + 2, W, 3 * Cin), jnp.float32),   # conv1 im2col
                pltpu.VMEM((H + 2, W, 3 * Cout), jnp.float32),  # conv2 im2col
                pltpu.VMEM((H * W, Cout), jnp.float32),         # f32 accumulator
            ],
        ),
        compiler_params=pltpu.CompilerParams(
            dimension_semantics=("parallel",),          # megacore: shard batch
            vmem_limit_bytes=64 * 1024 * 1024),
    )(*inputs)
    return jnp.transpose(out, (0, 3, 1, 2))                   # back to NCHW


# ----------------------------------------------------------------------------
# Deterministic synthetic parameters (shapes per GBlock.__init__).
# ----------------------------------------------------------------------------
def _spectral_normalize(w_oihw, u, eps):
    co = w_oihw.shape[0]
    w_mat = w_oihw.reshape(co, -1)

    def _norm(v):
        return v / jnp.maximum(jnp.linalg.norm(v), eps)

    v = _norm(w_mat.T @ u)          # one power iteration (torch default)
    u = _norm(w_mat @ v)
    sigma = u @ (w_mat @ v)
    return w_oihw / sigma


def make_gblock_params(key, in_channels, out_channels, sn_eps=1e-4,
                       upsample=False, bn_eps=1e-5):
    ks = jax.random.split(key, 20)

    def conv_init(kw_, kb_, co, ci, kh, kw):
        bound = 1.0 / np.sqrt(ci * kh * kw)
        w = jax.random.uniform(kw_, (co, ci, kh, kw), jnp.float32, -bound, bound)
        b = jax.random.uniform(kb_, (co,), jnp.float32, -bound, bound)
        return w, b

    def bn_init(kg, kb, km, kv, c):
        gamma = jax.random.uniform(kg, (c,), jnp.float32, 0.5, 1.5)
        beta = 0.1 * jax.random.normal(kb, (c,), jnp.float32)
        mean = 0.1 * jax.random.normal(km, (c,), jnp.float32)
        var = jax.random.uniform(kv, (c,), jnp.float32, 0.5, 1.5)
        s = gamma / jnp.sqrt(var + bn_eps)
        t = beta - mean * s
        return s, t

    w1, b1 = conv_init(ks[0], ks[1], out_channels, in_channels, 3, 3)
    w2, b2 = conv_init(ks[2], ks[3], out_channels, out_channels, 3, 3)
    u1 = jax.random.normal(ks[4], (out_channels,), jnp.float32)
    u2 = jax.random.normal(ks[5], (out_channels,), jnp.float32)
    w1 = _spectral_normalize(w1, u1, sn_eps)
    w2 = _spectral_normalize(w2, u2, sn_eps)

    has_1x1 = upsample or (in_channels != out_channels)
    if has_1x1:
        wsc, bsc = conv_init(ks[6], ks[7], out_channels, in_channels, 1, 1)
        usc = jax.random.normal(ks[8], (out_channels,), jnp.float32)
        wsc = _spectral_normalize(wsc, usc, sn_eps)
        wsc_hwio = jnp.transpose(wsc, (2, 3, 1, 0))
    else:
        wsc_hwio, bsc = None, None

    s1, t1 = bn_init(ks[9], ks[10], ks[11], ks[12], in_channels)
    s2, t2 = bn_init(ks[13], ks[14], ks[15], ks[16], out_channels)

    return dict(
        upsample=upsample,
        s1=s1, t1=t1,
        w1_hwio=jnp.transpose(w1, (2, 3, 1, 0)), b1=b1,
        s2=s2, t2=t2,
        w2_hwio=jnp.transpose(w2, (2, 3, 1, 0)), b2=b2,
        wsc_hwio=wsc_hwio, bsc=bsc,
    )


# ----------------------------------------------------------------------------
# Pure-JAX reference (follows the PyTorch forward order exactly, f32 HIGHEST).
# ----------------------------------------------------------------------------
def _conv_same(x, w_hwio, b):
    y = lax.conv_general_dilated(
        x, w_hwio, window_strides=(1, 1), padding="SAME",
        dimension_numbers=("NHWC", "HWIO", "NHWC"),
        precision=lax.Precision.HIGHEST)
    return y + b


def gblock_reference(x_nchw, params):
    x = jnp.transpose(x_nchw, (0, 2, 3, 1)).astype(jnp.float32)
    h = jnp.maximum(x * params["s1"] + params["t1"], 0.0)
    if params["upsample"]:
        h = _nearest_up2(h)
    h = _conv_same(h, params["w1_hwio"], params["b1"])
    h = jnp.maximum(h * params["s2"] + params["t2"], 0.0)
    h = _conv_same(h, params["w2_hwio"], params["b2"])
    sc = x
    if params["upsample"]:
        sc = _nearest_up2(sc)
    if params["wsc_hwio"] is not None:
        sc = _conv_same(sc, params["wsc_hwio"], params["bsc"])
    return jnp.transpose(h + sc, (0, 3, 1, 2))


# ----------------------------------------------------------------------------
if __name__ == "__main__":
    key = jax.random.PRNGKey(0)
    configs = [
        dict(B=2, Cin=4, Cout=8, H=16, W=16, upsample=False),  # channel change
        dict(B=2, Cin=4, Cout=8, H=8, W=8, upsample=True),     # upsample path
        dict(B=2, Cin=8, Cout=8, H=16, W=16, upsample=False),  # identity shortcut
    ]
    for cfg in configs:
        kx, kp, key = jax.random.split(key, 3)
        x = jax.random.normal(
            kx, (cfg["B"], cfg["Cin"], cfg["H"], cfg["W"]), jnp.float32)
        params = make_gblock_params(kp, cfg["Cin"], cfg["Cout"],
                                    upsample=cfg["upsample"])
        out = jax.block_until_ready(gblock_pallas(x, params))
        ref = jax.block_until_ready(gblock_reference(x, params))
        assert out.shape == ref.shape, (out.shape, ref.shape)
        # Tolerance loosened vs. the f32-HIGHEST reference: the kernel feeds the
        # MXU native bf16 operands (f32 accumulation).
        np.testing.assert_allclose(np.asarray(out), np.asarray(ref),
                                   rtol=5e-2, atol=5e-2)
    print("KERNEL_OK")
</pallas_src>

<mosaic_0001>
module attributes {stable_mosaic.version = 11 : i64} {
  func.func @_gblock_kernel_proj(%arg0: i32, %arg1: memref<1x16x16x4xf32, #tpu.memory_space<vmem>>, %arg2: memref<1x4xf32, #tpu.memory_space<vmem>>, %arg3: memref<1x4xf32, #tpu.memory_space<vmem>>, %arg4: memref<3x12x8xbf16, #tpu.memory_space<vmem>>, %arg5: memref<1x8xf32, #tpu.memory_space<vmem>>, %arg6: memref<1x8xf32, #tpu.memory_space<vmem>>, %arg7: memref<3x24x8xbf16, #tpu.memory_space<vmem>>, %arg8: memref<4x8xbf16, #tpu.memory_space<vmem>>, %arg9: memref<1x8xf32, #tpu.memory_space<vmem>>, %arg10: memref<1x16x16x8xf32, #tpu.memory_space<vmem>>, %arg11: memref<18x16x12xf32, #tpu.memory_space<vmem>>, %arg12: memref<18x16x24xf32, #tpu.memory_space<vmem>>, %arg13: memref<256x8xf32, #tpu.memory_space<vmem>>) attributes {dimension_semantics = [#tpu.dimension_semantics<parallel>], iteration_bounds = array<i64: 2>, scalar_prefetch = 0 : i64, scratch_operands = 3 : i64, tpu.core_type = #tpu.core_type<tc>, window_params = [{transform_indices = @transform_0, window_bounds = array<i64: 1, 16, 16, 4>}, {pipeline_mode = #tpu.pipeline_mode<synchronous>, transform_indices = @transform_1, window_bounds = array<i64: 1, 4>}, {pipeline_mode = #tpu.pipeline_mode<synchronous>, transform_indices = @transform_2, window_bounds = array<i64: 1, 4>}, {pipeline_mode = #tpu.pipeline_mode<synchronous>, transform_indices = @transform_3, window_bounds = array<i64: 3, 12, 8>}, {pipeline_mode = #tpu.pipeline_mode<synchronous>, transform_indices = @transform_4, window_bounds = array<i64: 1, 8>}, {pipeline_mode = #tpu.pipeline_mode<synchronous>, transform_indices = @transform_5, window_bounds = array<i64: 1, 8>}, {pipeline_mode = #tpu.pipeline_mode<synchronous>, transform_indices = @transform_6, window_bounds = array<i64: 3, 24, 8>}, {pipeline_mode = #tpu.pipeline_mode<synchronous>, transform_indices = @transform_7, window_bounds = array<i64: 4, 8>}, {pipeline_mode = #tpu.pipeline_mode<synchronous>, transform_indices = @transform_8, window_bounds = array<i64: 1, 8>}, {transform_indices = @transform_9, window_bounds = array<i64: 1, 16, 16, 8>}]} {
    %c0 = arith.constant 0 : index
    %c0_0 = arith.constant 0 : index
    %c0_1 = arith.constant 0 : index
    %c0_2 = arith.constant 0 : index
    %0 = vector.load %arg1[%c0, %c0_0, %c0_1, %c0_2] : memref<1x16x16x4xf32, #tpu.memory_space<vmem>>, vector<1x16x16x4xf32>
    %1 = vector.shape_cast %0 : vector<1x16x16x4xf32> to vector<16x16x4xf32>
    %c0_3 = arith.constant 0 : index
    %c0_4 = arith.constant 0 : index
    %2 = vector.load %arg2[%c0_3, %c0_4] : memref<1x4xf32, #tpu.memory_space<vmem>>, vector<1x4xf32>
    %3 = vector.shape_cast %2 : vector<1x4xf32> to vector<1x1x4xf32>
    %4 = vector.broadcast %3 : vector<1x1x4xf32> to vector<16x16x4xf32>
    %5 = arith.mulf %1, %4 : vector<16x16x4xf32>
    %c0_5 = arith.constant 0 : index
    %c0_6 = arith.constant 0 : index
    %6 = vector.load %arg3[%c0_5, %c0_6] : memref<1x4xf32, #tpu.memory_space<vmem>>, vector<1x4xf32>
    %7 = vector.shape_cast %6 : vector<1x4xf32> to vector<1x1x4xf32>
    %8 = vector.broadcast %7 : vector<1x1x4xf32> to vector<16x16x4xf32>
    %9 = arith.addf %5, %8 : vector<16x16x4xf32>
    %cst = arith.constant 0.000000e+00 : f32
    %10 = vector.broadcast %cst : f32 to vector<16x16x4xf32>
    %11 = arith.maximumf %9, %10 : vector<16x16x4xf32>
    %cst_7 = arith.constant 0.000000e+00 : f32
    %12 = vector.broadcast %cst_7 : f32 to vector<16x1x4xf32>
    %cst_8 = arith.constant 0.000000e+00 : f32
    %13 = vector.broadcast %cst_8 : f32 to vector<1x16x12xf32>
    %c1 = arith.constant 1 : index
    %c0_9 = arith.constant 0 : index
    %c4 = arith.constant 4 : index
    %14 = vector.load %arg11[%c1, %c0_9, %c4] : memref<18x16x12xf32, #tpu.memory_space<vmem>>, vector<16x16x4xf32>
    tpu.vector_store %arg11[%c1, %c0_9, %c4], %11 {strides = array<i32>} : memref<18x16x12xf32, #tpu.memory_space<vmem>>, vector<16x16x4xf32>,
    %15 = vector.extract_strided_slice %11 {offsets = [0, 0, 0], sizes = [16, 15, 4], strides = [1, 1, 1]} : vector<16x16x4xf32> to vector<16x15x4xf32>
    %c1_10 = arith.constant 1 : index
    %c1_11 = arith.constant 1 : index
    %c0_12 = arith.constant 0 : index
    %16 = vector.load %arg11[%c1_10, %c1_11, %c0_12] : memref<18x16x12xf32, #tpu.memory_space<vmem>>, vector<16x15x4xf32>
    tpu.vector_store %arg11[%c1_10, %c1_11, %c0_12], %15 {strides = array<i32>} : memref<18x16x12xf32, #tpu.memory_space<vmem>>, vector<16x15x4xf32>,
    %c1_13 = arith.constant 1 : index
    %c0_14 = arith.constant 0 : index
    %c0_15 = arith.constant 0 : index
    %17 = vector.load %arg11[%c1_13, %c0_14, %c0_15] : memref<18x16x12xf32, #tpu.memory_space<vmem>>, vector<16x1x4xf32>
    tpu.vector_store %arg11[%c1_13, %c0_14, %c0_15], %12 {strides = array<i32>} : memref<18x16x12xf32, #tpu.memory_space<vmem>>, vector<16x1x4xf32>,
    %18 = vector.extract_strided_slice %11 {offsets = [0, 1, 0], sizes = [16, 15, 4], strides = [1, 1, 1]} : vector<16x16x4xf32> to vector<16x15x4xf32>
    %c1_16 = arith.constant 1 : index
    %c0_17 = arith.constant 0 : index
    %c8 = arith.constant 8 : index
    %19 = vector.load %arg11[%c1_16, %c0_17, %c8] : memref<18x16x12xf32, #tpu.memory_space<vmem>>, vector<16x15x4xf32>
    tpu.vector_store %arg11[%c1_16, %c0_17, %c8], %18 {strides = array<i32>} : memref<18x16x12xf32, #tpu.memory_space<vmem>>, vector<16x15x4xf32>,
    %c1_18 = arith.constant 1 : index
    %c15 = arith.constant 15 : index
    %c8_19 = arith.constant 8 : index
    %20 = vector.load %arg11[%c1_18, %c15, %c8_19] : memref<18x16x12xf32, #tpu.memory_space<vmem>>, vector<16x1x4xf32>
    tpu.vector_store %arg11[%c1_18, %c15, %c8_19], %12 {strides = array<i32>} : memref<18x16x12xf32, #tpu.memory_space<vmem>>, vector<16x1x4xf32>,
    %c0_20 = arith.constant 0 : index
    %c0_21 = arith.constant 0 : index
    %c0_22 = arith.constant 0 : index
    %21 = vector.load %arg11[%c0_20, %c0_21, %c0_22] : memref<18x16x12xf32, #tpu.memory_space<vmem>>, vector<1x16x12xf32>
    tpu.vector_store %arg11[%c0_20, %c0_21, %c0_22], %13 {strides = array<i32>} : memref<18x16x12xf32, #tpu.memory_space<vmem>>, vector<1x16x12xf32>,
    %c17 = arith.constant 17 : index
    %c0_23 = arith.constant 0 : index
    %c0_24 = arith.constant 0 : index
    %22 = vector.load %arg11[%c17, %c0_23, %c0_24] : memref<18x16x12xf32, #tpu.memory_space<vmem>>, vector<1x16x12xf32>
    tpu.vector_store %arg11[%c17, %c0_23, %c0_24], %13 {strides = array<i32>} : memref<18x16x12xf32, #tpu.memory_space<vmem>>, vector<1x16x12xf32>,
    %c0_25 = arith.constant 0 : index
    %c0_26 = arith.constant 0 : index
    %c0_27 = arith.constant 0 : index
    %23 = vector.load %arg11[%c0_25, %c0_26, %c0_27] : memref<18x16x12xf32, #tpu.memory_space<vmem>>, vector<16x16x12xf32>
    %24 = vector.shape_cast %23 : vector<16x16x12xf32> to vector<256x12xf32>
    %25 = arith.truncf %24 : vector<256x12xf32> to vector<256x12xbf16>
    %c0_28 = arith.constant 0 : index
    %c0_29 = arith.constant 0 : index
    %c0_30 = arith.constant 0 : index
    %26 = vector.load %arg4[%c0_28, %c0_29, %c0_30] : memref<3x12x8xbf16, #tpu.memory_space<vmem>>, vector<1x12x8xbf16>
    %27 = vector.shape_cast %26 : vector<1x12x8xbf16> to vector<12x8xbf16>
    %cst_31 = arith.constant dense<0.000000e+00> : vector<256x8xf32>
    %28 = tpu.matmul %25, %27, %cst_31 {dimension_numbers = #tpu.dot_dimension_numbers<[1], [0], [0], [1], [0, 0, 1, 1], [], []>} : vector<256x12xbf16>, vector<12x8xbf16>, vector<256x8xf32> -> vector<256x8xf32>
    %c0_32 = arith.constant 0 : index
    %c0_33 = arith.constant 0 : index
    %29 = vector.load %arg13[%c0_32, %c0_33] : memref<256x8xf32, #tpu.memory_space<vmem>>, vector<256x8xf32>
    tpu.vector_store %arg13[%c0_32, %c0_33], %28 {strides = array<i32>} : memref<256x8xf32, #tpu.memory_space<vmem>>, vector<256x8xf32>,
    %c1_34 = arith.constant 1 : index
    %c0_35 = arith.constant 0 : index
    %c0_36 = arith.constant 0 : index
    %30 = vector.load %arg11[%c1_34, %c0_35, %c0_36] : memref<18x16x12xf32, #tpu.memory_space<vmem>>, vector<16x16x12xf32>
    %31 = vector.shape_cast %30 : vector<16x16x12xf32> to vector<256x12xf32>
    %32 = arith.truncf %31 : vector<256x12xf32> to vector<256x12xbf16>
    %c1_37 = arith.constant 1 : index
    %c0_38 = arith.constant 0 : index
    %c0_39 = arith.constant 0 : index
    %33 = vector.load %arg4[%c1_37, %c0_38, %c0_39] : memref<3x12x8xbf16, #tpu.memory_space<vmem>>, vector<1x12x8xbf16>
    %34 = vector.shape_cast %33 : vector<1x12x8xbf16> to vector<12x8xbf16>
    %cst_40 = arith.constant dense<0.000000e+00> : vector<256x8xf32>
    %35 = tpu.matmul %32, %34, %cst_40 {dimension_numbers = #tpu.dot_dimension_numbers<[1], [0], [0], [1], [0, 0, 1, 1], [], []>} : vector<256x12xbf16>, vector<12x8xbf16>, vector<256x8xf32> -> vector<256x8xf32>
    %c0_41 = arith.constant 0 : index
    %c0_42 = arith.constant 0 : index
    %36 = vector.load %arg13[%c0_41, %c0_42] : memref<256x8xf32, #tpu.memory_space<vmem>>, vector<256x8xf32>
    %37 = arith.addf %36, %35 : vector<256x8xf32>
    %c0_43 = arith.constant 0 : index
    %c0_44 = arith.constant 0 : index
    %38 = vector.load %arg13[%c0_43, %c0_44] : memref<256x8xf32, #tpu.memory_space<vmem>>, vector<256x8xf32>
    tpu.vector_store %arg13[%c0_43, %c0_44], %37 {strides = array<i32>} : memref<256x8xf32, #tpu.memory_space<vmem>>, vector<256x8xf32>,
    %c2 = arith.constant 2 : index
    %c0_45 = arith.constant 0 : index
    %c0_46 = arith.constant 0 : index
    %39 = vector.load %arg11[%c2, %c0_45, %c0_46] : memref<18x16x12xf32, #tpu.memory_space<vmem>>, vector<16x16x12xf32>
    %40 = vector.shape_cast %39 : vector<16x16x12xf32> to vector<256x12xf32>
    %41 = arith.truncf %40 : vector<256x12xf32> to vector<256x12xbf16>
    %c2_47 = arith.constant 2 : index
    %c0_48 = arith.constant 0 : index
    %c0_49 = arith.constant 0 : index
    %42 = vector.load %arg4[%c2_47, %c0_48, %c0_49] : memref<3x12x8xbf16, #tpu.memory_space<vmem>>, vector<1x12x8xbf16>
    %43 = vector.shape_cast %42 : vector<1x12x8xbf16> to vector<12x8xbf16>
    %cst_50 = arith.constant dense<0.000000e+00> : vector<256x8xf32>
    %44 = tpu.matmul %41, %43, %cst_50 {dimension_numbers = #tpu.dot_dimension_numbers<[1], [0], [0], [1], [0, 0, 1, 1], [], []>} : vector<256x12xbf16>, vector<12x8xbf16>, vector<256x8xf32> -> vector<256x8xf32>
    %c0_51 = arith.constant 0 : index
    %c0_52 = arith.constant 0 : index
    %45 = vector.load %arg13[%c0_51, %c0_52] : memref<256x8xf32, #tpu.memory_space<vmem>>, vector<256x8xf32>
    %46 = arith.addf %45, %44 : vector<256x8xf32>
    %c0_53 = arith.constant 0 : index
    %c0_54 = arith.constant 0 : index
    %47 = vector.load %arg13[%c0_53, %c0_54] : memref<256x8xf32, #tpu.memory_space<vmem>>, vector<256x8xf32>
    tpu.vector_store %arg13[%c0_53, %c0_54], %46 {strides = array<i32>} : memref<256x8xf32, #tpu.memory_space<vmem>>, vector<256x8xf32>,
    %c0_55 = arith.constant 0 : index
    %c0_56 = arith.constant 0 : index
    %48 = vector.load %arg13[%c0_55, %c0_56] : memref<256x8xf32, #tpu.memory_space<vmem>>, vector<256x8xf32>
    %c0_57 = arith.constant 0 : index
    %c0_58 = arith.constant 0 : index
    %49 = vector.load %arg5[%c0_57, %c0_58] : memref<1x8xf32, #tpu.memory_space<vmem>>, vector<1x8xf32>
    %50 = vector.broadcast %49 : vector<1x8xf32> to vector<256x8xf32>
    %51 = arith.mulf %48, %50 : vector<256x8xf32>
    %c0_59 = arith.constant 0 : index
    %c0_60 = arith.constant 0 : index
    %52 = vector.load %arg6[%c0_59, %c0_60] : memref<1x8xf32, #tpu.memory_space<vmem>>, vector<1x8xf32>
    %53 = vector.broadcast %52 : vector<1x8xf32> to vector<256x8xf32>
    %54 = arith.addf %51, %53 : vector<256x8xf32>
    %cst_61 = arith.constant 0.000000e+00 : f32
    %55 = vector.broadcast %cst_61 : f32 to vector<256x8xf32>
    %56 = arith.maximumf %54, %55 : vector<256x8xf32>
    %57 = vector.shape_cast %56 : vector<256x8xf32> to vector<16x16x8xf32>
    %cst_62 = arith.constant 0.000000e+00 : f32
    %58 = vector.broadcast %cst_62 : f32 to vector<16x1x8xf32>
    %cst_63 = arith.constant 0.000000e+00 : f32
    %59 = vector.broadcast %cst_63 : f32 to vector<1x16x24xf32>
    %c1_64 = arith.constant 1 : index
    %c0_65 = arith.constant 0 : index
    %c8_66 = arith.constant 8 : index
    %60 = vector.load %arg12[%c1_64, %c0_65, %c8_66] : memref<18x16x24xf32, #tpu.memory_space<vmem>>, vector<16x16x8xf32>
    tpu.vector_store %arg12[%c1_64, %c0_65, %c8_66], %57 {strides = array<i32>} : memref<18x16x24xf32, #tpu.memory_space<vmem>>, vector<16x16x8xf32>,
    %61 = vector.extract_strided_slice %57 {offsets = [0, 0, 0], sizes = [16, 15, 8], strides = [1, 1, 1]} : vector<16x16x8xf32> to vector<16x15x8xf32>
    %c1_67 = arith.constant 1 : index
    %c1_68 = arith.constant 1 : index
    %c0_69 = arith.constant 0 : index
    %62 = vector.load %arg12[%c1_67, %c1_68, %c0_69] : memref<18x16x24xf32, #tpu.memory_space<vmem>>, vector<16x15x8xf32>
    tpu.vector_store %arg12[%c1_67, %c1_68, %c0_69], %61 {strides = array<i32>} : memref<18x16x24xf32, #tpu.memory_space<vmem>>, vector<16x15x8xf32>,
    %c1_70 = arith.constant 1 : index
    %c0_71 = arith.constant 0 : index
    %c0_72 = arith.constant 0 : index
    %63 = vector.load %arg12[%c1_70, %c0_71, %c0_72] : memref<18x16x24xf32, #tpu.memory_space<vmem>>, vector<16x1x8xf32>
    tpu.vector_store %arg12[%c1_70, %c0_71, %c0_72], %58 {strides = array<i32>} : memref<18x16x24xf32, #tpu.memory_space<vmem>>, vector<16x1x8xf32>,
    %64 = vector.extract_strided_slice %57 {offsets = [0, 1, 0], sizes = [16, 15, 8], strides = [1, 1, 1]} : vector<16x16x8xf32> to vector<16x15x8xf32>
    %c1_73 = arith.constant 1 : index
    %c0_74 = arith.constant 0 : index
    %c16 = arith.constant 16 : index
    %65 = vector.load %arg12[%c1_73, %c0_74, %c16] : memref<18x16x24xf32, #tpu.memory_space<vmem>>, vector<16x15x8xf32>
    tpu.vector_store %arg12[%c1_73, %c0_74, %c16], %64 {strides = array<i32>} : memref<18x16x24xf32, #tpu.memory_space<vmem>>, vector<16x15x8xf32>,
    %c1_75 = arith.constant 1 : index
    %c15_76 = arith.constant 15 : index
    %c16_77 = arith.constant 16 : index
    %66 = vector.load %arg12[%c1_75, %c15_76, %c16_77] : memref<18x16x24xf32, #tpu.memory_space<vmem>>, vector<16x1x8xf32>
    tpu.vector_store %arg12[%c1_75, %c15_76, %c16_77], %58 {strides = array<i32>} : memref<18x16x24xf32, #tpu.memory_space<vmem>>, vector<16x1x8xf32>,
    %c0_78 = arith.constant 0 : index
    %c0_79 = arith.constant 0 : index
    %c0_80 = arith.constant 0 : index
    %67 = vector.load %arg12[%c0_78, %c0_79, %c0_80] : memref<18x16x24xf32, #tpu.memory_space<vmem>>, vector<1x16x24xf32>
    tpu.vector_store %arg12[%c0_78, %c0_79, %c0_80], %59 {strides = array<i32>} : memref<18x16x24xf32, #tpu.memory_space<vmem>>, vector<1x16x24xf32>,
    %c17_81 = arith.constant 17 : index
    %c0_82 = arith.constant 0 : index
    %c0_83 = arith.constant 0 : index
    %68 = vector.load %arg12[%c17_81, %c0_82, %c0_83] : memref<18x16x24xf32, #tpu.memory_space<vmem>>, vector<1x16x24xf32>
    tpu.vector_store %arg12[%c17_81, %c0_82, %c0_83], %59 {strides = array<i32>} : memref<18x16x24xf32, #tpu.memory_space<vmem>>, vector<1x16x24xf32>,
    %c0_84 = arith.constant 0 : index
    %c0_85 = arith.constant 0 : index
    %c0_86 = arith.constant 0 : index
    %69 = vector.load %arg12[%c0_84, %c0_85, %c0_86] : memref<18x16x24xf32, #tpu.memory_space<vmem>>, vector<16x16x24xf32>
    %70 = vector.shape_cast %69 : vector<16x16x24xf32> to vector<256x24xf32>
    %71 = arith.truncf %70 : vector<256x24xf32> to vector<256x24xbf16>
    %c0_87 = arith.constant 0 : index
    %c0_88 = arith.constant 0 : index
    %c0_89 = arith.constant 0 : index
    %72 = vector.load %arg7[%c0_87, %c0_88, %c0_89] : memref<3x24x8xbf16, #tpu.memory_space<vmem>>, vector<1x24x8xbf16>
    %73 = vector.shape_cast %72 : vector<1x24x8xbf16> to vector<24x8xbf16>
    %cst_90 = arith.constant dense<0.000000e+00> : vector<256x8xf32>
    %74 = tpu.matmul %71, %73, %cst_90 {dimension_numbers = #tpu.dot_dimension_numbers<[1], [0], [0], [1], [0, 0, 1, 1], [], []>} : vector<256x24xbf16>, vector<24x8xbf16>, vector<256x8xf32> -> vector<256x8xf32>
    %c0_91 = arith.constant 0 : index
    %c0_92 = arith.constant 0 : index
    %75 = vector.load %arg13[%c0_91, %c0_92] : memref<256x8xf32, #tpu.memory_space<vmem>>, vector<256x8xf32>
    tpu.vector_store %arg13[%c0_91, %c0_92], %74 {strides = array<i32>} : memref<256x8xf32, #tpu.memory_space<vmem>>, vector<256x8xf32>,
    %c1_93 = arith.constant 1 : index
    %c0_94 = arith.constant 0 : index
    %c0_95 = arith.constant 0 : index
    %76 = vector.load %arg12[%c1_93, %c0_94, %c0_95] : memref<18x16x24xf32, #tpu.memory_space<vmem>>, vector<16x16x24xf32>
    %77 = vector.shape_cast %76 : vector<16x16x24xf32> to vector<256x24xf32>
    %78 = arith.truncf %77 : vector<256x24xf32> to vector<256x24xbf16>
    %c1_96 = arith.constant 1 : index
    %c0_97 = arith.constant 0 : index
    %c0_98 = arith.constant 0 : index
    %79 = vector.load %arg7[%c1_96, %c0_97, %c0_98] : memref<3x24x8xbf16, #tpu.memory_space<vmem>>, vector<1x24x8xbf16>
    %80 = vector.shape_cast %79 : vector<1x24x8xbf16> to vector<24x8xbf16>
    %cst_99 = arith.constant dense<0.000000e+00> : vector<256x8xf32>
    %81 = tpu.matmul %78, %80, %cst_99 {dimension_numbers = #tpu.dot_dimension_numbers<[1], [0], [0], [1], [0, 0, 1, 1], [], []>} : vector<256x24xbf16>, vector<24x8xbf16>, vector<256x8xf32> -> vector<256x8xf32>
    %c0_100 = arith.constant 0 : index
    %c0_101 = arith.constant 0 : index
    %82 = vector.load %arg13[%c0_100, %c0_101] : memref<256x8xf32, #tpu.memory_space<vmem>>, vector<256x8xf32>
    %83 = arith.addf %82, %81 : vector<256x8xf32>
    %c0_102 = arith.constant 0 : index
    %c0_103 = arith.constant 0 : index
    %84 = vector.load %arg13[%c0_102, %c0_103] : memref<256x8xf32, #tpu.memory_space<vmem>>, vector<256x8xf32>
    tpu.vector_store %arg13[%c0_102, %c0_103], %83 {strides = array<i32>} : memref<256x8xf32, #tpu.memory_space<vmem>>, vector<256x8xf32>,
    %c2_104 = arith.constant 2 : index
    %c0_105 = arith.constant 0 : index
    %c0_106 = arith.constant 0 : index
    %85 = vector.load %arg12[%c2_104, %c0_105, %c0_106] : memref<18x16x24xf32, #tpu.memory_space<vmem>>, vector<16x16x24xf32>
    %86 = vector.shape_cast %85 : vector<16x16x24xf32> to vector<256x24xf32>
    %87 = arith.truncf %86 : vector<256x24xf32> to vector<256x24xbf16>
    %c2_107 = arith.constant 2 : index
    %c0_108 = arith.constant 0 : index
    %c0_109 = arith.constant 0 : index
    %88 = vector.load %arg7[%c2_107, %c0_108, %c0_109] : memref<3x24x8xbf16, #tpu.memory_space<vmem>>, vector<1x24x8xbf16>
    %89 = vector.shape_cast %88 : vector<1x24x8xbf16> to vector<24x8xbf16>
    %cst_110 = arith.constant dense<0.000000e+00> : vector<256x8xf32>
    %90 = tpu.matmul %87, %89, %cst_110 {dimension_numbers = #tpu.dot_dimension_numbers<[1], [0], [0], [1], [0, 0, 1, 1], [], []>} : vector<256x24xbf16>, vector<24x8xbf16>, vector<256x8xf32> -> vector<256x8xf32>
    %c0_111 = arith.constant 0 : index
    %c0_112 = arith.constant 0 : index
    %91 = vector.load %arg13[%c0_111, %c0_112] : memref<256x8xf32, #tpu.memory_space<vmem>>, vector<256x8xf32>
    %92 = arith.addf %91, %90 : vector<256x8xf32>
    %c0_113 = arith.constant 0 : index
    %c0_114 = arith.constant 0 : index
    %93 = vector.load %arg13[%c0_113, %c0_114] : memref<256x8xf32, #tpu.memory_space<vmem>>, vector<256x8xf32>
    tpu.vector_store %arg13[%c0_113, %c0_114], %92 {strides = array<i32>} : memref<256x8xf32, #tpu.memory_space<vmem>>, vector<256x8xf32>,
    %94 = vector.shape_cast %1 : vector<16x16x4xf32> to vector<256x4xf32>
    %95 = arith.truncf %94 : vector<256x4xf32> to vector<256x4xbf16>
    %c0_115 = arith.constant 0 : index
    %c0_116 = arith.constant 0 : index
    %96 = vector.load %arg8[%c0_115, %c0_116] : memref<4x8xbf16, #tpu.memory_space<vmem>>, vector<4x8xbf16>
    %cst_117 = arith.constant dense<0.000000e+00> : vector<256x8xf32>
    %97 = tpu.matmul %95, %96, %cst_117 {dimension_numbers = #tpu.dot_dimension_numbers<[1], [0], [0], [1], [0, 0, 1, 1], [], []>} : vector<256x4xbf16>, vector<4x8xbf16>, vector<256x8xf32> -> vector<256x8xf32>
    %c0_118 = arith.constant 0 : index
    %c0_119 = arith.constant 0 : index
    %98 = vector.load %arg13[%c0_118, %c0_119] : memref<256x8xf32, #tpu.memory_space<vmem>>, vector<256x8xf32>
    %99 = arith.addf %98, %97 : vector<256x8xf32>
    %c0_120 = arith.constant 0 : index
    %c0_121 = arith.constant 0 : index
    %100 = vector.load %arg9[%c0_120, %c0_121] : memref<1x8xf32, #tpu.memory_space<vmem>>, vector<1x8xf32>
    %101 = vector.broadcast %100 : vector<1x8xf32> to vector<256x8xf32>
    %102 = arith.addf %99, %101 : vector<256x8xf32>
    %103 = vector.shape_cast %102 : vector<256x8xf32> to vector<16x16x8xf32>
    %c0_122 = arith.constant 0 : index
    %c0_123 = arith.constant 0 : index
    %c0_124 = arith.constant 0 : index
    %c0_125 = arith.constant 0 : index
    %104 = vector.load %arg10[%c0_122, %c0_123, %c0_124, %c0_125] : memref<1x16x16x8xf32, #tpu.memory_space<vmem>>, vector<1x16x16x8xf32>
    %105 = vector.shape_cast %104 : vector<1x16x16x8xf32> to vector<16x16x8xf32>
    %106 = vector.shape_cast %103 : vector<16x16x8xf32> to vector<1x16x16x8xf32>
    tpu.vector_store %arg10[%c0_122, %c0_123, %c0_124, %c0_125], %106 {strides = array<i32>} : memref<1x16x16x8xf32, #tpu.memory_space<vmem>>, vector<1x16x16x8xf32>,
    return
  }
  func.func @transform_0(%arg0: i32) -> (i32, i32, i32, i32) {
    %c0_i32 = arith.constant 0 : i32
    %c0_i32_0 = arith.constant 0 : i32
    %c0_i32_1 = arith.constant 0 : i32
    %c0_i32_2 = arith.constant 0 : i32
    return %arg0, %c0_i32, %c0_i32_0, %c0_i32_1 : i32, i32, i32, i32
  }
  func.func @transform_1(%arg0: i32) -> (i32, i32) {
    %c0_i32 = arith.constant 0 : i32
    %c0_i32_0 = arith.constant 0 : i32
    %c0_i32_1 = arith.constant 0 : i32
    return %c0_i32, %c0_i32_0 : i32, i32
  }
  func.func @transform_2(%arg0: i32) -> (i32, i32) {
    %c0_i32 = arith.constant 0 : i32
    %c0_i32_0 = arith.constant 0 : i32
    %c0_i32_1 = arith.constant 0 : i32
    return %c0_i32, %c0_i32_0 : i32, i32
  }
  func.func @transform_3(%arg0: i32) -> (i32, i32, i32) {
    %c0_i32 = arith.constant 0 : i32
    %c0_i32_0 = arith.constant 0 : i32
    %c0_i32_1 = arith.constant 0 : i32
    %c0_i32_2 = arith.constant 0 : i32
    return %c0_i32, %c0_i32_0, %c0_i32_1 : i32, i32, i32
  }
  func.func @transform_4(%arg0: i32) -> (i32, i32) {
    %c0_i32 = arith.constant 0 : i32
    %c0_i32_0 = arith.constant 0 : i32
    %c0_i32_1 = arith.constant 0 : i32
    return %c0_i32, %c0_i32_0 : i32, i32
  }
  func.func @transform_5(%arg0: i32) -> (i32, i32) {
    %c0_i32 = arith.constant 0 : i32
    %c0_i32_0 = arith.constant 0 : i32
    %c0_i32_1 = arith.constant 0 : i32
    return %c0_i32, %c0_i32_0 : i32, i32
  }
  func.func @transform_6(%arg0: i32) -> (i32, i32, i32) {
    %c0_i32 = arith.constant 0 : i32
    %c0_i32_0 = arith.constant 0 : i32
    %c0_i32_1 = arith.constant 0 : i32
    %c0_i32_2 = arith.constant 0 : i32
    return %c0_i32, %c0_i32_0, %c0_i32_1 : i32, i32, i32
  }
  func.func @transform_7(%arg0: i32) -> (i32, i32) {
    %c0_i32 = arith.constant 0 : i32
    %c0_i32_0 = arith.constant 0 : i32
    %c0_i32_1 = arith.constant 0 : i32
    return %c0_i32, %c0_i32_0 : i32, i32
  }
  func.func @transform_8(%arg0: i32) -> (i32, i32) {
    %c0_i32 = arith.constant 0 : i32
    %c0_i32_0 = arith.constant 0 : i32
    %c0_i32_1 = arith.constant 0 : i32
    return %c0_i32, %c0_i32_0 : i32, i32
  }
  func.func @transform_9(%arg0: i32) -> (i32, i32, i32, i32) {
    %c0_i32 = arith.constant 0 : i32
    %c0_i32_0 = arith.constant 0 : i32
    %c0_i32_1 = arith.constant 0 : i32
    %c0_i32_2 = arith.constant 0 : i32
    return %arg0, %c0_i32, %c0_i32_0, %c0_i32_1 : i32, i32, i32, i32
  }
}

</mosaic_0001>

<llo_original>
// kernel: tpu_custom_call.1
$region0: #{tpu_custom_call.1}
  #allocation0 [shape = 'u32[]', space=smem, size = 0x4, offset = 0x4, fixed_abs, tag = 'smem constant byte address 0x4 - core index']
  #allocation1 [shape = 'u32[144,128]{1,0:T(1,128)}', space=vmem, size = 0x12000, scoped, tag = 'internal scratch']
  #allocation2 [shape = 'f32[18,16,12]{2,1,0:T(8,128)}', space=vmem, size = 0x24000, scoped, tag = 'scratch operand']
  #allocation3 [shape = 'f32[18,16,24]{2,1,0:T(8,128)}', space=vmem, size = 0x24000, scoped, tag = 'scratch operand']
  #allocation4 [shape = 'f32[256,8]{1,0:T(8,128)}', space=vmem, size = 0x20000, scoped, tag = 'scratch operand']
  %s0 = inlined_call_operand.hbm [shape: f32[2,16,16,4], index: 0, kind: input, shape index: {}]
  %s1 = inlined_call_operand.hbm [shape: f32[1,4], index: 1, kind: input, shape index: {}]
  %s2 = inlined_call_operand.hbm [shape: f32[1,4], index: 2, kind: input, shape index: {}]
  %s3 = inlined_call_operand.hbm [shape: bf16[3,12,8], index: 3, kind: input, shape index: {}]
  %s4 = inlined_call_operand.hbm [shape: f32[1,8], index: 4, kind: input, shape index: {}]
  %s5 = inlined_call_operand.hbm [shape: f32[1,8], index: 5, kind: input, shape index: {}]
  %s6 = inlined_call_operand.hbm [shape: bf16[3,24,8], index: 6, kind: input, shape index: {}]
  %s7 = inlined_call_operand.hbm [shape: bf16[4,8], index: 7, kind: input, shape index: {}]
  %s8 = inlined_call_operand.hbm [shape: f32[1,8], index: 8, kind: input, shape index: {}]
  %s9 = inlined_call_operand.hbm [shape: f32[2,16,16,8], index: 9, kind: output, shape index: {}]
  %s10 = sld [smem:[#allocation0]]
  $region105: #{tpu_custom_call.1} parent=0
    _
  %s12 = ssub.s32 1, %s10
  %s13 = scalar_select 0, %s12, %s10
  $region1: #{tpu_custom_call.1} parent=0
    #allocation5 [shape = 'u8[262144]{0}', space=vmem, size = 0x40000, scoped, tag = 'input window, operand 0']
    #allocation6 [shape = 's32[2]{0}', space=sflag, size = 0x8, scoped, tag = 'scoped memory for tpu_custom_call.1']
    #allocation7 [shape = 's32[2]{0}', space=sflag, size = 0x8, scoped, tag = 'scoped memory for tpu_custom_call.1']
    #allocation8 [shape = 'u8[512]{0}', space=vmem, size = 0x400, scoped, tag = 'input window, operand 1, single buffered']
    #allocation9 [shape = 's32[1]{0}', space=sflag, size = 0x4, scoped, tag = 'scoped memory for tpu_custom_call.1']
    #allocation10 [shape = 'u8[512]{0}', space=vmem, size = 0x400, scoped, tag = 'input window, operand 2, single buffered']
    #allocation11 [shape = 'u8[12288]{0}', space=vmem, size = 0x3000, scoped, tag = 'input window, operand 3, single buffered']
    #allocation12 [shape = 's32[1]{0}', space=sflag, size = 0x4, scoped, tag = 'scoped memory for tpu_custom_call.1']
    #allocation13 [shape = 'u8[512]{0}', space=vmem, size = 0x400, scoped, tag = 'input window, operand 4, single buffered']
    #allocation14 [shape = 'u8[512]{0}', space=vmem, size = 0x400, scoped, tag = 'input window, operand 5, single buffered']
    #allocation15 [shape = 's32[1]{0}', space=sflag, size = 0x4, scoped, tag = 'scoped memory for tpu_custom_call.1']
    #allocation16 [shape = 'u8[18432]{0}', space=vmem, size = 0x4800, scoped, tag = 'input window, operand 6, single buffered']
    #allocation17 [shape = 'u8[1024]{0}', space=vmem, size = 0x400, scoped, tag = 'input window, operand 7, single buffered']
    #allocation18 [shape = 's32[1]{0}', space=sflag, size = 0x4, scoped, tag = 'scoped memory for tpu_custom_call.1']
    #allocation19 [shape = 'u8[512]{0}', space=vmem, size = 0x400, scoped, tag = 'input window, operand 8, single buffered']
    #allocation20 [shape = 'u8[262144]{0}', space=vmem, size = 0x40000, scoped, tag = 'output window, operand 0']
    %14 = vsyncpa [#allocation6], 0
    %s15 = scalar_lea.sflag [#allocation6], 1
    %16 = vsyncpa %s15, 0
    %17 = vsyncpa [#allocation9], 0
    %18 = vsyncpa [#allocation12], 0
    %19 = vsyncpa [#allocation15], 0
    %20 = vsyncpa [#allocation18], 0
    %21 = vsyncpa [#allocation7], 0
    %s22 = scalar_lea.sflag [#allocation7], 1
    %23 = vsyncpa %s22, 0
    loop: start=0, step=1, limit=4
    $region2: #{tpu_custom_call.1} parent=1 // loop_pre_header
      _
    $region3: #{tpu_custom_call.1} parent=1 // loop_header
      %s25 = sphi 0, %s29
      %p26 = scmp.ge.s32.totalorder %s25, 4
      %s35 = sphi 0, %s37
      %s38 = sphi 0, %s35
      %s39 = sphi 0, %s38
      %s55 = sphi 0, %s39
      %s59 = sphi 0, %s59
      %s61 = sphi 0, %s59
      %s62 = sphi 0, %s61
      %s76 = sphi 0, %s62
      %s80 = sphi 0, %s80
      %s82 = sphi 0, %s80
      %s83 = sphi 0, %s82
      %s97 = sphi 0, %s83
      %s101 = sphi 0, %s101
      %s103 = sphi 0, %s101
      %s104 = sphi 0, %s103
      %s118 = sphi 0, %s104
      %s122 = sphi 0, %s122
      %s124 = sphi 0, %s122
      %s125 = sphi 0, %s124
      %s139 = sphi 0, %s125
      %s143 = sphi 0, %s143
      %s145 = sphi 0, %s143
      %s146 = sphi 0, %s145
      %s160 = sphi 0, %s146
      %s164 = sphi 0, %s164
      %s166 = sphi 0, %s164
      %s167 = sphi 0, %s166
      %s181 = sphi 0, %s167
      %s185 = sphi 0, %s185
      %s187 = sphi 0, %s185
      %s188 = sphi 0, %s187
      %s202 = sphi 0, %s188
      %s206 = sphi 0, %s206
      %s208 = sphi 0, %s206
      %s209 = sphi 0, %s208
      %s223 = sphi 0, %s209
      %s229 = sphi 0, %s231
      %s232 = sphi 0, %s229
      %s233 = sphi 0, %s232
      %s249 = sphi 0, %s233
    $region4: #{tpu_custom_call.1} parent=1 // loop_header_branch
      %28 = sbr.rel (%p26) target = $region8
    $region5: #{tpu_custom_call.1} parent=1 // loop_body
      %s30 = ssub.s32 %s25, 1
      %s31 = ssub.s32 %s25, 2
      %s32 = sadd.s32 %s25, 1
      %s33 = ssub.s32 %s25, %s32
      %p34 = scmp.eq.s32.totalorder %s33, 0
      %s36 = sadd.s32 %s35, 1
      %s37 = scalar_select %p34, %s35, %s36
      %p40 = pneg %p34
      %p41 = scmp.eq.s32.totalorder %s25, 1
      %p42 = por %p40, %p41
      %p43 = scmp.ne.s32.totalorder %s35, %s38
      %p44 = scmp.eq.s32.totalorder %s25, 0
      %p45 = por %p43, %p44
      %p46 = scmp.ne.s32.totalorder %s35, %s38
      %p47 = scmp.eq.s32.totalorder %s30, 1
      %p48 = por %p46, %p47
      %p49 = scmp.ne.s32.totalorder %s38, %s39
      %p50 = scmp.eq.s32.totalorder %s30, 0
      %p51 = por %p49, %p50
      %p52 = scmp.ne.s32.totalorder %s38, %s39
      %p53 = scmp.eq.s32.totalorder %s31, 1
      %p54 = por %p52, %p53
      %p56 = scmp.ne.s32.totalorder %s39, %s55
      %p57 = scmp.eq.s32.totalorder %s31, 0
      %p58 = por %p56, %p57
      %s60 = sadd.s32 %s59, 1
      %p63 = scmp.eq.s32.totalorder %s25, 1
      %p64 = scmp.ne.s32.totalorder %s59, %s61
      %p65 = scmp.eq.s32.totalorder %s25, 0
      %p66 = por %p64, %p65
      %p67 = scmp.ne.s32.totalorder %s59, %s61
      %p68 = scmp.eq.s32.totalorder %s30, 1
      %p69 = por %p67, %p68
      %p70 = scmp.ne.s32.totalorder %s61, %s62
      %p71 = scmp.eq.s32.totalorder %s30, 0
      %p72 = por %p70, %p71
      %p73 = scmp.ne.s32.totalorder %s61, %s62
      %p74 = scmp.eq.s32.totalorder %s31, 1
      %p75 = por %p73, %p74
      %p77 = scmp.ne.s32.totalorder %s62, %s76
      %p78 = scmp.eq.s32.totalorder %s31, 0
      %p79 = por %p77, %p78
      %s81 = sadd.s32 %s80, 1
      %p84 = scmp.eq.s32.totalorder %s25, 1
      %p85 = scmp.ne.s32.totalorder %s80, %s82
      %p86 = scmp.eq.s32.totalorder %s25, 0
      %p87 = por %p85, %p86
      %p88 = scmp.ne.s32.totalorder %s80, %s82
      %p89 = scmp.eq.s32.totalorder %s30, 1
      %p90 = por %p88, %p89
      %p91 = scmp.ne.s32.totalorder %s82, %s83
      %p92 = scmp.eq.s32.totalorder %s30, 0
      %p93 = por %p91, %p92
      %p94 = scmp.ne.s32.totalorder %s82, %s83
      %p95 = scmp.eq.s32.totalorder %s31, 1
      %p96 = por %p94, %p95
      %p98 = scmp.ne.s32.totalorder %s83, %s97
      %p99 = scmp.eq.s32.totalorder %s31, 0
      %p100 = por %p98, %p99
      %s102 = sadd.s32 %s101, 1
      %p105 = scmp.eq.s32.totalorder %s25, 1
      %p106 = scmp.ne.s32.totalorder %s101, %s103
      %p107 = scmp.eq.s32.totalorder %s25, 0
      %p108 = por %p106, %p107
      %p109 = scmp.ne.s32.totalorder %s101, %s103
      %p110 = scmp.eq.s32.totalorder %s30, 1
      %p111 = por %p109, %p110
      %p112 = scmp.ne.s32.totalorder %s103, %s104
      %p113 = scmp.eq.s32.totalorder %s30, 0
      %p114 = por %p112, %p113
      %p115 = scmp.ne.s32.totalorder %s103, %s104
      %p116 = scmp.eq.s32.totalorder %s31, 1
      %p117 = por %p115, %p116
      %p119 = scmp.ne.s32.totalorder %s104, %s118
      %p120 = scmp.eq.s32.totalorder %s31, 0
      %p121 = por %p119, %p120
      %s123 = sadd.s32 %s122, 1
      %p126 = scmp.eq.s32.totalorder %s25, 1
      %p127 = scmp.ne.s32.totalorder %s122, %s124
      %p128 = scmp.eq.s32.totalorder %s25, 0
      %p129 = por %p127, %p128
      %p130 = scmp.ne.s32.totalorder %s122, %s124
      %p131 = scmp.eq.s32.totalorder %s30, 1
      %p132 = por %p130, %p131
      %p133 = scmp.ne.s32.totalorder %s124, %s125
      %p134 = scmp.eq.s32.totalorder %s30, 0
      %p135 = por %p133, %p134
      %p136 = scmp.ne.s32.totalorder %s124, %s125
      %p137 = scmp.eq.s32.totalorder %s31, 1
      %p138 = por %p136, %p137
      %p140 = scmp.ne.s32.totalorder %s125, %s139
      %p141 = scmp.eq.s32.totalorder %s31, 0
      %p142 = por %p140, %p141
      %s144 = sadd.s32 %s143, 1
      %p147 = scmp.eq.s32.totalorder %s25, 1
      %p148 = scmp.ne.s32.totalorder %s143, %s145
      %p149 = scmp.eq.s32.totalorder %s25, 0
      %p150 = por %p148, %p149
      %p151 = scmp.ne.s32.totalorder %s143, %s145
      %p152 = scmp.eq.s32.totalorder %s30, 1
      %p153 = por %p151, %p152
      %p154 = scmp.ne.s32.totalorder %s145, %s146
      %p155 = scmp.eq.s32.totalorder %s30, 0
      %p156 = por %p154, %p155
      %p157 = scmp.ne.s32.totalorder %s145, %s146
      %p158 = scmp.eq.s32.totalorder %s31, 1
      %p159 = por %p157, %p158
      %p161 = scmp.ne.s32.totalorder %s146, %s160
      %p162 = scmp.eq.s32.totalorder %s31, 0
      %p163 = por %p161, %p162
      %s165 = sadd.s32 %s164, 1
      %p168 = scmp.eq.s32.totalorder %s25, 1
      %p169 = scmp.ne.s32.totalorder %s164, %s166
      %p170 = scmp.eq.s32.totalorder %s25, 0
      %p171 = por %p169, %p170
      %p172 = scmp.ne.s32.totalorder %s164, %s166
      %p173 = scmp.eq.s32.totalorder %s30, 1
      %p174 = por %p172, %p173
      %p175 = scmp.ne.s32.totalorder %s166, %s167
      %p176 = scmp.eq.s32.totalorder %s30, 0
      %p177 = por %p175, %p176
      %p178 = scmp.ne.s32.totalorder %s166, %s167
      %p179 = scmp.eq.s32.totalorder %s31, 1
      %p180 = por %p178, %p179
      %p182 = scmp.ne.s32.totalorder %s167, %s181
      %p183 = scmp.eq.s32.totalorder %s31, 0
      %p184 = por %p182, %p183
      %s186 = sadd.s32 %s185, 1
      %p189 = scmp.eq.s32.totalorder %s25, 1
      %p190 = scmp.ne.s32.totalorder %s185, %s187
      %p191 = scmp.eq.s32.totalorder %s25, 0
      %p192 = por %p190, %p191
      %p193 = scmp.ne.s32.totalorder %s185, %s187
      %p194 = scmp.eq.s32.totalorder %s30, 1
      %p195 = por %p193, %p194
      %p196 = scmp.ne.s32.totalorder %s187, %s188
      %p197 = scmp.eq.s32.totalorder %s30, 0
      %p198 = por %p196, %p197
      %p199 = scmp.ne.s32.totalorder %s187, %s188
      %p200 = scmp.eq.s32.totalorder %s31, 1
      %p201 = por %p199, %p200
      %p203 = scmp.ne.s32.totalorder %s188, %s202
      %p204 = scmp.eq.s32.totalorder %s31, 0
      %p205 = por %p203, %p204
      %s207 = sadd.s32 %s206, 1
      %p210 = scmp.eq.s32.totalorder %s25, 1
      %p211 = scmp.ne.s32.totalorder %s206, %s208
      %p212 = scmp.eq.s32.totalorder %s25, 0
      %p213 = por %p211, %p212
      %p214 = scmp.ne.s32.totalorder %s206, %s208
      %p215 = scmp.eq.s32.totalorder %s30, 1
      %p216 = por %p214, %p215
      %p217 = scmp.ne.s32.totalorder %s208, %s209
      %p218 = scmp.eq.s32.totalorder %s30, 0
      %p219 = por %p217, %p218
      %p220 = scmp.ne.s32.totalorder %s208, %s209
      %p221 = scmp.eq.s32.totalorder %s31, 1
      %p222 = por %p220, %p221
      %p224 = scmp.ne.s32.totalorder %s209, %s223
      %p225 = scmp.eq.s32.totalorder %s31, 0
      %p226 = por %p224, %p225
      %s227 = ssub.s32 %s25, %s32
      %p228 = scmp.eq.s32.totalorder %s227, 0
      %s230 = sadd.s32 %s229, 1
      %s231 = scalar_select %p228, %s229, %s230
      %p234 = pneg %p228
      %p235 = scmp.eq.s32.totalorder %s25, 1
      %p236 = por %p234, %p235
      %p237 = scmp.ne.s32.totalorder %s229, %s232
      %p238 = scmp.eq.s32.totalorder %s25, 0
      %p239 = por %p237, %p238
      %p240 = scmp.ne.s32.totalorder %s229, %s232
      %p241 = scmp.eq.s32.totalorder %s30, 1
      %p242 = por %p240, %p241
      %p243 = scmp.ne.s32.totalorder %s232, %s233
      %p244 = scmp.eq.s32.totalorder %s30, 0
      %p245 = por %p243, %p244
      %p246 = scmp.ne.s32.totalorder %s232, %s233
      %p247 = scmp.eq.s32.totalorder %s31, 1
      %p248 = por %p246, %p247
      %p250 = scmp.ne.s32.totalorder %s233, %s249
      %p251 = scmp.eq.s32.totalorder %s31, 0
      %p252 = por %p250, %p251
      %p253 = scmp.le.s32.totalorder 1, %s25
      %p254 = scmp.lt.s32.totalorder %s25, 3
      %p255 = pnand %p253, %p254
      %p256 = pneg %p255
      // Predicated region
      $region9: #{tpu_custom_call.1} parent=5 // pred_check
        _
      $region10: #{tpu_custom_call.1} parent=5 // pred_check_branch
        %258 = sbr.rel (%p255) target = $region12
      $region11: #{tpu_custom_call.1} parent=5 // pred_region
        %s259 = ssub.s32 %s25, 1
        // Predicated region
        $region13: #{tpu_custom_call.1} parent=11 // pred_check
          %p260 = pneg %p72
        $region14: #{tpu_custom_call.1} parent=11 // pred_check_branch
          %262 = sbr.rel (%p260) target = $region16
        $region15: #{tpu_custom_call.1} parent=11 // pred_region
          %s264 = ssub.s32 16, 16
          %265 = vsyncadd [#allocation9], %s264
          %s267 = sshll.u32 [#allocation8], 4
          %s268 = int_to_ptr.vmem [resolvable:$true] %s267
          %270 = dma.hbm_to_vmem [thread:$0]  %s1, 16, %s268, [#allocation9]
        $region16: #{tpu_custom_call.1} parent=11 // pred_fallthru
          _
        // Predicated region
        $region17: #{tpu_custom_call.1} parent=11 // pred_check
          %p271 = pneg %p93
        $region18: #{tpu_custom_call.1} parent=11 // pred_check_branch
          %273 = sbr.rel (%p271) target = $region20
        $region19: #{tpu_custom_call.1} parent=11 // pred_region
          %s275 = ssub.s32 16, 16
          %276 = vsyncadd [#allocation9], %s275
          %s278 = sshll.u32 [#allocation10], 4
          %s279 = int_to_ptr.vmem [resolvable:$true] %s278
          %281 = dma.hbm_to_vmem [thread:$0]  %s2, 16, %s279, [#allocation9]
        $region20: #{tpu_custom_call.1} parent=11 // pred_fallthru
          _
        // Predicated region
        $region21: #{tpu_custom_call.1} parent=11 // pred_check
          %p282 = pneg %p114
        $region22: #{tpu_custom_call.1} parent=11 // pred_check_branch
          %284 = sbr.rel (%p282) target = $region24
        $region23: #{tpu_custom_call.1} parent=11 // pred_region
          %s286 = ssub.s32 384, 384
          %287 = vsyncadd [#allocation12], %s286
          %s288 = sshll.u32 [#allocation11], 4
          %s289 = int_to_ptr.vmem [resolvable:$true] %s288
          %294 = dma.hbm_to_vmem [thread:$0]  %s3, 384, %s289, [#allocation12], 64, 64, 4
        $region24: #{tpu_custom_call.1} parent=11 // pred_fallthru
          _
        // Predicated region
        $region25: #{tpu_custom_call.1} parent=11 // pred_check
          %p295 = pneg %p135
        $region26: #{tpu_custom_call.1} parent=11 // pred_check_branch
          %297 = sbr.rel (%p295) target = $region28
        $region27: #{tpu_custom_call.1} parent=11 // pred_region
          %s299 = ssub.s32 16, 16
          %300 = vsyncadd [#allocation12], %s299
          %s302 = sshll.u32 [#allocation13], 4
          %s303 = int_to_ptr.vmem [resolvable:$true] %s302
          %305 = dma.hbm_to_vmem [thread:$0]  %s4, 16, %s303, [#allocation12]
        $region28: #{tpu_custom_call.1} parent=11 // pred_fallthru
          _
        // Predicated region
        $region29: #{tpu_custom_call.1} parent=11 // pred_check
          %p306 = pneg %p156
        $region30: #{tpu_custom_call.1} parent=11 // pred_check_branch
          %308 = sbr.rel (%p306) target = $region32
        $region31: #{tpu_custom_call.1} parent=11 // pred_region
          %s310 = ssub.s32 16, 16
          %311 = vsyncadd [#allocation15], %s310
          %s313 = sshll.u32 [#allocation14], 4
          %s314 = int_to_ptr.vmem [resolvable:$true] %s313
          %316 = dma.hbm_to_vmem [thread:$0]  %s5, 16, %s314, [#allocation15]
        $region32: #{tpu_custom_call.1} parent=11 // pred_fallthru
          _
        // Predicated region
        $region33: #{tpu_custom_call.1} parent=11 // pred_check
          %p317 = pneg %p177
        $region34: #{tpu_custom_call.1} parent=11 // pred_check_branch
          %319 = sbr.rel (%p317) target = $region36
        $region35: #{tpu_custom_call.1} parent=11 // pred_region
          %s321 = ssub.s32 576, 576
          %322 = vsyncadd [#allocation15], %s321
          %s323 = sshll.u32 [#allocation16], 4
          %s324 = int_to_ptr.vmem [resolvable:$true] %s323
          %329 = dma.hbm_to_vmem [thread:$0]  %s6, 576, %s324, [#allocation15], 64, 64, 4
        $region36: #{tpu_custom_call.1} parent=11 // pred_fallthru
          _
        // Predicated region
        $region37: #{tpu_custom_call.1} parent=11 // pred_check
          %p330 = pneg %p198
        $region38: #{tpu_custom_call.1} parent=11 // pred_check_branch
          %332 = sbr.rel (%p330) target = $region40
        $region39: #{tpu_custom_call.1} parent=11 // pred_region
          %s334 = ssub.s32 32, 32
          %335 = vsyncadd [#allocation18], %s334
          %s337 = sshll.u32 [#allocation17], 4
          %s338 = int_to_ptr.vmem [resolvable:$true] %s337
          %340 = dma.hbm_to_vmem [thread:$0]  %s7, 32, %s338, [#allocation18]
        $region40: #{tpu_custom_call.1} parent=11 // pred_fallthru
          _
        // Predicated region
        $region41: #{tpu_custom_call.1} parent=11 // pred_check
          %p341 = pneg %p219
        $region42: #{tpu_custom_call.1} parent=11 // pred_check_branch
          %343 = sbr.rel (%p341) target = $region44
        $region43: #{tpu_custom_call.1} parent=11 // pred_region
          %s345 = ssub.s32 16, 16
          %346 = vsyncadd [#allocation18], %s345
          %s348 = sshll.u32 [#allocation19], 4
          %s349 = int_to_ptr.vmem [resolvable:$true] %s348
          %351 = dma.hbm_to_vmem [thread:$0]  %s8, 16, %s349, [#allocation18]
        $region44: #{tpu_custom_call.1} parent=11 // pred_fallthru
          _
      $region12: #{tpu_custom_call.1} parent=5 // pred_fallthru
        _
      %p352 = scmp.lt.s32.totalorder %s25, 2
      // Predicated region
      $region45: #{tpu_custom_call.1} parent=5 // pred_check
        %p353 = pneg %p352
      $region46: #{tpu_custom_call.1} parent=5 // pred_check_branch
        %355 = sbr.rel (%p353) target = $region48
      $region47: #{tpu_custom_call.1} parent=5 // pred_region
        // Predicated region
        $region49: #{tpu_custom_call.1} parent=47 // pred_check
          %p356 = pneg %p45
        $region50: #{tpu_custom_call.1} parent=47 // pred_check_branch
          %358 = sbr.rel (%p356) target = $region52
        $region51: #{tpu_custom_call.1} parent=47 // pred_region
          %s359 = sand.u32 %s35, 1
          %s360 = scalar_lea.sflag [#allocation6], %s359
          %s361 = sand.u32 %s35, 1
          %s362 = smul.addr %s361, 256
          %s363 = scalar_lea.vmem [#allocation5], %s362
          %s365 = ssub.s32 4096, 4096
          %366 = vsyncadd %s360, %s365
          %s367 = smul.addr %s25, 32
          %s368 = smul.addr %s367, 128
          %s369 = scalar_lea.hbm %s0, %s368
          %s370 = sshll.u32 %s363, 4
          %s371 = int_to_ptr.vmem [resolvable:$true] %s370
          %376 = dma.hbm_to_vmem [thread:$0]  %s369, 4096, %s371, %s360, 128, 128, 8
        $region52: #{tpu_custom_call.1} parent=47 // pred_fallthru
          _
      $region48: #{tpu_custom_call.1} parent=5 // pred_fallthru
        _
      %p377 = scmp.le.s32.totalorder 1, %s25
      %p378 = scmp.lt.s32.totalorder %s25, 3
      %p379 = pnand %p377, %p378
      %p380 = pneg %p379
      // Predicated region
      $region53: #{tpu_custom_call.1} parent=5 // pred_check
        _
      $region54: #{tpu_custom_call.1} parent=5 // pred_check_branch
        %382 = sbr.rel (%p379) target = $region56
      $region55: #{tpu_custom_call.1} parent=5 // pred_region
        %s383 = ssub.s32 %s25, 1
        %s384 = sand.u32 %s38, 1
        %s385 = scalar_lea.sflag [#allocation6], %s384
        %s386 = sand.u32 %s38, 1
        %s387 = smul.addr %s386, 256
        %s388 = scalar_lea.vmem [#allocation5], %s387
        // Predicated region
        $region57: #{tpu_custom_call.1} parent=55 // pred_check
          %p389 = pneg %p51
        $region58: #{tpu_custom_call.1} parent=55 // pred_check_branch
          %391 = sbr.rel (%p389) target = $region60
        $region59: #{tpu_custom_call.1} parent=55 // pred_region
          %392 = dma.done %s385, 4096
        $region60: #{tpu_custom_call.1} parent=55 // pred_fallthru
          _
        // Predicated region
        $region61: #{tpu_custom_call.1} parent=55 // pred_check
          %p393 = pneg %p72
        $region62: #{tpu_custom_call.1} parent=55 // pred_check_branch
          %395 = sbr.rel (%p393) target = $region64
        $region63: #{tpu_custom_call.1} parent=55 // pred_region
          %396 = dma.done [#allocation9], 16
        $region64: #{tpu_custom_call.1} parent=55 // pred_fallthru
          _
        // Predicated region
        $region65: #{tpu_custom_call.1} parent=55 // pred_check
          %p397 = pneg %p93
        $region66: #{tpu_custom_call.1} parent=55 // pred_check_branch
          %399 = sbr.rel (%p397) target = $region68
        $region67: #{tpu_custom_call.1} parent=55 // pred_region
          %400 = dma.done [#allocation9], 16
        $region68: #{tpu_custom_call.1} parent=55 // pred_fallthru
          _
        // Predicated region
        $region69: #{tpu_custom_call.1} parent=55 // pred_check
          %p401 = pneg %p114
        $region70: #{tpu_custom_call.1} parent=55 // pred_check_branch
          %403 = sbr.rel (%p401) target = $region72
        $region71: #{tpu_custom_call.1} parent=55 // pred_region
          %404 = dma.done [#allocation12], 384
        $region72: #{tpu_custom_call.1} parent=55 // pred_fallthru
          _
        // Predicated region
        $region73: #{tpu_custom_call.1} parent=55 // pred_check
          %p405 = pneg %p135
        $region74: #{tpu_custom_call.1} parent=55 // pred_check_branch
          %407 = sbr.rel (%p405) target = $region76
        $region75: #{tpu_custom_call.1} parent=55 // pred_region
          %408 = dma.done [#allocation12], 16
        $region76: #{tpu_custom_call.1} parent=55 // pred_fallthru
          _
        // Predicated region
        $region77: #{tpu_custom_call.1} parent=55 // pred_check
          %p409 = pneg %p156
        $region78: #{tpu_custom_call.1} parent=55 // pred_check_branch
          %411 = sbr.rel (%p409) target = $region80
        $region79: #{tpu_custom_call.1} parent=55 // pred_region
          %412 = dma.done [#allocation15], 16
        $region80: #{tpu_custom_call.1} parent=55 // pred_fallthru
          _
        // Predicated region
        $region81: #{tpu_custom_call.1} parent=55 // pred_check
          %p413 = pneg %p177
        $region82: #{tpu_custom_call.1} parent=55 // pred_check_branch
          %415 = sbr.rel (%p413) target = $region84
        $region83: #{tpu_custom_call.1} parent=55 // pred_region
          %416 = dma.done [#allocation15], 576
        $region84: #{tpu_custom_call.1} parent=55 // pred_fallthru
          _
        // Predicated region
        $region85: #{tpu_custom_call.1} parent=55 // pred_check
          %p417 = pneg %p198
        $region86: #{tpu_custom_call.1} parent=55 // pred_check_branch
          %419 = sbr.rel (%p417) target = $region88
        $region87: #{tpu_custom_call.1} parent=55 // pred_region
          %420 = dma.done [#allocation18], 32
        $region88: #{tpu_custom_call.1} parent=55 // pred_fallthru
          _
        // Predicated region
        $region89: #{tpu_custom_call.1} parent=55 // pred_check
          %p421 = pneg %p219
        $region90: #{tpu_custom_call.1} parent=55 // pred_check_branch
          %423 = sbr.rel (%p421) target = $region92
        $region91: #{tpu_custom_call.1} parent=55 // pred_region
          %424 = dma.done [#allocation18], 16
        $region92: #{tpu_custom_call.1} parent=55 // pred_fallthru
          _
        %s425 = sand.u32 %s38, 1
        %s426 = scalar_lea.sflag [#allocation6], %s425
        %s427 = sand.u32 %s38, 1
        %s428 = smul.addr %s427, 256
        %s429 = scalar_lea.vmem [#allocation5], %s428
        %p430 = pneg %p51
        %p431 = pneg %p48
        %p432 = pneg %p72
        %p433 = pneg %p69
        %p434 = pneg %p93
        %p435 = pneg %p90
        %p436 = pneg %p114
        %p437 = pneg %p111
        %p438 = pneg %p135
        %p439 = pneg %p132
        %p440 = pneg %p156
        %p441 = pneg %p153
        %p442 = pneg %p177
        %p443 = pneg %p174
        %p444 = pneg %p198
        %p445 = pneg %p195
        %p446 = pneg %p219
        %p447 = pneg %p216
        %p448 = pneg %p245
        %p449 = pneg %p242
        %s450 = sand.u32 %s232, 1
        %s451 = scalar_lea.sflag [#allocation7], %s450
        %s452 = sand.u32 %s232, 1
        %s453 = smul.addr %s452, 256
        %s454 = scalar_lea.vmem [#allocation20], %s453
        %v456 = vld [vmem:[%s388] sm:$0xff]
        %v457 = vld [vmem:[%s388 + $0x8] sm:$0xff]
        %v458 = vld [vmem:[%s388 + $0x10] sm:$0xff]
        %v459 = vld [vmem:[%s388 + $0x18] sm:$0xff]
        %v460 = vld [vmem:[%s388 + $0x20] sm:$0xff]
        %v461 = vld [vmem:[%s388 + $0x28] sm:$0xff]
        %v462 = vld [vmem:[%s388 + $0x30] sm:$0xff]
        %v463 = vld [vmem:[%s388 + $0x38] sm:$0xff]
        %v464 = vld [vmem:[%s388 + $0x40] sm:$0xff]
        %v465 = vld [vmem:[%s388 + $0x48] sm:$0xff]
        %v466 = vld [vmem:[%s388 + $0x50] sm:$0xff]
        %v467 = vld [vmem:[%s388 + $0x58] sm:$0xff]
        %v468 = vld [vmem:[%s388 + $0x60] sm:$0xff]
        %v469 = vld [vmem:[%s388 + $0x68] sm:$0xff]
        %v470 = vld [vmem:[%s388 + $0x70] sm:$0xff]
        %v471 = vld [vmem:[%s388 + $0x78] sm:$0xff]
        %v472 = vld [vmem:[%s388 + $0x80] sm:$0xff]
        %v473 = vld [vmem:[%s388 + $0x88] sm:$0xff]
        %v474 = vld [vmem:[%s388 + $0x90] sm:$0xff]
        %v475 = vld [vmem:[%s388 + $0x98] sm:$0xff]
        %v476 = vld [vmem:[%s388 + $0xa0] sm:$0xff]
        %v477 = vld [vmem:[%s388 + $0xa8] sm:$0xff]
        %v478 = vld [vmem:[%s388 + $0xb0] sm:$0xff]
        %v479 = vld [vmem:[%s388 + $0xb8] sm:$0xff]
        %v480 = vld [vmem:[%s388 + $0xc0] sm:$0xff]
        %v481 = vld [vmem:[%s388 + $0xc8] sm:$0xff]
        %v482 = vld [vmem:[%s388 + $0xd0] sm:$0xff]
        %v483 = vld [vmem:[%s388 + $0xd8] sm:$0xff]
        %v484 = vld [vmem:[%s388 + $0xe0] sm:$0xff]
        %v485 = vld [vmem:[%s388 + $0xe8] sm:$0xff]
        %v486 = vld [vmem:[%s388 + $0xf0] sm:$0xff]
        %v487 = vld [vmem:[%s388 + $0xf8] sm:$0xff]
        %v488 = vld [vmem:[#allocation8] sm:$0x1]
        %v490 = vlaneseq
        %v491 = vshrl.u32 %v490, 7
        %v492 = vsub.s32 0, %v491
        %v493 = vrot.slane %v488, %v492
        %v495 = vmul.f32 %v456, %v493
        %v496 = vmul.f32 %v457, %v493
        %v497 = vmul.f32 %v458, %v493
        %v498 = vmul.f32 %v459, %v493
        %v499 = vmul.f32 %v460, %v493
        %v500 = vmul.f32 %v461, %v493
        %v501 = vmul.f32 %v462, %v493
        %v502 = vmul.f32 %v463, %v493
        %v503 = vmul.f32 %v464, %v493
        %v504 = vmul.f32 %v465, %v493
        %v505 = vmul.f32 %v466, %v493
        %v506 = vmul.f32 %v467, %v493
        %v507 = vmul.f32 %v468, %v493
        %v508 = vmul.f32 %v469, %v493
        %v509 = vmul.f32 %v470, %v493
        %v510 = vmul.f32 %v471, %v493
        %v511 = vmul.f32 %v472, %v493
        %v512 = vmul.f32 %v473, %v493
        %v513 = vmul.f32 %v474, %v493
        %v514 = vmul.f32 %v475, %v493
        %v515 = vmul.f32 %v476, %v493
        %v516 = vmul.f32 %v477, %v493
        %v517 = vmul.f32 %v478, %v493
        %v518 = vmul.f32 %v479, %v493
        %v519 = vmul.f32 %v480, %v493
        %v520 = vmul.f32 %v481, %v493
        %v521 = vmul.f32 %v482, %v493
        %v522 = vmul.f32 %v483, %v493
        %v523 = vmul.f32 %v484, %v493
        %v524 = vmul.f32 %v485, %v493
        %v525 = vmul.f32 %v486, %v493
        %v526 = vmul.f32 %v487, %v493
        %v527 = vld [vmem:[#allocation10] sm:$0x1]
        %v529 = vlaneseq
        %v530 = vshrl.u32 %v529, 7
        %v531 = vsub.s32 0, %v530
        %v532 = vrot.slane %v527, %v531
        %v534 = vadd.f32 %v495, %v532
        %v535 = vadd.f32 %v496, %v532
        %v536 = vadd.f32 %v497, %v532
        %v537 = vadd.f32 %v498, %v532
        %v538 = vadd.f32 %v499, %v532
        %v539 = vadd.f32 %v500, %v532
        %v540 = vadd.f32 %v501, %v532
        %v541 = vadd.f32 %v502, %v532
        %v542 = vadd.f32 %v503, %v532
        %v543 = vadd.f32 %v504, %v532
        %v544 = vadd.f32 %v505, %v532
        %v545 = vadd.f32 %v506, %v532
        %v546 = vadd.f32 %v507, %v532
        %v547 = vadd.f32 %v508, %v532
        %v548 = vadd.f32 %v509, %v532
        %v549 = vadd.f32 %v510, %v532
        %v550 = vadd.f32 %v511, %v532
        %v551 = vadd.f32 %v512, %v532
        %v552 = vadd.f32 %v513, %v532
        %v553 = vadd.f32 %v514, %v532
        %v554 = vadd.f32 %v515, %v532
        %v555 = vadd.f32 %v516, %v532
        %v556 = vadd.f32 %v517, %v532
        %v557 = vadd.f32 %v518, %v532
        %v558 = vadd.f32 %v519, %v532
        %v559 = vadd.f32 %v520, %v532
        %v560 = vadd.f32 %v521, %v532
        %v561 = vadd.f32 %v522, %v532
        %v562 = vadd.f32 %v523, %v532
        %v563 = vadd.f32 %v524, %v532
        %v564 = vadd.f32 %v525, %v532
        %v565 = vadd.f32 %v526, %v532
        %v566 = vmax.f32 %v534, 0.0
        %v567 = vmax.f32 %v535, 0.0
        %v568 = vmax.f32 %v536, 0.0
        %v569 = vmax.f32 %v537, 0.0
        %v570 = vmax.f32 %v538, 0.0
        %v571 = vmax.f32 %v539, 0.0
        %v572 = vmax.f32 %v540, 0.0
        %v573 = vmax.f32 %v541, 0.0
        %v574 = vmax.f32 %v542, 0.0
        %v575 = vmax.f32 %v543, 0.0
        %v576 = vmax.f32 %v544, 0.0
        %v577 = vmax.f32 %v545, 0.0
        %v578 = vmax.f32 %v546, 0.0
        %v579 = vmax.f32 %v547, 0.0
        %v580 = vmax.f32 %v548, 0.0
        %v581 = vmax.f32 %v549, 0.0
        %v582 = vmax.f32 %v550, 0.0
        %v583 = vmax.f32 %v551, 0.0
        %v584 = vmax.f32 %v552, 0.0
        %v585 = vmax.f32 %v553, 0.0
        %v586 = vmax.f32 %v554, 0.0
        %v587 = vmax.f32 %v555, 0.0
        %v588 = vmax.f32 %v556, 0.0
        %v589 = vmax.f32 %v557, 0.0
        %v590 = vmax.f32 %v558, 0.0
        %v591 = vmax.f32 %v559, 0.0
        %v592 = vmax.f32 %v560, 0.0
        %v593 = vmax.f32 %v561, 0.0
        %v594 = vmax.f32 %v562, 0.0
        %v595 = vmax.f32 %v563, 0.0
        %v596 = vmax.f32 %v564, 0.0
        %v597 = vmax.f32 %v565, 0.0
        %630 = vrot.lane.b32.xlu0 %v566, 4
        %v631 = vpop.permute.xlu0 %630
        %632 = vrot.lane.b32.xlu0 %v567, 4
        %v633 = vpop.permute.xlu0 %632
        %634 = vrot.lane.b32.xlu0 %v568, 4
        %v635 = vpop.permute.xlu0 %634
        %636 = vrot.lane.b32.xlu0 %v569, 4
        %v637 = vpop.permute.xlu0 %636
        %638 = vrot.lane.b32.xlu0 %v570, 4
        %v639 = vpop.permute.xlu0 %638
        %640 = vrot.lane.b32.xlu0 %v571, 4
        %v641 = vpop.permute.xlu0 %640
        %642 = vrot.lane.b32.xlu0 %v572, 4
        %v643 = vpop.permute.xlu0 %642
        %644 = vrot.lane.b32.xlu0 %v573, 4
        %v645 = vpop.permute.xlu0 %644
        %646 = vrot.lane.b32.xlu0 %v574, 4
        %v647 = vpop.permute.xlu0 %646
        %648 = vrot.lane.b32.xlu0 %v575, 4
        %v649 = vpop.permute.xlu0 %648
        %650 = vrot.lane.b32.xlu0 %v576, 4
        %v651 = vpop.permute.xlu0 %650
        %652 = vrot.lane.b32.xlu0 %v577, 4
        %v653 = vpop.permute.xlu0 %652
        %654 = vrot.lane.b32.xlu0 %v578, 4
        %v655 = vpop.permute.xlu0 %654
        %656 = vrot.lane.b32.xlu0 %v579, 4
        %v657 = vpop.permute.xlu0 %656
        %658 = vrot.lane.b32.xlu0 %v580, 4
        %v659 = vpop.permute.xlu0 %658
        %660 = vrot.lane.b32.xlu0 %v581, 4
        %v661 = vpop.permute.xlu0 %660
        %662 = vrot.lane.b32.xlu0 %v582, 4
        %v663 = vpop.permute.xlu0 %662
        %664 = vrot.lane.b32.xlu0 %v583, 4
        %v665 = vpop.permute.xlu0 %664
        %666 = vrot.lane.b32.xlu0 %v584, 4
        %v667 = vpop.permute.xlu0 %666
        %668 = vrot.lane.b32.xlu0 %v585, 4
        %v669 = vpop.permute.xlu0 %668
        %670 = vrot.lane.b32.xlu0 %v586, 4
        %v671 = vpop.permute.xlu0 %670
        %672 = vrot.lane.b32.xlu0 %v587, 4
        %v673 = vpop.permute.xlu0 %672
        %674 = vrot.lane.b32.xlu0 %v588, 4
        %v675 = vpop.permute.xlu0 %674
        %676 = vrot.lane.b32.xlu0 %v589, 4
        %v677 = vpop.permute.xlu0 %676
        %678 = vrot.lane.b32.xlu0 %v590, 4
        %v679 = vpop.permute.xlu0 %678
        %680 = vrot.lane.b32.xlu0 %v591, 4
        %v681 = vpop.permute.xlu0 %680
        %682 = vrot.lane.b32.xlu0 %v592, 4
        %v683 = vpop.permute.xlu0 %682
        %684 = vrot.lane.b32.xlu0 %v593, 4
        %v685 = vpop.permute.xlu0 %684
        %686 = vrot.lane.b32.xlu0 %v594, 4
        %v687 = vpop.permute.xlu0 %686
        %688 = vrot.lane.b32.xlu0 %v595, 4
        %v689 = vpop.permute.xlu0 %688
        %690 = vrot.lane.b32.xlu0 %v596, 4
        %v691 = vpop.permute.xlu0 %690
        %692 = vrot.lane.b32.xlu0 %v597, 4
        %v693 = vpop.permute.xlu0 %692
        %s726 = scalar_lea.vmem [#allocation2], 16
        %vm727 = vcmask 64544
        %728 = vst.msk [vmem:[%s726] sm:$0xff] %vm727, %v631
        %729 = vst.msk [vmem:[%s726 + $0x8] sm:$0xff] %vm727, %v633
        %730 = vst.msk [vmem:[%s726 + $0x10] sm:$0xff] %vm727, %v635
        %731 = vst.msk [vmem:[%s726 + $0x18] sm:$0xff] %vm727, %v637
        %732 = vst.msk [vmem:[%s726 + $0x20] sm:$0xff] %vm727, %v639
        %733 = vst.msk [vmem:[%s726 + $0x28] sm:$0xff] %vm727, %v641
        %734 = vst.msk [vmem:[%s726 + $0x30] sm:$0xff] %vm727, %v643
        %735 = vst.msk [vmem:[%s726 + $0x38] sm:$0xff] %vm727, %v645
        %736 = vst.msk [vmem:[%s726 + $0x40] sm:$0xff] %vm727, %v647
        %737 = vst.msk [vmem:[%s726 + $0x48] sm:$0xff] %vm727, %v649
        %738 = vst.msk [vmem:[%s726 + $0x50] sm:$0xff] %vm727, %v651
        %739 = vst.msk [vmem:[%s726 + $0x58] sm:$0xff] %vm727, %v653
        %740 = vst.msk [vmem:[%s726 + $0x60] sm:$0xff] %vm727, %v655
        %741 = vst.msk [vmem:[%s726 + $0x68] sm:$0xff] %vm727, %v657
        %742 = vst.msk [vmem:[%s726 + $0x70] sm:$0xff] %vm727, %v659
        %743 = vst.msk [vmem:[%s726 + $0x78] sm:$0xff] %vm727, %v661
        %744 = vst.msk [vmem:[%s726 + $0x80] sm:$0xff] %vm727, %v663
        %745 = vst.msk [vmem:[%s726 + $0x88] sm:$0xff] %vm727, %v665
        %746 = vst.msk [vmem:[%s726 + $0x90] sm:$0xff] %vm727, %v667
        %747 = vst.msk [vmem:[%s726 + $0x98] sm:$0xff] %vm727, %v669
        %748 = vst.msk [vmem:[%s726 + $0xa0] sm:$0xff] %vm727, %v671
        %749 = vst.msk [vmem:[%s726 + $0xa8] sm:$0xff] %vm727, %v673
        %750 = vst.msk [vmem:[%s726 + $0xb0] sm:$0xff] %vm727, %v675
        %751 = vst.msk [vmem:[%s726 + $0xb8] sm:$0xff] %vm727, %v677
        %752 = vst.msk [vmem:[%s726 + $0xc0] sm:$0xff] %vm727, %v679
        %753 = vst.msk [vmem:[%s726 + $0xc8] sm:$0xff] %vm727, %v681
        %754 = vst.msk [vmem:[%s726 + $0xd0] sm:$0xff] %vm727, %v683
        %755 = vst.msk [vmem:[%s726 + $0xd8] sm:$0xff] %vm727, %v685
        %756 = vst.msk [vmem:[%s726 + $0xe0] sm:$0xff] %vm727, %v687
        %757 = vst.msk [vmem:[%s726 + $0xe8] sm:$0xff] %vm727, %v689
        %758 = vst.msk [vmem:[%s726 + $0xf0] sm:$0xff] %vm727, %v691
        %759 = vst.msk [vmem:[%s726 + $0xf8] sm:$0xff] %vm727, %v693
        %vm760 = vcmask 31744
        %761 = vst.msk [vmem:[%s726 + $0x1] sm:$0xff] %vm760, %v566
        %vm762 = vcmask 30720
        %763 = vst.msk [vmem:[%s726 + $0x9] sm:$0x7f] %vm762, %v567
        %764 = vst.msk [vmem:[%s726 + $0x11] sm:$0xff] %vm760, %v568
        %765 = vst.msk [vmem:[%s726 + $0x19] sm:$0x7f] %vm762, %v569
        %766 = vst.msk [vmem:[%s726 + $0x21] sm:$0xff] %vm760, %v570
        %767 = vst.msk [vmem:[%s726 + $0x29] sm:$0x7f] %vm762, %v571
        %768 = vst.msk [vmem:[%s726 + $0x31] sm:$0xff] %vm760, %v572
        %769 = vst.msk [vmem:[%s726 + $0x39] sm:$0x7f] %vm762, %v573
        %770 = vst.msk [vmem:[%s726 + $0x41] sm:$0xff] %vm760, %v574
        %771 = vst.msk [vmem:[%s726 + $0x49] sm:$0x7f] %vm762, %v575
        %772 = vst.msk [vmem:[%s726 + $0x51] sm:$0xff] %vm760, %v576
        %773 = vst.msk [vmem:[%s726 + $0x59] sm:$0x7f] %vm762, %v577
        %774 = vst.msk [vmem:[%s726 + $0x61] sm:$0xff] %vm760, %v578
        %775 = vst.msk [vmem:[%s726 + $0x69] sm:$0x7f] %vm762, %v579
        %776 = vst.msk [vmem:[%s726 + $0x71] sm:$0xff] %vm760, %v580
        %777 = vst.msk [vmem:[%s726 + $0x79] sm:$0x7f] %vm762, %v581
        %778 = vst.msk [vmem:[%s726 + $0x81] sm:$0xff] %vm760, %v582
        %779 = vst.msk [vmem:[%s726 + $0x89] sm:$0x7f] %vm762, %v583
        %780 = vst.msk [vmem:[%s726 + $0x91] sm:$0xff] %vm760, %v584
        %781 = vst.msk [vmem:[%s726 + $0x99] sm:$0x7f] %vm762, %v585
        %782 = vst.msk [vmem:[%s726 + $0xa1] sm:$0xff] %vm760, %v586
        %783 = vst.msk [vmem:[%s726 + $0xa9] sm:$0x7f] %vm762, %v587
        %784 = vst.msk [vmem:[%s726 + $0xb1] sm:$0xff] %vm760, %v588
        %785 = vst.msk [vmem:[%s726 + $0xb9] sm:$0x7f] %vm762, %v589
        %786 = vst.msk [vmem:[%s726 + $0xc1] sm:$0xff] %vm760, %v590
        %787 = vst.msk [vmem:[%s726 + $0xc9] sm:$0x7f] %vm762, %v591
        %788 = vst.msk [vmem:[%s726 + $0xd1] sm:$0xff] %vm760, %v592
        %789 = vst.msk [vmem:[%s726 + $0xd9] sm:$0x7f] %vm762, %v593
        %790 = vst.msk [vmem:[%s726 + $0xe1] sm:$0xff] %vm760, %v594
        %791 = vst.msk [vmem:[%s726 + $0xe9] sm:$0x7f] %vm762, %v595
        %792 = vst.msk [vmem:[%s726 + $0xf1] sm:$0xff] %vm760, %v596
        %793 = vst.msk [vmem:[%s726 + $0xf9] sm:$0x7f] %vm762, %v597
        %vm794 = vcmask 24576
        %795 = vst.msk [vmem:[%s726] sm:$0x1] %vm794, 0.0
        %796 = vst.msk [vmem:[%s726 + $0x10] sm:$0x1] %vm794, 0.0
        %797 = vst.msk [vmem:[%s726 + $0x20] sm:$0x1] %vm794, 0.0
        %798 = vst.msk [vmem:[%s726 + $0x30] sm:$0x1] %vm794, 0.0
        %799 = vst.msk [vmem:[%s726 + $0x40] sm:$0x1] %vm794, 0.0
        %800 = vst.msk [vmem:[%s726 + $0x50] sm:$0x1] %vm794, 0.0
        %801 = vst.msk [vmem:[%s726 + $0x60] sm:$0x1] %vm794, 0.0
        %802 = vst.msk [vmem:[%s726 + $0x70] sm:$0x1] %vm794, 0.0
        %803 = vst.msk [vmem:[%s726 + $0x80] sm:$0x1] %vm794, 0.0
        %804 = vst.msk [vmem:[%s726 + $0x90] sm:$0x1] %vm794, 0.0
        %805 = vst.msk [vmem:[%s726 + $0xa0] sm:$0x1] %vm794, 0.0
        %806 = vst.msk [vmem:[%s726 + $0xb0] sm:$0x1] %vm794, 0.0
        %807 = vst.msk [vmem:[%s726 + $0xc0] sm:$0x1] %vm794, 0.0
        %808 = vst.msk [vmem:[%s726 + $0xd0] sm:$0x1] %vm794, 0.0
        %809 = vst.msk [vmem:[%s726 + $0xe0] sm:$0x1] %vm794, 0.0
        %810 = vst.msk [vmem:[%s726 + $0xf0] sm:$0x1] %vm794, 0.0
        %811 = vrot.lane.b32.xlu0 %v566, 8
        %v812 = vpop.permute.xlu0 %811
        %813 = vrot.lane.b32.xlu0 %v567, 8
        %v814 = vpop.permute.xlu0 %813
        %815 = vrot.lane.b32.xlu0 %v568, 8
        %v816 = vpop.permute.xlu0 %815
        %817 = vrot.lane.b32.xlu0 %v569, 8
        %v818 = vpop.permute.xlu0 %817
        %819 = vrot.lane.b32.xlu0 %v570, 8
        %v820 = vpop.permute.xlu0 %819
        %821 = vrot.lane.b32.xlu0 %v571, 8
        %v822 = vpop.permute.xlu0 %821
        %823 = vrot.lane.b32.xlu0 %v572, 8
        %v824 = vpop.permute.xlu0 %823
        %825 = vrot.lane.b32.xlu0 %v573, 8
        %v826 = vpop.permute.xlu0 %825
        %827 = vrot.lane.b32.xlu0 %v574, 8
        %v828 = vpop.permute.xlu0 %827
        %829 = vrot.lane.b32.xlu0 %v575, 8
        %v830 = vpop.permute.xlu0 %829
        %831 = vrot.lane.b32.xlu0 %v576, 8
        %v832 = vpop.permute.xlu0 %831
        %833 = vrot.lane.b32.xlu0 %v577, 8
        %v834 = vpop.permute.xlu0 %833
        %835 = vrot.lane.b32.xlu0 %v578, 8
        %v836 = vpop.permute.xlu0 %835
        %837 = vrot.lane.b32.xlu0 %v579, 8
        %v838 = vpop.permute.xlu0 %837
        %839 = vrot.lane.b32.xlu0 %v580, 8
        %v840 = vpop.permute.xlu0 %839
        %841 = vrot.lane.b32.xlu0 %v581, 8
        %v842 = vpop.permute.xlu0 %841
        %843 = vrot.lane.b32.xlu0 %v582, 8
        %v844 = vpop.permute.xlu0 %843
        %845 = vrot.lane.b32.xlu0 %v583, 8
        %v846 = vpop.permute.xlu0 %845
        %847 = vrot.lane.b32.xlu0 %v584, 8
        %v848 = vpop.permute.xlu0 %847
        %849 = vrot.lane.b32.xlu0 %v585, 8
        %v850 = vpop.permute.xlu0 %849
        %851 = vrot.lane.b32.xlu0 %v586, 8
        %v852 = vpop.permute.xlu0 %851
        %853 = vrot.lane.b32.xlu0 %v587, 8
        %v854 = vpop.permute.xlu0 %853
        %855 = vrot.lane.b32.xlu0 %v588, 8
        %v856 = vpop.permute.xlu0 %855
        %857 = vrot.lane.b32.xlu0 %v589, 8
        %v858 = vpop.permute.xlu0 %857
        %859 = vrot.lane.b32.xlu0 %v590, 8
        %v860 = vpop.permute.xlu0 %859
        %861 = vrot.lane.b32.xlu0 %v591, 8
        %v862 = vpop.permute.xlu0 %861
        %863 = vrot.lane.b32.xlu0 %v592, 8
        %v864 = vpop.permute.xlu0 %863
        %865 = vrot.lane.b32.xlu0 %v593, 8
        %v866 = vpop.permute.xlu0 %865
        %867 = vrot.lane.b32.xlu0 %v594, 8
        %v868 = vpop.permute.xlu0 %867
        %869 = vrot.lane.b32.xlu0 %v595, 8
        %v870 = vpop.permute.xlu0 %869
        %871 = vrot.lane.b32.xlu0 %v596, 8
        %v872 = vpop.permute.xlu0 %871
        %873 = vrot.lane.b32.xlu0 %v597, 8
        %v874 = vpop.permute.xlu0 %873
        %vm907 = vcmask 97345
        %908 = vst.msk [vmem:[%s726 - $0x1] sm:$0xfe] %vm907, %v812
        %vm909 = vcmask 97344
        %910 = vst.msk [vmem:[%s726 + $0x7] sm:$0xff] %vm909, %v814
        %911 = vst.msk [vmem:[%s726 + $0xf] sm:$0xfe] %vm907, %v816
        %912 = vst.msk [vmem:[%s726 + $0x17] sm:$0xff] %vm909, %v818
        %913 = vst.msk [vmem:[%s726 + $0x1f] sm:$0xfe] %vm907, %v820
        %914 = vst.msk [vmem:[%s726 + $0x27] sm:$0xff] %vm909, %v822
        %915 = vst.msk [vmem:[%s726 + $0x2f] sm:$0xfe] %vm907, %v824
        %916 = vst.msk [vmem:[%s726 + $0x37] sm:$0xff] %vm909, %v826
        %917 = vst.msk [vmem:[%s726 + $0x3f] sm:$0xfe] %vm907, %v828
        %918 = vst.msk [vmem:[%s726 + $0x47] sm:$0xff] %vm909, %v830
        %919 = vst.msk [vmem:[%s726 + $0x4f] sm:$0xfe] %vm907, %v832
        %920 = vst.msk [vmem:[%s726 + $0x57] sm:$0xff] %vm909, %v834
        %921 = vst.msk [vmem:[%s726 + $0x5f] sm:$0xfe] %vm907, %v836
        %922 = vst.msk [vmem:[%s726 + $0x67] sm:$0xff] %vm909, %v838
        %923 = vst.msk [vmem:[%s726 + $0x6f] sm:$0xfe] %vm907, %v840
        %924 = vst.msk [vmem:[%s726 + $0x77] sm:$0xff] %vm909, %v842
        %925 = vst.msk [vmem:[%s726 + $0x7f] sm:$0xfe] %vm907, %v844
        %926 = vst.msk [vmem:[%s726 + $0x87] sm:$0xff] %vm909, %v846
        %927 = vst.msk [vmem:[%s726 + $0x8f] sm:$0xfe] %vm907, %v848
        %928 = vst.msk [vmem:[%s726 + $0x97] sm:$0xff] %vm909, %v850
        %929 = vst.msk [vmem:[%s726 + $0x9f] sm:$0xfe] %vm907, %v852
        %930 = vst.msk [vmem:[%s726 + $0xa7] sm:$0xff] %vm909, %v854
        %931 = vst.msk [vmem:[%s726 + $0xaf] sm:$0xfe] %vm907, %v856
        %932 = vst.msk [vmem:[%s726 + $0xb7] sm:$0xff] %vm909, %v858
        %933 = vst.msk [vmem:[%s726 + $0xbf] sm:$0xfe] %vm907, %v860
        %934 = vst.msk [vmem:[%s726 + $0xc7] sm:$0xff] %vm909, %v862
        %935 = vst.msk [vmem:[%s726 + $0xcf] sm:$0xfe] %vm907, %v864
        %936 = vst.msk [vmem:[%s726 + $0xd7] sm:$0xff] %vm909, %v866
        %937 = vst.msk [vmem:[%s726 + $0xdf] sm:$0xfe] %vm907, %v868
        %938 = vst.msk [vmem:[%s726 + $0xe7] sm:$0xff] %vm909, %v870
        %939 = vst.msk [vmem:[%s726 + $0xef] sm:$0xfe] %vm907, %v872
        %940 = vst.msk [vmem:[%s726 + $0xf7] sm:$0xff] %vm909, %v874
        %vm941 = vcmask 90176
        %942 = vst.msk [vmem:[%s726 + $0xf] sm:$0x1] %vm941, 0.0
        %943 = vst.msk [vmem:[%s726 + $0x1f] sm:$0x1] %vm941, 0.0
        %944 = vst.msk [vmem:[%s726 + $0x2f] sm:$0x1] %vm941, 0.0
        %945 = vst.msk [vmem:[%s726 + $0x3f] sm:$0x1] %vm941, 0.0
        %946 = vst.msk [vmem:[%s726 + $0x4f] sm:$0x1] %vm941, 0.0
        %947 = vst.msk [vmem:[%s726 + $0x5f] sm:$0x1] %vm941, 0.0
        %948 = vst.msk [vmem:[%s726 + $0x6f] sm:$0x1] %vm941, 0.0
        %949 = vst.msk [vmem:[%s726 + $0x7f] sm:$0x1] %vm941, 0.0
        %950 = vst.msk [vmem:[%s726 + $0x8f] sm:$0x1] %vm941, 0.0
        %951 = vst.msk [vmem:[%s726 + $0x9f] sm:$0x1] %vm941, 0.0
        %952 = vst.msk [vmem:[%s726 + $0xaf] sm:$0x1] %vm941, 0.0
        %953 = vst.msk [vmem:[%s726 + $0xbf] sm:$0x1] %vm941, 0.0
        %954 = vst.msk [vmem:[%s726 + $0xcf] sm:$0x1] %vm941, 0.0
        %955 = vst.msk [vmem:[%s726 + $0xdf] sm:$0x1] %vm941, 0.0
        %956 = vst.msk [vmem:[%s726 + $0xef] sm:$0x1] %vm941, 0.0
        %957 = vst.msk [vmem:[%s726 + $0xff] sm:$0x1] %vm941, 0.0
        %vm958 = vcmask 97280
        %959 = vst.msk [vmem:[#allocation2] sm:$0xff] %vm958, 0.0
        %960 = vst.msk [vmem:[#allocation2 + $0x8] sm:$0xff] %vm958, 0.0
        %s961 = scalar_lea.vmem [#allocation2], 272
        %962 = vst.msk [vmem:[%s961] sm:$0xff] %vm958, 0.0
        %963 = vst.msk [vmem:[%s961 + $0x8] sm:$0xff] %vm958, 0.0
        %v964 = vld [vmem:[#allocation2] sm:$0xff]
        %v965 = vld [vmem:[#allocation2 + $0x8] sm:$0xff]
        %v966 = vld [vmem:[#allocation2 + $0x10] sm:$0xff]
        %v967 = vld [vmem:[#allocation2 + $0x18] sm:$0xff]
        %v968 = vld [vmem:[#allocation2 + $0x20] sm:$0xff]
        %v969 = vld [vmem:[#allocation2 + $0x28] sm:$0xff]
        %v970 = vld [vmem:[#allocation2 + $0x30] sm:$0xff]
        %v971 = vld [vmem:[#allocation2 + $0x38] sm:$0xff]
        %v972 = vld [vmem:[#allocation2 + $0x40] sm:$0xff]
        %v973 = vld [vmem:[#allocation2 + $0x48] sm:$0xff]
        %v974 = vld [vmem:[#allocation2 + $0x50] sm:$0xff]
        %v975 = vld [vmem:[#allocation2 + $0x58] sm:$0xff]
        %v976 = vld [vmem:[#allocation2 + $0x60] sm:$0xff]
        %v977 = vld [vmem:[#allocation2 + $0x68] sm:$0xff]
        %v978 = vld [vmem:[#allocation2 + $0x70] sm:$0xff]
        %v979 = vld [vmem:[#allocation2 + $0x78] sm:$0xff]
        %v980 = vld [vmem:[#allocation2 + $0x80] sm:$0xff]
        %v981 = vld [vmem:[#allocation2 + $0x88] sm:$0xff]
        %v982 = vld [vmem:[#allocation2 + $0x90] sm:$0xff]
        %v983 = vld [vmem:[#allocation2 + $0x98] sm:$0xff]
        %v984 = vld [vmem:[#allocation2 + $0xa0] sm:$0xff]
        %v985 = vld [vmem:[#allocation2 + $0xa8] sm:$0xff]
        %v986 = vld [vmem:[#allocation2 + $0xb0] sm:$0xff]
        %v987 = vld [vmem:[#allocation2 + $0xb8] sm:$0xff]
        %v988 = vld [vmem:[#allocation2 + $0xc0] sm:$0xff]
        %v989 = vld [vmem:[#allocation2 + $0xc8] sm:$0xff]
        %v990 = vld [vmem:[#allocation2 + $0xd0] sm:$0xff]
        %v991 = vld [vmem:[#allocation2 + $0xd8] sm:$0xff]
        %v992 = vld [vmem:[#allocation2 + $0xe0] sm:$0xff]
        %v993 = vld [vmem:[#allocation2 + $0xe8] sm:$0xff]
        %v994 = vld [vmem:[#allocation2 + $0xf0] sm:$0xff]
        %v995 = vld [vmem:[#allocation2 + $0xf8] sm:$0xff]
        %v996 = vpack.c.bf16 %v965, %v964
        %v997 = vpack.c.bf16 %v967, %v966
        %v998 = vpack.c.bf16 %v969, %v968
        %v999 = vpack.c.bf16 %v971, %v970
        %v1000 = vpack.c.bf16 %v973, %v972
        %v1001 = vpack.c.bf16 %v975, %v974
        %v1002 = vpack.c.bf16 %v977, %v976
        %v1003 = vpack.c.bf16 %v979, %v978
        %v1004 = vpack.c.bf16 %v981, %v980
        %v1005 = vpack.c.bf16 %v983, %v982
        %v1006 = vpack.c.bf16 %v985, %v984
        %v1007 = vpack.c.bf16 %v987, %v986
        %v1008 = vpack.c.bf16 %v989, %v988
        %v1009 = vpack.c.bf16 %v991, %v990
        %v1010 = vpack.c.bf16 %v993, %v992
        %v1011 = vpack.c.bf16 %v995, %v994
        %v1012 = vld [vmem:[#allocation11] sm:$0xf]
        %v1013 = vld [vmem:[#allocation11 + $0x4] sm:$0x3]
        %v1016 = vunpack.c.l.b16 %v1012
        %v1017 = vunpack.c.l.b16 %v1013
        %v1018 = vpack.c.b16 %v1017, %v1016
        %v1020 = vsel %vm958, %v996, 0
        %v1023 = vsel %vm958, %v997, 0
        %v1026 = vsel %vm958, %v998, 0
        %v1029 = vsel %vm958, %v999, 0
        %v1032 = vsel %vm958, %v1000, 0
        %v1035 = vsel %vm958, %v1001, 0
        %v1038 = vsel %vm958, %v1002, 0
        %v1041 = vsel %vm958, %v1003, 0
        %v1044 = vsel %vm958, %v1004, 0
        %v1047 = vsel %vm958, %v1005, 0
        %v1050 = vsel %vm958, %v1006, 0
        %v1053 = vsel %vm958, %v1007, 0
        %v1056 = vsel %vm958, %v1008, 0
        %v1059 = vsel %vm958, %v1009, 0
        %v1062 = vsel %vm958, %v1010, 0
        %v1065 = vsel %vm958, %v1011, 0
        %vm1067 = vcmask 1045504
        %v1069 = vsel %vm1067, %v1018, 0
        %1071 = vmatprep.subr.bf16.mxu0 0
        %1072 = vmatpush1.bf16.msra.mxu0 %v1069
        %1073 = vmatprep.subr.bf16.mxu0 0
        %1074 = vmatpush1.bf16.msra.mxu0 0
        %1075 = vmatprep.subr.bf16.mxu0 0
        %1076 = vmatpush1.bf16.msra.mxu0 0
        %1077 = vmatprep.subr.bf16.mxu0 0
        %1078 = vmatpush1.bf16.msra.mxu0 0
        %1079 = vmatprep.subr.bf16.mxu0 0
        %1080 = vmatpush1.bf16.msra.mxu0 0
        %1081 = vmatprep.subr.bf16.mxu0 0
        %1082 = vmatpush1.bf16.msra.mxu0 0
        %1083 = vmatprep.subr.bf16.mxu0 0
        %1084 = vmatpush1.bf16.msra.mxu0 0
        %1085 = vmatprep.subr.bf16.mxu0 0
        %1086 = vmatpush1.bf16.msra.mxu0 0
        %1087 = vmatprep.subr.bf16.mxu0 0
        %1088 = vmatpush1.bf16.msra.mxu0 0
        %1089 = vmatprep.subr.bf16.mxu0 0
        %1090 = vmatpush1.bf16.msra.mxu0 0
        %1091 = vmatprep.subr.bf16.mxu0 0
        %1092 = vmatpush1.bf16.msra.mxu0 0
        %1093 = vmatprep.subr.bf16.mxu0 0
        %1094 = vmatpush1.bf16.msra.mxu0 0
        %1095 = vmatprep.subr.bf16.mxu0 0
        %1096 = vmatpush1.bf16.msra.mxu0 0
        %1097 = vmatprep.subr.bf16.mxu0 0
        %1098 = vmatpush1.bf16.msra.mxu0 0
        %1099 = vmatprep.subr.bf16.mxu0 0
        %1100 = vmatpush1.bf16.msra.mxu0 0
        %1101 = vmatprep.subr.bf16.mxu0 0
        %1102 = vmatpush1.bf16.msra.mxu0 0
        %1103 = vmatprep.mubr.bf16.mxu0 0
        %1104 = vmatmul.mubr.bf16.gmra.mrb[0].mxu0 %v1020
        %v1105 = vpop.f32.mrb[0].mxu0
        %v1106 = vadd.f32 0.0, %v1105
        %v1107 = vpop.f32.mrb[0].mxu0
        %v1108 = vpop.f32.mrb[0].mxu0
        %v1109 = vadd.f32 0.0, %v1108
        %v1110 = vpop.f32.mrb[0].mxu0
        %1111 = vmatprep.mubr.bf16.mxu0 0
        %1112 = vmatmul.mubr.bf16.gmra.mrb[0].mxu0 %v1023
        %v1113 = vpop.f32.mrb[0].mxu0
        %v1114 = vadd.f32 0.0, %v1113
        %v1115 = vpop.f32.mrb[0].mxu0
        %v1116 = vpop.f32.mrb[0].mxu0
        %v1117 = vadd.f32 0.0, %v1116
        %v1118 = vpop.f32.mrb[0].mxu0
        %1119 = vmatprep.mubr.bf16.mxu0 0
        %1120 = vmatmul.mubr.bf16.gmra.mrb[0].mxu0 %v1026
        %v1121 = vpop.f32.mrb[0].mxu0
        %v1122 = vadd.f32 0.0, %v1121
        %v1123 = vpop.f32.mrb[0].mxu0
        %v1124 = vpop.f32.mrb[0].mxu0
        %v1125 = vadd.f32 0.0, %v1124
        %v1126 = vpop.f32.mrb[0].mxu0
        %1127 = vmatprep.mubr.bf16.mxu0 0
        %1128 = vmatmul.mubr.bf16.gmra.mrb[0].mxu0 %v1029
        %v1129 = vpop.f32.mrb[0].mxu0
        %v1130 = vadd.f32 0.0, %v1129
        %v1131 = vpop.f32.mrb[0].mxu0
        %v1132 = vpop.f32.mrb[0].mxu0
        %v1133 = vadd.f32 0.0, %v1132
        %v1134 = vpop.f32.mrb[0].mxu0
        %1135 = vmatprep.mubr.bf16.mxu0 0
        %1136 = vmatmul.mubr.bf16.gmra.mrb[0].mxu0 %v1032
        %v1137 = vpop.f32.mrb[0].mxu0
        %v1138 = vadd.f32 0.0, %v1137
        %v1139 = vpop.f32.mrb[0].mxu0
        %v1140 = vpop.f32.mrb[0].mxu0
        %v1141 = vadd.f32 0.0, %v1140
        %v1142 = vpop.f32.mrb[0].mxu0
        %1143 = vmatprep.mubr.bf16.mxu0 0
        %1144 = vmatmul.mubr.bf16.gmra.mrb[0].mxu0 %v1035
        %v1145 = vpop.f32.mrb[0].mxu0
        %v1146 = vadd.f32 0.0, %v1145
        %v1147 = vpop.f32.mrb[0].mxu0
        %v1148 = vpop.f32.mrb[0].mxu0
        %v1149 = vadd.f32 0.0, %v1148
        %v1150 = vpop.f32.mrb[0].mxu0
        %1151 = vmatprep.mubr.bf16.mxu0 0
        %1152 = vmatmul.mubr.bf16.gmra.mrb[0].mxu0 %v1038
        %v1153 = vpop.f32.mrb[0].mxu0
        %v1154 = vadd.f32 0.0, %v1153
        %v1155 = vpop.f32.mrb[0].mxu0
        %v1156 = vpop.f32.mrb[0].mxu0
        %v1157 = vadd.f32 0.0, %v1156
        %v1158 = vpop.f32.mrb[0].mxu0
        %1159 = vmatprep.mubr.bf16.mxu0 0
        %1160 = vmatmul.mubr.bf16.gmra.mrb[0].mxu0 %v1041
        %v1161 = vpop.f32.mrb[0].mxu0
        %v1162 = vadd.f32 0.0, %v1161
        %v1163 = vpop.f32.mrb[0].mxu0
        %v1164 = vpop.f32.mrb[0].mxu0
        %v1165 = vadd.f32 0.0, %v1164
        %v1166 = vpop.f32.mrb[0].mxu0
        %1167 = vmatprep.mubr.bf16.mxu0 0
        %1168 = vmatmul.mubr.bf16.gmra.mrb[0].mxu0 %v1044
        %v1169 = vpop.f32.mrb[0].mxu0
        %v1170 = vadd.f32 0.0, %v1169
        %v1171 = vpop.f32.mrb[0].mxu0
        %v1172 = vpop.f32.mrb[0].mxu0
        %v1173 = vadd.f32 0.0, %v1172
        %v1174 = vpop.f32.mrb[0].mxu0
        %1175 = vmatprep.mubr.bf16.mxu0 0
        %1176 = vmatmul.mubr.bf16.gmra.mrb[0].mxu0 %v1047
        %v1177 = vpop.f32.mrb[0].mxu0
        %v1178 = vadd.f32 0.0, %v1177
        %v1179 = vpop.f32.mrb[0].mxu0
        %v1180 = vpop.f32.mrb[0].mxu0
        %v1181 = vadd.f32 0.0, %v1180
        %v1182 = vpop.f32.mrb[0].mxu0
        %1183 = vmatprep.mubr.bf16.mxu0 0
        %1184 = vmatmul.mubr.bf16.gmra.mrb[0].mxu0 %v1050
        %v1185 = vpop.f32.mrb[0].mxu0
        %v1186 = vadd.f32 0.0, %v1185
        %v1187 = vpop.f32.mrb[0].mxu0
        %v1188 = vpop.f32.mrb[0].mxu0
        %v1189 = vadd.f32 0.0, %v1188
        %v1190 = vpop.f32.mrb[0].mxu0
        %1191 = vmatprep.mubr.bf16.mxu0 0
        %1192 = vmatmul.mubr.bf16.gmra.mrb[0].mxu0 %v1053
        %v1193 = vpop.f32.mrb[0].mxu0
        %v1194 = vadd.f32 0.0, %v1193
        %v1195 = vpop.f32.mrb[0].mxu0
        %v1196 = vpop.f32.mrb[0].mxu0
        %v1197 = vadd.f32 0.0, %v1196
        %v1198 = vpop.f32.mrb[0].mxu0
        %1199 = vmatprep.mubr.bf16.mxu0 0
        %1200 = vmatmul.mubr.bf16.gmra.mrb[0].mxu0 %v1056
        %v1201 = vpop.f32.mrb[0].mxu0
        %v1202 = vadd.f32 0.0, %v1201
        %v1203 = vpop.f32.mrb[0].mxu0
        %v1204 = vpop.f32.mrb[0].mxu0
        %v1205 = vadd.f32 0.0, %v1204
        %v1206 = vpop.f32.mrb[0].mxu0
        %1207 = vmatprep.mubr.bf16.mxu0 0
        %1208 = vmatmul.mubr.bf16.gmra.mrb[0].mxu0 %v1059
        %v1209 = vpop.f32.mrb[0].mxu0
        %v1210 = vadd.f32 0.0, %v1209
        %v1211 = vpop.f32.mrb[0].mxu0
        %v1212 = vpop.f32.mrb[0].mxu0
        %v1213 = vadd.f32 0.0, %v1212
        %v1214 = vpop.f32.mrb[0].mxu0
        %1215 = vmatprep.mubr.bf16.mxu0 0
        %1216 = vmatmul.mubr.bf16.gmra.mrb[0].mxu0 %v1062
        %v1217 = vpop.f32.mrb[0].mxu0
        %v1218 = vadd.f32 0.0, %v1217
        %v1219 = vpop.f32.mrb[0].mxu0
        %v1220 = vpop.f32.mrb[0].mxu0
        %v1221 = vadd.f32 0.0, %v1220
        %v1222 = vpop.f32.mrb[0].mxu0
        %1223 = vmatprep.mubr.bf16.mxu0 0
        %1224 = vmatmul.mubr.bf16.gmra.mrb[0].mxu0 %v1065
        %v1225 = vpop.f32.mrb[0].mxu0
        %v1226 = vadd.f32 0.0, %v1225
        %v1227 = vpop.f32.mrb[0].mxu0
        %v1228 = vpop.f32.mrb[0].mxu0
        %v1229 = vadd.f32 0.0, %v1228
        %v1230 = vpop.f32.mrb[0].mxu0
        %1231 = vdwg.mxu0
        %vm1232 = vcmask 64512
        %1233 = vst.msk [vmem:[#allocation4] sm:$0xff] %vm1232, %v1106
        %1234 = vst.msk [vmem:[#allocation4 + $0x8] sm:$0xff] %vm1232, %v1109
        %1235 = vst.msk [vmem:[#allocation4 + $0x10] sm:$0xff] %vm1232, %v1114
        %1236 = vst.msk [vmem:[#allocation4 + $0x18] sm:$0xff] %vm1232, %v1117
        %1237 = vst.msk [vmem:[#allocation4 + $0x20] sm:$0xff] %vm1232, %v1122
        %1238 = vst.msk [vmem:[#allocation4 + $0x28] sm:$0xff] %vm1232, %v1125
        %1239 = vst.msk [vmem:[#allocation4 + $0x30] sm:$0xff] %vm1232, %v1130
        %1240 = vst.msk [vmem:[#allocation4 + $0x38] sm:$0xff] %vm1232, %v1133
        %1241 = vst.msk [vmem:[#allocation4 + $0x40] sm:$0xff] %vm1232, %v1138
        %1242 = vst.msk [vmem:[#allocation4 + $0x48] sm:$0xff] %vm1232, %v1141
        %1243 = vst.msk [vmem:[#allocation4 + $0x50] sm:$0xff] %vm1232, %v1146
        %1244 = vst.msk [vmem:[#allocation4 + $0x58] sm:$0xff] %vm1232, %v1149
        %1245 = vst.msk [vmem:[#allocation4 + $0x60] sm:$0xff] %vm1232, %v1154
        %1246 = vst.msk [vmem:[#allocation4 + $0x68] sm:$0xff] %vm1232, %v1157
        %1247 = vst.msk [vmem:[#allocation4 + $0x70] sm:$0xff] %vm1232, %v1162
        %1248 = vst.msk [vmem:[#allocation4 + $0x78] sm:$0xff] %vm1232, %v1165
        %1249 = vst.msk [vmem:[#allocation4 + $0x80] sm:$0xff] %vm1232, %v1170
        %1250 = vst.msk [vmem:[#allocation4 + $0x88] sm:$0xff] %vm1232, %v1173
        %1251 = vst.msk [vmem:[#allocation4 + $0x90] sm:$0xff] %vm1232, %v1178
        %1252 = vst.msk [vmem:[#allocation4 + $0x98] sm:$0xff] %vm1232, %v1181
        %1253 = vst.msk [vmem:[#allocation4 + $0xa0] sm:$0xff] %vm1232, %v1186
        %1254 = vst.msk [vmem:[#allocation4 + $0xa8] sm:$0xff] %vm1232, %v1189
        %1255 = vst.msk [vmem:[#allocation4 + $0xb0] sm:$0xff] %vm1232, %v1194
        %1256 = vst.msk [vmem:[#allocation4 + $0xb8] sm:$0xff] %vm1232, %v1197
        %1257 = vst.msk [vmem:[#allocation4 + $0xc0] sm:$0xff] %vm1232, %v1202
        %1258 = vst.msk [vmem:[#allocation4 + $0xc8] sm:$0xff] %vm1232, %v1205
        %1259 = vst.msk [vmem:[#allocation4 + $0xd0] sm:$0xff] %vm1232, %v1210
        %1260 = vst.msk [vmem:[#allocation4 + $0xd8] sm:$0xff] %vm1232, %v1213
        %1261 = vst.msk [vmem:[#allocation4 + $0xe0] sm:$0xff] %vm1232, %v1218
        %1262 = vst.msk [vmem:[#allocation4 + $0xe8] sm:$0xff] %vm1232, %v1221
        %1263 = vst.msk [vmem:[#allocation4 + $0xf0] sm:$0xff] %vm1232, %v1226
        %1264 = vst.msk [vmem:[#allocation4 + $0xf8] sm:$0xff] %vm1232, %v1229
        %v1265 = vld [vmem:[%s726] sm:$0xff]
        %v1266 = vld [vmem:[%s726 + $0x8] sm:$0xff]
        %v1267 = vld [vmem:[%s726 + $0x10] sm:$0xff]
        %v1268 = vld [vmem:[%s726 + $0x18] sm:$0xff]
        %v1269 = vld [vmem:[%s726 + $0x20] sm:$0xff]
        %v1270 = vld [vmem:[%s726 + $0x28] sm:$0xff]
        %v1271 = vld [vmem:[%s726 + $0x30] sm:$0xff]
        %v1272 = vld [vmem:[%s726 + $0x38] sm:$0xff]
        %v1273 = vld [vmem:[%s726 + $0x40] sm:$0xff]
        %v1274 = vld [vmem:[%s726 + $0x48] sm:$0xff]
        %v1275 = vld [vmem:[%s726 + $0x50] sm:$0xff]
        %v1276 = vld [vmem:[%s726 + $0x58] sm:$0xff]
        %v1277 = vld [vmem:[%s726 + $0x60] sm:$0xff]
        %v1278 = vld [vmem:[%s726 + $0x68] sm:$0xff]
        %v1279 = vld [vmem:[%s726 + $0x70] sm:$0xff]
        %v1280 = vld [vmem:[%s726 + $0x78] sm:$0xff]
        %v1281 = vld [vmem:[%s726 + $0x80] sm:$0xff]
        %v1282 = vld [vmem:[%s726 + $0x88] sm:$0xff]
        %v1283 = vld [vmem:[%s726 + $0x90] sm:$0xff]
        %v1284 = vld [vmem:[%s726 + $0x98] sm:$0xff]
        %v1285 = vld [vmem:[%s726 + $0xa0] sm:$0xff]
        %v1286 = vld [vmem:[%s726 + $0xa8] sm:$0xff]
        %v1287 = vld [vmem:[%s726 + $0xb0] sm:$0xff]
        %v1288 = vld [vmem:[%s726 + $0xb8] sm:$0xff]
        %v1289 = vld [vmem:[%s726 + $0xc0] sm:$0xff]
        %v1290 = vld [vmem:[%s726 + $0xc8] sm:$0xff]
        %v1291 = vld [vmem:[%s726 + $0xd0] sm:$0xff]
        %v1292 = vld [vmem:[%s726 + $0xd8] sm:$0xff]
        %v1293 = vld [vmem:[%s726 + $0xe0] sm:$0xff]
        %v1294 = vld [vmem:[%s726 + $0xe8] sm:$0xff]
        %v1295 = vld [vmem:[%s726 + $0xf0] sm:$0xff]
        %v1296 = vld [vmem:[%s726 + $0xf8] sm:$0xff]
        %v1297 = vpack.c.bf16 %v1266, %v1265
        %v1298 = vpack.c.bf16 %v1268, %v1267
        %v1299 = vpack.c.bf16 %v1270, %v1269
        %v1300 = vpack.c.bf16 %v1272, %v1271
        %v1301 = vpack.c.bf16 %v1274, %v1273
        %v1302 = vpack.c.bf16 %v1276, %v1275
        %v1303 = vpack.c.bf16 %v1278, %v1277
        %v1304 = vpack.c.bf16 %v1280, %v1279
        %v1305 = vpack.c.bf16 %v1282, %v1281
        %v1306 = vpack.c.bf16 %v1284, %v1283
        %v1307 = vpack.c.bf16 %v1286, %v1285
        %v1308 = vpack.c.bf16 %v1288, %v1287
        %v1309 = vpack.c.bf16 %v1290, %v1289
        %v1310 = vpack.c.bf16 %v1292, %v1291
        %v1311 = vpack.c.bf16 %v1294, %v1293
        %v1312 = vpack.c.bf16 %v1296, %v1295
        %s1313 = scalar_lea.vmem [#allocation11], 8
        %v1314 = vld [vmem:[%s1313] sm:$0xf]
        %v1315 = vld [vmem:[%s1313 + $0x4] sm:$0x3]
        %v1318 = vunpack.c.l.b16 %v1314
        %v1319 = vunpack.c.l.b16 %v1315
        %v1320 = vpack.c.b16 %v1319, %v1318
        %v1322 = vsel %vm958, %v1297, 0
        %v1325 = vsel %vm958, %v1298, 0
        %v1328 = vsel %vm958, %v1299, 0
        %v1331 = vsel %vm958, %v1300, 0
        %v1334 = vsel %vm958, %v1301, 0
        %v1337 = vsel %vm958, %v1302, 0
        %v1340 = vsel %vm958, %v1303, 0
        %v1343 = vsel %vm958, %v1304, 0
        %v1346 = vsel %vm958, %v1305, 0
        %v1349 = vsel %vm958, %v1306, 0
        %v1352 = vsel %vm958, %v1307, 0
        %v1355 = vsel %vm958, %v1308, 0
        %v1358 = vsel %vm958, %v1309, 0
        %v1361 = vsel %vm958, %v1310, 0
        %v1364 = vsel %vm958, %v1311, 0
        %v1367 = vsel %vm958, %v1312, 0
        %v1370 = vsel %vm1067, %v1320, 0
        %1372 = vmatprep.subr.bf16.mxu0 0
        %1373 = vmatpush1.bf16.msra.mxu0 %v1370
        %1374 = vmatprep.subr.bf16.mxu0 0
        %1375 = vmatpush1.bf16.msra.mxu0 0
        %1376 = vmatprep.subr.bf16.mxu0 0
        %1377 = vmatpush1.bf16.msra.mxu0 0
        %1378 = vmatprep.subr.bf16.mxu0 0
        %1379 = vmatpush1.bf16.msra.mxu0 0
        %1380 = vmatprep.subr.bf16.mxu0 0
        %1381 = vmatpush1.bf16.msra.mxu0 0
        %1382 = vmatprep.subr.bf16.mxu0 0
        %1383 = vmatpush1.bf16.msra.mxu0 0
        %1384 = vmatprep.subr.bf16.mxu0 0
        %1385 = vmatpush1.bf16.msra.mxu0 0
        %1386 = vmatprep.subr.bf16.mxu0 0
        %1387 = vmatpush1.bf16.msra.mxu0 0
        %1388 = vmatprep.subr.bf16.mxu0 0
        %1389 = vmatpush1.bf16.msra.mxu0 0
        %1390 = vmatprep.subr.bf16.mxu0 0
        %1391 = vmatpush1.bf16.msra.mxu0 0
        %1392 = vmatprep.subr.bf16.mxu0 0
        %1393 = vmatpush1.bf16.msra.mxu0 0
        %1394 = vmatprep.subr.bf16.mxu0 0
        %1395 = vmatpush1.bf16.msra.mxu0 0
        %1396 = vmatprep.subr.bf16.mxu0 0
        %1397 = vmatpush1.bf16.msra.mxu0 0
        %1398 = vmatprep.subr.bf16.mxu0 0
        %1399 = vmatpush1.bf16.msra.mxu0 0
        %1400 = vmatprep.subr.bf16.mxu0 0
        %1401 = vmatpush1.bf16.msra.mxu0 0
        %1402 = vmatprep.subr.bf16.mxu0 0
        %1403 = vmatpush1.bf16.msra.mxu0 0
        %1404 = vmatprep.mubr.bf16.mxu0 0
        %1405 = vmatmul.mubr.bf16.gmra.mrb[0].mxu0 %v1322
        %v1406 = vpop.f32.mrb[0].mxu0
        %v1407 = vadd.f32 0.0, %v1406
        %v1408 = vpop.f32.mrb[0].mxu0
        %v1409 = vpop.f32.mrb[0].mxu0
        %v1410 = vadd.f32 0.0, %v1409
        %v1411 = vpop.f32.mrb[0].mxu0
        %1412 = vmatprep.mubr.bf16.mxu0 0
        %1413 = vmatmul.mubr.bf16.gmra.mrb[0].mxu0 %v1325
        %v1414 = vpop.f32.mrb[0].mxu0
        %v1415 = vadd.f32 0.0, %v1414
        %v1416 = vpop.f32.mrb[0].mxu0
        %v1417 = vpop.f32.mrb[0].mxu0
        %v1418 = vadd.f32 0.0, %v1417
        %v1419 = vpop.f32.mrb[0].mxu0
        %1420 = vmatprep.mubr.bf16.mxu0 0
        %1421 = vmatmul.mubr.bf16.gmra.mrb[0].mxu0 %v1328
        %v1422 = vpop.f32.mrb[0].mxu0
        %v1423 = vadd.f32 0.0, %v1422
        %v1424 = vpop.f32.mrb[0].mxu0
        %v1425 = vpop.f32.mrb[0].mxu0
        %v1426 = vadd.f32 0.0, %v1425
        %v1427 = vpop.f32.mrb[0].mxu0
        %1428 = vmatprep.mubr.bf16.mxu0 0
        %1429 = vmatmul.mubr.bf16.gmra.mrb[0].mxu0 %v1331
        %v1430 = vpop.f32.mrb[0].mxu0
        %v1431 = vadd.f32 0.0, %v1430
        %v1432 = vpop.f32.mrb[0].mxu0
        %v1433 = vpop.f32.mrb[0].mxu0
        %v1434 = vadd.f32 0.0, %v1433
        %v1435 = vpop.f32.mrb[0].mxu0
        %1436 = vmatprep.mubr.bf16.mxu0 0
        %1437 = vmatmul.mubr.bf16.gmra.mrb[0].mxu0 %v1334
        %v1438 = vpop.f32.mrb[0].mxu0
        %v1439 = vadd.f32 0.0, %v1438
        %v1440 = vpop.f32.mrb[0].mxu0
        %v1441 = vpop.f32.mrb[0].mxu0
        %v1442 = vadd.f32 0.0, %v1441
        %v1443 = vpop.f32.mrb[0].mxu0
        %1444 = vmatprep.mubr.bf16.mxu0 0
        %1445 = vmatmul.mubr.bf16.gmra.mrb[0].mxu0 %v1337
        %v1446 = vpop.f32.mrb[0].mxu0
        %v1447 = vadd.f32 0.0, %v1446
        %v1448 = vpop.f32.mrb[0].mxu0
        %v1449 = vpop.f32.mrb[0].mxu0
        %v1450 = vadd.f32 0.0, %v1449
        %v1451 = vpop.f32.mrb[0].mxu0
        %1452 = vmatprep.mubr.bf16.mxu0 0
        %1453 = vmatmul.mubr.bf16.gmra.mrb[0].mxu0 %v1340
        %v1454 = vpop.f32.mrb[0].mxu0
        %v1455 = vadd.f32 0.0, %v1454
        %v1456 = vpop.f32.mrb[0].mxu0
        %v1457 = vpop.f32.mrb[0].mxu0
        %v1458 = vadd.f32 0.0, %v1457
        %v1459 = vpop.f32.mrb[0].mxu0
        %1460 = vmatprep.mubr.bf16.mxu0 0
        %1461 = vmatmul.mubr.bf16.gmra.mrb[0].mxu0 %v1343
        %v1462 = vpop.f32.mrb[0].mxu0
        %v1463 = vadd.f32 0.0, %v1462
        %v1464 = vpop.f32.mrb[0].mxu0
        %v1465 = vpop.f32.mrb[0].mxu0
        %v1466 = vadd.f32 0.0, %v1465
        %v1467 = vpop.f32.mrb[0].mxu0
        %1468 = vmatprep.mubr.bf16.mxu0 0
        %1469 = vmatmul.mubr.bf16.gmra.mrb[0].mxu0 %v1346
        %v1470 = vpop.f32.mrb[0].mxu0
        %v1471 = vadd.f32 0.0, %v1470
        %v1472 = vpop.f32.mrb[0].mxu0
        %v1473 = vpop.f32.mrb[0].mxu0
        %v1474 = vadd.f32 0.0, %v1473
        %v1475 = vpop.f32.mrb[0].mxu0
        %1476 = vmatprep.mubr.bf16.mxu0 0
        %1477 = vmatmul.mubr.bf16.gmra.mrb[0].mxu0 %v1349
        %v1478 = vpop.f32.mrb[0].mxu0
        %v1479 = vadd.f32 0.0, %v1478
        %v1480 = vpop.f32.mrb[0].mxu0
        %v1481 = vpop.f32.mrb[0].mxu0
        %v1482 = vadd.f32 0.0, %v1481
        %v1483 = vpop.f32.mrb[0].mxu0
        %1484 = vmatprep.mubr.bf16.mxu0 0
        %1485 = vmatmul.mubr.bf16.gmra.mrb[0].mxu0 %v1352
        %v1486 = vpop.f32.mrb[0].mxu0
        %v1487 = vadd.f32 0.0, %v1486
        %v1488 = vpop.f32.mrb[0].mxu0
        %v1489 = vpop.f32.mrb[0].mxu0
        %v1490 = vadd.f32 0.0, %v1489
        %v1491 = vpop.f32.mrb[0].mxu0
        %1492 = vmatprep.mubr.bf16.mxu0 0
        %1493 = vmatmul.mubr.bf16.gmra.mrb[0].mxu0 %v1355
        %v1494 = vpop.f32.mrb[0].mxu0
        %v1495 = vadd.f32 0.0, %v1494
        %v1496 = vpop.f32.mrb[0].mxu0
        %v1497 = vpop.f32.mrb[0].mxu0
        %v1498 = vadd.f32 0.0, %v1497
        %v1499 = vpop.f32.mrb[0].mxu0
        %1500 = vmatprep.mubr.bf16.mxu0 0
        %1501 = vmatmul.mubr.bf16.gmra.mrb[0].mxu0 %v1358
        %v1502 = vpop.f32.mrb[0].mxu0
        %v1503 = vadd.f32 0.0, %v1502
        %v1504 = vpop.f32.mrb[0].mxu0
        %v1505 = vpop.f32.mrb[0].mxu0
        %v1506 = vadd.f32 0.0, %v1505
        %v1507 = vpop.f32.mrb[0].mxu0
        %1508 = vmatprep.mubr.bf16.mxu0 0
        %1509 = vmatmul.mubr.bf16.gmra.mrb[0].mxu0 %v1361
        %v1510 = vpop.f32.mrb[0].mxu0
        %v1511 = vadd.f32 0.0, %v1510
        %v1512 = vpop.f32.mrb[0].mxu0
        %v1513 = vpop.f32.mrb[0].mxu0
        %v1514 = vadd.f32 0.0, %v1513
        %v1515 = vpop.f32.mrb[0].mxu0
        %1516 = vmatprep.mubr.bf16.mxu0 0
        %1517 = vmatmul.mubr.bf16.gmra.mrb[0].mxu0 %v1364
        %v1518 = vpop.f32.mrb[0].mxu0
        %v1519 = vadd.f32 0.0, %v1518
        %v1520 = vpop.f32.mrb[0].mxu0
        %v1521 = vpop.f32.mrb[0].mxu0
        %v1522 = vadd.f32 0.0, %v1521
        %v1523 = vpop.f32.mrb[0].mxu0
        %1524 = vmatprep.mubr.bf16.mxu0 0
        %1525 = vmatmul.mubr.bf16.gmra.mrb[0].mxu0 %v1367
        %v1526 = vpop.f32.mrb[0].mxu0
        %v1527 = vadd.f32 0.0, %v1526
        %v1528 = vpop.f32.mrb[0].mxu0
        %v1529 = vpop.f32.mrb[0].mxu0
        %v1530 = vadd.f32 0.0, %v1529
        %v1531 = vpop.f32.mrb[0].mxu0
        %1532 = vdwg.mxu0
        %v1533 = vld [vmem:[#allocation4] sm:$0xff]
        %v1534 = vld [vmem:[#allocation4 + $0x8] sm:$0xff]
        %v1535 = vld [vmem:[#allocation4 + $0x10] sm:$0xff]
        %v1536 = vld [vmem:[#allocation4 + $0x18] sm:$0xff]
        %v1537 = vld [vmem:[#allocation4 + $0x20] sm:$0xff]
        %v1538 = vld [vmem:[#allocation4 + $0x28] sm:$0xff]
        %v1539 = vld [vmem:[#allocation4 + $0x30] sm:$0xff]
        %v1540 = vld [vmem:[#allocation4 + $0x38] sm:$0xff]
        %v1541 = vld [vmem:[#allocation4 + $0x40] sm:$0xff]
        %v1542 = vld [vmem:[#allocation4 + $0x48] sm:$0xff]
        %v1543 = vld [vmem:[#allocation4 + $0x50] sm:$0xff]
        %v1544 = vld [vmem:[#allocation4 + $0x58] sm:$0xff]
        %v1545 = vld [vmem:[#allocation4 + $0x60] sm:$0xff]
        %v1546 = vld [vmem:[#allocation4 + $0x68] sm:$0xff]
        %v1547 = vld [vmem:[#allocation4 + $0x70] sm:$0xff]
        %v1548 = vld [vmem:[#allocation4 + $0x78] sm:$0xff]
        %v1549 = vld [vmem:[#allocation4 + $0x80] sm:$0xff]
        %v1550 = vld [vmem:[#allocation4 + $0x88] sm:$0xff]
        %v1551 = vld [vmem:[#allocation4 + $0x90] sm:$0xff]
        %v1552 = vld [vmem:[#allocation4 + $0x98] sm:$0xff]
        %v1553 = vld [vmem:[#allocation4 + $0xa0] sm:$0xff]
        %v1554 = vld [vmem:[#allocation4 + $0xa8] sm:$0xff]
        %v1555 = vld [vmem:[#allocation4 + $0xb0] sm:$0xff]
        %v1556 = vld [vmem:[#allocation4 + $0xb8] sm:$0xff]
        %v1557 = vld [vmem:[#allocation4 + $0xc0] sm:$0xff]
        %v1558 = vld [vmem:[#allocation4 + $0xc8] sm:$0xff]
        %v1559 = vld [vmem:[#allocation4 + $0xd0] sm:$0xff]
        %v1560 = vld [vmem:[#allocation4 + $0xd8] sm:$0xff]
        %v1561 = vld [vmem:[#allocation4 + $0xe0] sm:$0xff]
        %v1562 = vld [vmem:[#allocation4 + $0xe8] sm:$0xff]
        %v1563 = vld [vmem:[#allocation4 + $0xf0] sm:$0xff]
        %v1564 = vld [vmem:[#allocation4 + $0xf8] sm:$0xff]
        %v1565 = vadd.f32 %v1533, %v1407
        %v1566 = vadd.f32 %v1534, %v1410
        %v1567 = vadd.f32 %v1535, %v1415
        %v1568 = vadd.f32 %v1536, %v1418
        %v1569 = vadd.f32 %v1537, %v1423
        %v1570 = vadd.f32 %v1538, %v1426
        %v1571 = vadd.f32 %v1539, %v1431
        %v1572 = vadd.f32 %v1540, %v1434
        %v1573 = vadd.f32 %v1541, %v1439
        %v1574 = vadd.f32 %v1542, %v1442
        %v1575 = vadd.f32 %v1543, %v1447
        %v1576 = vadd.f32 %v1544, %v1450
        %v1577 = vadd.f32 %v1545, %v1455
        %v1578 = vadd.f32 %v1546, %v1458
        %v1579 = vadd.f32 %v1547, %v1463
        %v1580 = vadd.f32 %v1548, %v1466
        %v1581 = vadd.f32 %v1549, %v1471
        %v1582 = vadd.f32 %v1550, %v1474
        %v1583 = vadd.f32 %v1551, %v1479
        %v1584 = vadd.f32 %v1552, %v1482
        %v1585 = vadd.f32 %v1553, %v1487
        %v1586 = vadd.f32 %v1554, %v1490
        %v1587 = vadd.f32 %v1555, %v1495
        %v1588 = vadd.f32 %v1556, %v1498
        %v1589 = vadd.f32 %v1557, %v1503
        %v1590 = vadd.f32 %v1558, %v1506
        %v1591 = vadd.f32 %v1559, %v1511
        %v1592 = vadd.f32 %v1560, %v1514
        %v1593 = vadd.f32 %v1561, %v1519
        %v1594 = vadd.f32 %v1562, %v1522
        %v1595 = vadd.f32 %v1563, %v1527
        %v1596 = vadd.f32 %v1564, %v1530
        %1597 = vst.msk [vmem:[#allocation4] sm:$0xff] %vm1232, %v1565
        %1598 = vst.msk [vmem:[#allocation4 + $0x8] sm:$0xff] %vm1232, %v1566
        %1599 = vst.msk [vmem:[#allocation4 + $0x10] sm:$0xff] %vm1232, %v1567
        %1600 = vst.msk [vmem:[#allocation4 + $0x18] sm:$0xff] %vm1232, %v1568
        %1601 = vst.msk [vmem:[#allocation4 + $0x20] sm:$0xff] %vm1232, %v1569
        %1602 = vst.msk [vmem:[#allocation4 + $0x28] sm:$0xff] %vm1232, %v1570
        %1603 = vst.msk [vmem:[#allocation4 + $0x30] sm:$0xff] %vm1232, %v1571
        %1604 = vst.msk [vmem:[#allocation4 + $0x38] sm:$0xff] %vm1232, %v1572
        %1605 = vst.msk [vmem:[#allocation4 + $0x40] sm:$0xff] %vm1232, %v1573
        %1606 = vst.msk [vmem:[#allocation4 + $0x48] sm:$0xff] %vm1232, %v1574
        %1607 = vst.msk [vmem:[#allocation4 + $0x50] sm:$0xff] %vm1232, %v1575
        %1608 = vst.msk [vmem:[#allocation4 + $0x58] sm:$0xff] %vm1232, %v1576
        %1609 = vst.msk [vmem:[#allocation4 + $0x60] sm:$0xff] %vm1232, %v1577
        %1610 = vst.msk [vmem:[#allocation4 + $0x68] sm:$0xff] %vm1232, %v1578
        %1611 = vst.msk [vmem:[#allocation4 + $0x70] sm:$0xff] %vm1232, %v1579
        %1612 = vst.msk [vmem:[#allocation4 + $0x78] sm:$0xff] %vm1232, %v1580
        %1613 = vst.msk [vmem:[#allocation4 + $0x80] sm:$0xff] %vm1232, %v1581
        %1614 = vst.msk [vmem:[#allocation4 + $0x88] sm:$0xff] %vm1232, %v1582
        %1615 = vst.msk [vmem:[#allocation4 + $0x90] sm:$0xff] %vm1232, %v1583
        %1616 = vst.msk [vmem:[#allocation4 + $0x98] sm:$0xff] %vm1232, %v1584
        %1617 = vst.msk [vmem:[#allocation4 + $0xa0] sm:$0xff] %vm1232, %v1585
        %1618 = vst.msk [vmem:[#allocation4 + $0xa8] sm:$0xff] %vm1232, %v1586
        %1619 = vst.msk [vmem:[#allocation4 + $0xb0] sm:$0xff] %vm1232, %v1587
        %1620 = vst.msk [vmem:[#allocation4 + $0xb8] sm:$0xff] %vm1232, %v1588
        %1621 = vst.msk [vmem:[#allocation4 + $0xc0] sm:$0xff] %vm1232, %v1589
        %1622 = vst.msk [vmem:[#allocation4 + $0xc8] sm:$0xff] %vm1232, %v1590
        %1623 = vst.msk [vmem:[#allocation4 + $0xd0] sm:$0xff] %vm1232, %v1591
        %1624 = vst.msk [vmem:[#allocation4 + $0xd8] sm:$0xff] %vm1232, %v1592
        %1625 = vst.msk [vmem:[#allocation4 + $0xe0] sm:$0xff] %vm1232, %v1593
        %1626 = vst.msk [vmem:[#allocation4 + $0xe8] sm:$0xff] %vm1232, %v1594
        %1627 = vst.msk [vmem:[#allocation4 + $0xf0] sm:$0xff] %vm1232, %v1595
        %1628 = vst.msk [vmem:[#allocation4 + $0xf8] sm:$0xff] %vm1232, %v1596
        %s1629 = scalar_lea.vmem [#allocation2], 32
        %v1630 = vld [vmem:[%s1629] sm:$0xff]
        %v1631 = vld [vmem:[%s1629 + $0x8] sm:$0xff]
        %v1632 = vld [vmem:[%s1629 + $0x10] sm:$0xff]
        %v1633 = vld [vmem:[%s1629 + $0x18] sm:$0xff]
        %v1634 = vld [vmem:[%s1629 + $0x20] sm:$0xff]
        %v1635 = vld [vmem:[%s1629 + $0x28] sm:$0xff]
        %v1636 = vld [vmem:[%s1629 + $0x30] sm:$0xff]
        %v1637 = vld [vmem:[%s1629 + $0x38] sm:$0xff]
        %v1638 = vld [vmem:[%s1629 + $0x40] sm:$0xff]
        %v1639 = vld [vmem:[%s1629 + $0x48] sm:$0xff]
        %v1640 = vld [vmem:[%s1629 + $0x50] sm:$0xff]
        %v1641 = vld [vmem:[%s1629 + $0x58] sm:$0xff]
        %v1642 = vld [vmem:[%s1629 + $0x60] sm:$0xff]
        %v1643 = vld [vmem:[%s1629 + $0x68] sm:$0xff]
        %v1644 = vld [vmem:[%s1629 + $0x70] sm:$0xff]
        %v1645 = vld [vmem:[%s1629 + $0x78] sm:$0xff]
        %v1646 = vld [vmem:[%s1629 + $0x80] sm:$0xff]
        %v1647 = vld [vmem:[%s1629 + $0x88] sm:$0xff]
        %v1648 = vld [vmem:[%s1629 + $0x90] sm:$0xff]
        %v1649 = vld [vmem:[%s1629 + $0x98] sm:$0xff]
        %v1650 = vld [vmem:[%s1629 + $0xa0] sm:$0xff]
        %v1651 = vld [vmem:[%s1629 + $0xa8] sm:$0xff]
        %v1652 = vld [vmem:[%s1629 + $0xb0] sm:$0xff]
        %v1653 = vld [vmem:[%s1629 + $0xb8] sm:$0xff]
        %v1654 = vld [vmem:[%s1629 + $0xc0] sm:$0xff]
        %v1655 = vld [vmem:[%s1629 + $0xc8] sm:$0xff]
        %v1656 = vld [vmem:[%s1629 + $0xd0] sm:$0xff]
        %v1657 = vld [vmem:[%s1629 + $0xd8] sm:$0xff]
        %v1658 = vld [vmem:[%s1629 + $0xe0] sm:$0xff]
        %v1659 = vld [vmem:[%s1629 + $0xe8] sm:$0xff]
        %v1660 = vld [vmem:[%s1629 + $0xf0] sm:$0xff]
        %v1661 = vld [vmem:[%s1629 + $0xf8] sm:$0xff]
        %v1662 = vpack.c.bf16 %v1631, %v1630
        %v1663 = vpack.c.bf16 %v1633, %v1632
        %v1664 = vpack.c.bf16 %v1635, %v1634
        %v1665 = vpack.c.bf16 %v1637, %v1636
        %v1666 = vpack.c.bf16 %v1639, %v1638
        %v1667 = vpack.c.bf16 %v1641, %v1640
        %v1668 = vpack.c.bf16 %v1643, %v1642
        %v1669 = vpack.c.bf16 %v1645, %v1644
        %v1670 = vpack.c.bf16 %v1647, %v1646
        %v1671 = vpack.c.bf16 %v1649, %v1648
        %v1672 = vpack.c.bf16 %v1651, %v1650
        %v1673 = vpack.c.bf16 %v1653, %v1652
        %v1674 = vpack.c.bf16 %v1655, %v1654
        %v1675 = vpack.c.bf16 %v1657, %v1656
        %v1676 = vpack.c.bf16 %v1659, %v1658
        %v1677 = vpack.c.bf16 %v1661, %v1660
        %s1678 = scalar_lea.vmem [#allocation11], 16
        %v1679 = vld [vmem:[%s1678] sm:$0xf]
        %v1680 = vld [vmem:[%s1678 + $0x4] sm:$0x3]
        %v1683 = vunpack.c.l.b16 %v1679
        %v1684 = vunpack.c.l.b16 %v1680
        %v1685 = vpack.c.b16 %v1684, %v1683
        %v1687 = vsel %vm958, %v1662, 0
        %v1690 = vsel %vm958, %v1663, 0
        %v1693 = vsel %vm958, %v1664, 0
        %v1696 = vsel %vm958, %v1665, 0
        %v1699 = vsel %vm958, %v1666, 0
        %v1702 = vsel %vm958, %v1667, 0
        %v1705 = vsel %vm958, %v1668, 0
        %v1708 = vsel %vm958, %v1669, 0
        %v1711 = vsel %vm958, %v1670, 0
        %v1714 = vsel %vm958, %v1671, 0
        %v1717 = vsel %vm958, %v1672, 0
        %v1720 = vsel %vm958, %v1673, 0
        %v1723 = vsel %vm958, %v1674, 0
        %v1726 = vsel %vm958, %v1675, 0
        %v1729 = vsel %vm958, %v1676, 0
        %v1732 = vsel %vm958, %v1677, 0
        %v1735 = vsel %vm1067, %v1685, 0
        %1737 = vmatprep.subr.bf16.mxu0 0
        %1738 = vmatpush1.bf16.msra.mxu0 %v1735
        %1739 = vmatprep.subr.bf16.mxu0 0
        %1740 = vmatpush1.bf16.msra.mxu0 0
        %1741 = vmatprep.subr.bf16.mxu0 0
        %1742 = vmatpush1.bf16.msra.mxu0 0
        %1743 = vmatprep.subr.bf16.mxu0 0
        %1744 = vmatpush1.bf16.msra.mxu0 0
        %1745 = vmatprep.subr.bf16.mxu0 0
        %1746 = vmatpush1.bf16.msra.mxu0 0
        %1747 = vmatprep.subr.bf16.mxu0 0
        %1748 = vmatpush1.bf16.msra.mxu0 0
        %1749 = vmatprep.subr.bf16.mxu0 0
        %1750 = vmatpush1.bf16.msra.mxu0 0
        %1751 = vmatprep.subr.bf16.mxu0 0
        %1752 = vmatpush1.bf16.msra.mxu0 0
        %1753 = vmatprep.subr.bf16.mxu0 0
        %1754 = vmatpush1.bf16.msra.mxu0 0
        %1755 = vmatprep.subr.bf16.mxu0 0
        %1756 = vmatpush1.bf16.msra.mxu0 0
        %1757 = vmatprep.subr.bf16.mxu0 0
        %1758 = vmatpush1.bf16.msra.mxu0 0
        %1759 = vmatprep.subr.bf16.mxu0 0
        %1760 = vmatpush1.bf16.msra.mxu0 0
        %1761 = vmatprep.subr.bf16.mxu0 0
        %1762 = vmatpush1.bf16.msra.mxu0 0
        %1763 = vmatprep.subr.bf16.mxu0 0
        %1764 = vmatpush1.bf16.msra.mxu0 0
        %1765 = vmatprep.subr.bf16.mxu0 0
        %1766 = vmatpush1.bf16.msra.mxu0 0
        %1767 = vmatprep.subr.bf16.mxu0 0
        %1768 = vmatpush1.bf16.msra.mxu0 0
        %1769 = vmatprep.mubr.bf16.mxu0 0
        %1770 = vmatmul.mubr.bf16.gmra.mrb[0].mxu0 %v1687
        %v1771 = vpop.f32.mrb[0].mxu0
        %v1772 = vadd.f32 0.0, %v1771
        %v1773 = vpop.f32.mrb[0].mxu0
        %v1774 = vpop.f32.mrb[0].mxu0
        %v1775 = vadd.f32 0.0, %v1774
        %v1776 = vpop.f32.mrb[0].mxu0
        %1777 = vmatprep.mubr.bf16.mxu0 0
        %1778 = vmatmul.mubr.bf16.gmra.mrb[0].mxu0 %v1690
        %v1779 = vpop.f32.mrb[0].mxu0
        %v1780 = vadd.f32 0.0, %v1779
        %v1781 = vpop.f32.mrb[0].mxu0
        %v1782 = vpop.f32.mrb[0].mxu0
        %v1783 = vadd.f32 0.0, %v1782
        %v1784 = vpop.f32.mrb[0].mxu0
        %1785 = vmatprep.mubr.bf16.mxu0 0
        %1786 = vmatmul.mubr.bf16.gmra.mrb[0].mxu0 %v1693
        %v1787 = vpop.f32.mrb[0].mxu0
        %v1788 = vadd.f32 0.0, %v1787
        %v1789 = vpop.f32.mrb[0].mxu0
        %v1790 = vpop.f32.mrb[0].mxu0
        %v1791 = vadd.f32 0.0, %v1790
        %v1792 = vpop.f32.mrb[0].mxu0
        %1793 = vmatprep.mubr.bf16.mxu0 0
        %1794 = vmatmul.mubr.bf16.gmra.mrb[0].mxu0 %v1696
        %v1795 = vpop.f32.mrb[0].mxu0
        %v1796 = vadd.f32 0.0, %v1795
        %v1797 = vpop.f32.mrb[0].mxu0
        %v1798 = vpop.f32.mrb[0].mxu0
        %v1799 = vadd.f32 0.0, %v1798
        %v1800 = vpop.f32.mrb[0].mxu0
        %1801 = vmatprep.mubr.bf16.mxu0 0
        %1802 = vmatmul.mubr.bf16.gmra.mrb[0].mxu0 %v1699
        %v1803 = vpop.f32.mrb[0].mxu0
        %v1804 = vadd.f32 0.0, %v1803
        %v1805 = vpop.f32.mrb[0].mxu0
        %v1806 = vpop.f32.mrb[0].mxu0
        %v1807 = vadd.f32 0.0, %v1806
        %v1808 = vpop.f32.mrb[0].mxu0
        %1809 = vmatprep.mubr.bf16.mxu0 0
        %1810 = vmatmul.mubr.bf16.gmra.mrb[0].mxu0 %v1702
        %v1811 = vpop.f32.mrb[0].mxu0
        %v1812 = vadd.f32 0.0, %v1811
        %v1813 = vpop.f32.mrb[0].mxu0
        %v1814 = vpop.f32.mrb[0].mxu0
        %v1815 = vadd.f32 0.0, %v1814
        %v1816 = vpop.f32.mrb[0].mxu0
        %1817 = vmatprep.mubr.bf16.mxu0 0
        %1818 = vmatmul.mubr.bf16.gmra.mrb[0].mxu0 %v1705
        %v1819 = vpop.f32.mrb[0].mxu0
        %v1820 = vadd.f32 0.0, %v1819
        %v1821 = vpop.f32.mrb[0].mxu0
        %v1822 = vpop.f32.mrb[0].mxu0
        %v1823 = vadd.f32 0.0, %v1822
        %v1824 = vpop.f32.mrb[0].mxu0
        %1825 = vmatprep.mubr.bf16.mxu0 0
        %1826 = vmatmul.mubr.bf16.gmra.mrb[0].mxu0 %v1708
        %v1827 = vpop.f32.mrb[0].mxu0
        %v1828 = vadd.f32 0.0, %v1827
        %v1829 = vpop.f32.mrb[0].mxu0
        %v1830 = vpop.f32.mrb[0].mxu0
        %v1831 = vadd.f32 0.0, %v1830
        %v1832 = vpop.f32.mrb[0].mxu0
        %1833 = vmatprep.mubr.bf16.mxu0 0
        %1834 = vmatmul.mubr.bf16.gmra.mrb[0].mxu0 %v1711
        %v1835 = vpop.f32.mrb[0].mxu0
        %v1836 = vadd.f32 0.0, %v1835
        %v1837 = vpop.f32.mrb[0].mxu0
        %v1838 = vpop.f32.mrb[0].mxu0
        %v1839 = vadd.f32 0.0, %v1838
        %v1840 = vpop.f32.mrb[0].mxu0
        %1841 = vmatprep.mubr.bf16.mxu0 0
        %1842 = vmatmul.mubr.bf16.gmra.mrb[0].mxu0 %v1714
        %v1843 = vpop.f32.mrb[0].mxu0
        %v1844 = vadd.f32 0.0, %v1843
        %v1845 = vpop.f32.mrb[0].mxu0
        %v1846 = vpop.f32.mrb[0].mxu0
        %v1847 = vadd.f32 0.0, %v1846
        %v1848 = vpop.f32.mrb[0].mxu0
        %1849 = vmatprep.mubr.bf16.mxu0 0
        %1850 = vmatmul.mubr.bf16.gmra.mrb[0].mxu0 %v1717
        %v1851 = vpop.f32.mrb[0].mxu0
        %v1852 = vadd.f32 0.0, %v1851
        %v1853 = vpop.f32.mrb[0].mxu0
        %v1854 = vpop.f32.mrb[0].mxu0
        %v1855 = vadd.f32 0.0, %v1854
        %v1856 = vpop.f32.mrb[0].mxu0
        %1857 = vmatprep.mubr.bf16.mxu0 0
        %1858 = vmatmul.mubr.bf16.gmra.mrb[0].mxu0 %v1720
        %v1859 = vpop.f32.mrb[0].mxu0
        %v1860 = vadd.f32 0.0, %v1859
        %v1861 = vpop.f32.mrb[0].mxu0
        %v1862 = vpop.f32.mrb[0].mxu0
        %v1863 = vadd.f32 0.0, %v1862
        %v1864 = vpop.f32.mrb[0].mxu0
        %1865 = vmatprep.mubr.bf16.mxu0 0
        %1866 = vmatmul.mubr.bf16.gmra.mrb[0].mxu0 %v1723
        %v1867 = vpop.f32.mrb[0].mxu0
        %v1868 = vadd.f32 0.0, %v1867
        %v1869 = vpop.f32.mrb[0].mxu0
        %v1870 = vpop.f32.mrb[0].mxu0
        %v1871 = vadd.f32 0.0, %v1870
        %v1872 = vpop.f32.mrb[0].mxu0
        %1873 = vmatprep.mubr.bf16.mxu0 0
        %1874 = vmatmul.mubr.bf16.gmra.mrb[0].mxu0 %v1726
        %v1875 = vpop.f32.mrb[0].mxu0
        %v1876 = vadd.f32 0.0, %v1875
        %v1877 = vpop.f32.mrb[0].mxu0
        %v1878 = vpop.f32.mrb[0].mxu0
        %v1879 = vadd.f32 0.0, %v1878
        %v1880 = vpop.f32.mrb[0].mxu0
        %1881 = vmatprep.mubr.bf16.mxu0 0
        %1882 = vmatmul.mubr.bf16.gmra.mrb[0].mxu0 %v1729
        %v1883 = vpop.f32.mrb[0].mxu0
        %v1884 = vadd.f32 0.0, %v1883
        %v1885 = vpop.f32.mrb[0].mxu0
        %v1886 = vpop.f32.mrb[0].mxu0
        %v1887 = vadd.f32 0.0, %v1886
        %v1888 = vpop.f32.mrb[0].mxu0
        %1889 = vmatprep.mubr.bf16.mxu0 0
        %1890 = vmatmul.mubr.bf16.gmra.mrb[0].mxu0 %v1732
        %v1891 = vpop.f32.mrb[0].mxu0
        %v1892 = vadd.f32 0.0, %v1891
        %v1893 = vpop.f32.mrb[0].mxu0
        %v1894 = vpop.f32.mrb[0].mxu0
        %v1895 = vadd.f32 0.0, %v1894
        %v1896 = vpop.f32.mrb[0].mxu0
        %1897 = vdwg.mxu0
        %v1898 = vld [vmem:[#allocation4] sm:$0xff]
        %v1899 = vld [vmem:[#allocation4 + $0x8] sm:$0xff]
        %v1900 = vld [vmem:[#allocation4 + $0x10] sm:$0xff]
        %v1901 = vld [vmem:[#allocation4 + $0x18] sm:$0xff]
        %v1902 = vld [vmem:[#allocation4 + $0x20] sm:$0xff]
        %v1903 = vld [vmem:[#allocation4 + $0x28] sm:$0xff]
        %v1904 = vld [vmem:[#allocation4 + $0x30] sm:$0xff]
        %v1905 = vld [vmem:[#allocation4 + $0x38] sm:$0xff]
        %v1906 = vld [vmem:[#allocation4 + $0x40] sm:$0xff]
        %v1907 = vld [vmem:[#allocation4 + $0x48] sm:$0xff]
        %v1908 = vld [vmem:[#allocation4 + $0x50] sm:$0xff]
        %v1909 = vld [vmem:[#allocation4 + $0x58] sm:$0xff]
        %v1910 = vld [vmem:[#allocation4 + $0x60] sm:$0xff]
        %v1911 = vld [vmem:[#allocation4 + $0x68] sm:$0xff]
        %v1912 = vld [vmem:[#allocation4 + $0x70] sm:$0xff]
        %v1913 = vld [vmem:[#allocation4 + $0x78] sm:$0xff]
        %v1914 = vld [vmem:[#allocation4 + $0x80] sm:$0xff]
        %v1915 = vld [vmem:[#allocation4 + $0x88] sm:$0xff]
        %v1916 = vld [vmem:[#allocation4 + $0x90] sm:$0xff]
        %v1917 = vld [vmem:[#allocation4 + $0x98] sm:$0xff]
        %v1918 = vld [vmem:[#allocation4 + $0xa0] sm:$0xff]
        %v1919 = vld [vmem:[#allocation4 + $0xa8] sm:$0xff]
        %v1920 = vld [vmem:[#allocation4 + $0xb0] sm:$0xff]
        %v1921 = vld [vmem:[#allocation4 + $0xb8] sm:$0xff]
        %v1922 = vld [vmem:[#allocation4 + $0xc0] sm:$0xff]
        %v1923 = vld [vmem:[#allocation4 + $0xc8] sm:$0xff]
        %v1924 = vld [vmem:[#allocation4 + $0xd0] sm:$0xff]
        %v1925 = vld [vmem:[#allocation4 + $0xd8] sm:$0xff]
        %v1926 = vld [vmem:[#allocation4 + $0xe0] sm:$0xff]
        %v1927 = vld [vmem:[#allocation4 + $0xe8] sm:$0xff]
        %v1928 = vld [vmem:[#allocation4 + $0xf0] sm:$0xff]
        %v1929 = vld [vmem:[#allocation4 + $0xf8] sm:$0xff]
        %v1930 = vadd.f32 %v1898, %v1772
        %v1931 = vadd.f32 %v1899, %v1775
        %v1932 = vadd.f32 %v1900, %v1780
        %v1933 = vadd.f32 %v1901, %v1783
        %v1934 = vadd.f32 %v1902, %v1788
        %v1935 = vadd.f32 %v1903, %v1791
        %v1936 = vadd.f32 %v1904, %v1796
        %v1937 = vadd.f32 %v1905, %v1799
        %v1938 = vadd.f32 %v1906, %v1804
        %v1939 = vadd.f32 %v1907, %v1807
        %v1940 = vadd.f32 %v1908, %v1812
        %v1941 = vadd.f32 %v1909, %v1815
        %v1942 = vadd.f32 %v1910, %v1820
        %v1943 = vadd.f32 %v1911, %v1823
        %v1944 = vadd.f32 %v1912, %v1828
        %v1945 = vadd.f32 %v1913, %v1831
        %v1946 = vadd.f32 %v1914, %v1836
        %v1947 = vadd.f32 %v1915, %v1839
        %v1948 = vadd.f32 %v1916, %v1844
        %v1949 = vadd.f32 %v1917, %v1847
        %v1950 = vadd.f32 %v1918, %v1852
        %v1951 = vadd.f32 %v1919, %v1855
        %v1952 = vadd.f32 %v1920, %v1860
        %v1953 = vadd.f32 %v1921, %v1863
        %v1954 = vadd.f32 %v1922, %v1868
        %v1955 = vadd.f32 %v1923, %v1871
        %v1956 = vadd.f32 %v1924, %v1876
        %v1957 = vadd.f32 %v1925, %v1879
        %v1958 = vadd.f32 %v1926, %v1884
        %v1959 = vadd.f32 %v1927, %v1887
        %v1960 = vadd.f32 %v1928, %v1892
        %v1961 = vadd.f32 %v1929, %v1895
        %1962 = vst.msk [vmem:[#allocation4] sm:$0xff] %vm1232, %v1930
        %1963 = vst.msk [vmem:[#allocation4 + $0x8] sm:$0xff] %vm1232, %v1931
        %1964 = vst.msk [vmem:[#allocation4 + $0x10] sm:$0xff] %vm1232, %v1932
        %1965 = vst.msk [vmem:[#allocation4 + $0x18] sm:$0xff] %vm1232, %v1933
        %1966 = vst.msk [vmem:[#allocation4 + $0x20] sm:$0xff] %vm1232, %v1934
        %1967 = vst.msk [vmem:[#allocation4 + $0x28] sm:$0xff] %vm1232, %v1935
        %1968 = vst.msk [vmem:[#allocation4 + $0x30] sm:$0xff] %vm1232, %v1936
        %1969 = vst.msk [vmem:[#allocation4 + $0x38] sm:$0xff] %vm1232, %v1937
        %1970 = vst.msk [vmem:[#allocation4 + $0x40] sm:$0xff] %vm1232, %v1938
        %1971 = vst.msk [vmem:[#allocation4 + $0x48] sm:$0xff] %vm1232, %v1939
        %1972 = vst.msk [vmem:[#allocation4 + $0x50] sm:$0xff] %vm1232, %v1940
        %1973 = vst.msk [vmem:[#allocation4 + $0x58] sm:$0xff] %vm1232, %v1941
        %1974 = vst.msk [vmem:[#allocation4 + $0x60] sm:$0xff] %vm1232, %v1942
        %1975 = vst.msk [vmem:[#allocation4 + $0x68] sm:$0xff] %vm1232, %v1943
        %1976 = vst.msk [vmem:[#allocation4 + $0x70] sm:$0xff] %vm1232, %v1944
        %1977 = vst.msk [vmem:[#allocation4 + $0x78] sm:$0xff] %vm1232, %v1945
        %1978 = vst.msk [vmem:[#allocation4 + $0x80] sm:$0xff] %vm1232, %v1946
        %1979 = vst.msk [vmem:[#allocation4 + $0x88] sm:$0xff] %vm1232, %v1947
        %1980 = vst.msk [vmem:[#allocation4 + $0x90] sm:$0xff] %vm1232, %v1948
        %1981 = vst.msk [vmem:[#allocation4 + $0x98] sm:$0xff] %vm1232, %v1949
        %1982 = vst.msk [vmem:[#allocation4 + $0xa0] sm:$0xff] %vm1232, %v1950
        %1983 = vst.msk [vmem:[#allocation4 + $0xa8] sm:$0xff] %vm1232, %v1951
        %1984 = vst.msk [vmem:[#allocation4 + $0xb0] sm:$0xff] %vm1232, %v1952
        %1985 = vst.msk [vmem:[#allocation4 + $0xb8] sm:$0xff] %vm1232, %v1953
        %1986 = vst.msk [vmem:[#allocation4 + $0xc0] sm:$0xff] %vm1232, %v1954
        %1987 = vst.msk [vmem:[#allocation4 + $0xc8] sm:$0xff] %vm1232, %v1955
        %1988 = vst.msk [vmem:[#allocation4 + $0xd0] sm:$0xff] %vm1232, %v1956
        %1989 = vst.msk [vmem:[#allocation4 + $0xd8] sm:$0xff] %vm1232, %v1957
        %1990 = vst.msk [vmem:[#allocation4 + $0xe0] sm:$0xff] %vm1232, %v1958
        %1991 = vst.msk [vmem:[#allocation4 + $0xe8] sm:$0xff] %vm1232, %v1959
        %1992 = vst.msk [vmem:[#allocation4 + $0xf0] sm:$0xff] %vm1232, %v1960
        %1993 = vst.msk [vmem:[#allocation4 + $0xf8] sm:$0xff] %vm1232, %v1961
        %v1994 = vld [vmem:[#allocation4] sm:$0xff]
        %v1995 = vld [vmem:[#allocation4 + $0x8] sm:$0xff]
        %v1996 = vld [vmem:[#allocation4 + $0x10] sm:$0xff]
        %v1997 = vld [vmem:[#allocation4 + $0x18] sm:$0xff]
        %v1998 = vld [vmem:[#allocation4 + $0x20] sm:$0xff]
        %v1999 = vld [vmem:[#allocation4 + $0x28] sm:$0xff]
        %v2000 = vld [vmem:[#allocation4 + $0x30] sm:$0xff]
        %v2001 = vld [vmem:[#allocation4 + $0x38] sm:$0xff]
        %v2002 = vld [vmem:[#allocation4 + $0x40] sm:$0xff]
        %v2003 = vld [vmem:[#allocation4 + $0x48] sm:$0xff]
        %v2004 = vld [vmem:[#allocation4 + $0x50] sm:$0xff]
        %v2005 = vld [vmem:[#allocation4 + $0x58] sm:$0xff]
        %v2006 = vld [vmem:[#allocation4 + $0x60] sm:$0xff]
        %v2007 = vld [vmem:[#allocation4 + $0x68] sm:$0xff]
        %v2008 = vld [vmem:[#allocation4 + $0x70] sm:$0xff]
        %v2009 = vld [vmem:[#allocation4 + $0x78] sm:$0xff]
        %v2010 = vld [vmem:[#allocation4 + $0x80] sm:$0xff]
        %v2011 = vld [vmem:[#allocation4 + $0x88] sm:$0xff]
        %v2012 = vld [vmem:[#allocation4 + $0x90] sm:$0xff]
        %v2013 = vld [vmem:[#allocation4 + $0x98] sm:$0xff]
        %v2014 = vld [vmem:[#allocation4 + $0xa0] sm:$0xff]
        %v2015 = vld [vmem:[#allocation4 + $0xa8] sm:$0xff]
        %v2016 = vld [vmem:[#allocation4 + $0xb0] sm:$0xff]
        %v2017 = vld [vmem:[#allocation4 + $0xb8] sm:$0xff]
        %v2018 = vld [vmem:[#allocation4 + $0xc0] sm:$0xff]
        %v2019 = vld [vmem:[#allocation4 + $0xc8] sm:$0xff]
        %v2020 = vld [vmem:[#allocation4 + $0xd0] sm:$0xff]
        %v2021 = vld [vmem:[#allocation4 + $0xd8] sm:$0xff]
        %v2022 = vld [vmem:[#allocation4 + $0xe0] sm:$0xff]
        %v2023 = vld [vmem:[#allocation4 + $0xe8] sm:$0xff]
        %v2024 = vld [vmem:[#allocation4 + $0xf0] sm:$0xff]
        %v2025 = vld [vmem:[#allocation4 + $0xf8] sm:$0xff]
        %v2026 = vld [vmem:[#allocation13] sm:$0x1]
        %v2028 = vlaneseq
        %v2029 = vshrl.u32 %v2028, 7
        %v2030 = vsub.s32 0, %v2029
        %v2031 = vrot.slane %v2026, %v2030
        %v2033 = vmul.f32 %v1994, %v2031
        %v2034 = vmul.f32 %v1995, %v2031
        %v2035 = vmul.f32 %v1996, %v2031
        %v2036 = vmul.f32 %v1997, %v2031
        %v2037 = vmul.f32 %v1998, %v2031
        %v2038 = vmul.f32 %v1999, %v2031
        %v2039 = vmul.f32 %v2000, %v2031
        %v2040 = vmul.f32 %v2001, %v2031
        %v2041 = vmul.f32 %v2002, %v2031
        %v2042 = vmul.f32 %v2003, %v2031
        %v2043 = vmul.f32 %v2004, %v2031
        %v2044 = vmul.f32 %v2005, %v2031
        %v2045 = vmul.f32 %v2006, %v2031
        %v2046 = vmul.f32 %v2007, %v2031
        %v2047 = vmul.f32 %v2008, %v2031
        %v2048 = vmul.f32 %v2009, %v2031
        %v2049 = vmul.f32 %v2010, %v2031
        %v2050 = vmul.f32 %v2011, %v2031
        %v2051 = vmul.f32 %v2012, %v2031
        %v2052 = vmul.f32 %v2013, %v2031
        %v2053 = vmul.f32 %v2014, %v2031
        %v2054 = vmul.f32 %v2015, %v2031
        %v2055 = vmul.f32 %v2016, %v2031
        %v2056 = vmul.f32 %v2017, %v2031
        %v2057 = vmul.f32 %v2018, %v2031
        %v2058 = vmul.f32 %v2019, %v2031
        %v2059 = vmul.f32 %v2020, %v2031
        %v2060 = vmul.f32 %v2021, %v2031
        %v2061 = vmul.f32 %v2022, %v2031
        %v2062 = vmul.f32 %v2023, %v2031
        %v2063 = vmul.f32 %v2024, %v2031
        %v2064 = vmul.f32 %v2025, %v2031
        %v2065 = vld [vmem:[#allocation14] sm:$0x1]
        %v2067 = vlaneseq
        %v2068 = vshrl.u32 %v2067, 7
        %v2069 = vsub.s32 0, %v2068
        %v2070 = vrot.slane %v2065, %v2069
        %v2072 = vadd.f32 %v2033, %v2070
        %v2073 = vadd.f32 %v2034, %v2070
        %v2074 = vadd.f32 %v2035, %v2070
        %v2075 = vadd.f32 %v2036, %v2070
        %v2076 = vadd.f32 %v2037, %v2070
        %v2077 = vadd.f32 %v2038, %v2070
        %v2078 = vadd.f32 %v2039, %v2070
        %v2079 = vadd.f32 %v2040, %v2070
        %v2080 = vadd.f32 %v2041, %v2070
        %v2081 = vadd.f32 %v2042, %v2070
        %v2082 = vadd.f32 %v2043, %v2070
        %v2083 = vadd.f32 %v2044, %v2070
        %v2084 = vadd.f32 %v2045, %v2070
        %v2085 = vadd.f32 %v2046, %v2070
        %v2086 = vadd.f32 %v2047, %v2070
        %v2087 = vadd.f32 %v2048, %v2070
        %v2088 = vadd.f32 %v2049, %v2070
        %v2089 = vadd.f32 %v2050, %v2070
        %v2090 = vadd.f32 %v2051, %v2070
        %v2091 = vadd.f32 %v2052, %v2070
        %v2092 = vadd.f32 %v2053, %v2070
        %v2093 = vadd.f32 %v2054, %v2070
        %v2094 = vadd.f32 %v2055, %v2070
        %v2095 = vadd.f32 %v2056, %v2070
        %v2096 = vadd.f32 %v2057, %v2070
        %v2097 = vadd.f32 %v2058, %v2070
        %v2098 = vadd.f32 %v2059, %v2070
        %v2099 = vadd.f32 %v2060, %v2070
        %v2100 = vadd.f32 %v2061, %v2070
        %v2101 = vadd.f32 %v2062, %v2070
        %v2102 = vadd.f32 %v2063, %v2070
        %v2103 = vadd.f32 %v2064, %v2070
        %v2104 = vmax.f32 %v2072, 0.0
        %v2105 = vmax.f32 %v2073, 0.0
        %v2106 = vmax.f32 %v2074, 0.0
        %v2107 = vmax.f32 %v2075, 0.0
        %v2108 = vmax.f32 %v2076, 0.0
        %v2109 = vmax.f32 %v2077, 0.0
        %v2110 = vmax.f32 %v2078, 0.0
        %v2111 = vmax.f32 %v2079, 0.0
        %v2112 = vmax.f32 %v2080, 0.0
        %v2113 = vmax.f32 %v2081, 0.0
        %v2114 = vmax.f32 %v2082, 0.0
        %v2115 = vmax.f32 %v2083, 0.0
        %v2116 = vmax.f32 %v2084, 0.0
        %v2117 = vmax.f32 %v2085, 0.0
        %v2118 = vmax.f32 %v2086, 0.0
        %v2119 = vmax.f32 %v2087, 0.0
        %v2120 = vmax.f32 %v2088, 0.0
        %v2121 = vmax.f32 %v2089, 0.0
        %v2122 = vmax.f32 %v2090, 0.0
        %v2123 = vmax.f32 %v2091, 0.0
        %v2124 = vmax.f32 %v2092, 0.0
        %v2125 = vmax.f32 %v2093, 0.0
        %v2126 = vmax.f32 %v2094, 0.0
        %v2127 = vmax.f32 %v2095, 0.0
        %v2128 = vmax.f32 %v2096, 0.0
        %v2129 = vmax.f32 %v2097, 0.0
        %v2130 = vmax.f32 %v2098, 0.0
        %v2131 = vmax.f32 %v2099, 0.0
        %v2132 = vmax.f32 %v2100, 0.0
        %v2133 = vmax.f32 %v2101, 0.0
        %v2134 = vmax.f32 %v2102, 0.0
        %v2135 = vmax.f32 %v2103, 0.0
        %2168 = vrot.lane.b32.xlu0 %v2104, 8
        %v2169 = vpop.permute.xlu0 %2168
        %2170 = vrot.lane.b32.xlu0 %v2105, 8
        %v2171 = vpop.permute.xlu0 %2170
        %2172 = vrot.lane.b32.xlu0 %v2106, 8
        %v2173 = vpop.permute.xlu0 %2172
        %2174 = vrot.lane.b32.xlu0 %v2107, 8
        %v2175 = vpop.permute.xlu0 %2174
        %2176 = vrot.lane.b32.xlu0 %v2108, 8
        %v2177 = vpop.permute.xlu0 %2176
        %2178 = vrot.lane.b32.xlu0 %v2109, 8
        %v2179 = vpop.permute.xlu0 %2178
        %2180 = vrot.lane.b32.xlu0 %v2110, 8
        %v2181 = vpop.permute.xlu0 %2180
        %2182 = vrot.lane.b32.xlu0 %v2111, 8
        %v2183 = vpop.permute.xlu0 %2182
        %2184 = vrot.lane.b32.xlu0 %v2112, 8
        %v2185 = vpop.permute.xlu0 %2184
        %2186 = vrot.lane.b32.xlu0 %v2113, 8
        %v2187 = vpop.permute.xlu0 %2186
        %2188 = vrot.lane.b32.xlu0 %v2114, 8
        %v2189 = vpop.permute.xlu0 %2188
        %2190 = vrot.lane.b32.xlu0 %v2115, 8
        %v2191 = vpop.permute.xlu0 %2190
        %2192 = vrot.lane.b32.xlu0 %v2116, 8
        %v2193 = vpop.permute.xlu0 %2192
        %2194 = vrot.lane.b32.xlu0 %v2117, 8
        %v2195 = vpop.permute.xlu0 %2194
        %2196 = vrot.lane.b32.xlu0 %v2118, 8
        %v2197 = vpop.permute.xlu0 %2196
        %2198 = vrot.lane.b32.xlu0 %v2119, 8
        %v2199 = vpop.permute.xlu0 %2198
        %2200 = vrot.lane.b32.xlu0 %v2120, 8
        %v2201 = vpop.permute.xlu0 %2200
        %2202 = vrot.lane.b32.xlu0 %v2121, 8
        %v2203 = vpop.permute.xlu0 %2202
        %2204 = vrot.lane.b32.xlu0 %v2122, 8
        %v2205 = vpop.permute.xlu0 %2204
        %2206 = vrot.lane.b32.xlu0 %v2123, 8
        %v2207 = vpop.permute.xlu0 %2206
        %2208 = vrot.lane.b32.xlu0 %v2124, 8
        %v2209 = vpop.permute.xlu0 %2208
        %2210 = vrot.lane.b32.xlu0 %v2125, 8
        %v2211 = vpop.permute.xlu0 %2210
        %2212 = vrot.lane.b32.xlu0 %v2126, 8
        %v2213 = vpop.permute.xlu0 %2212
        %2214 = vrot.lane.b32.xlu0 %v2127, 8
        %v2215 = vpop.permute.xlu0 %2214
        %2216 = vrot.lane.b32.xlu0 %v2128, 8
        %v2217 = vpop.permute.xlu0 %2216
        %2218 = vrot.lane.b32.xlu0 %v2129, 8
        %v2219 = vpop.permute.xlu0 %2218
        %2220 = vrot.lane.b32.xlu0 %v2130, 8
        %v2221 = vpop.permute.xlu0 %2220
        %2222 = vrot.lane.b32.xlu0 %v2131, 8
        %v2223 = vpop.permute.xlu0 %2222
        %2224 = vrot.lane.b32.xlu0 %v2132, 8
        %v2225 = vpop.permute.xlu0 %2224
        %2226 = vrot.lane.b32.xlu0 %v2133, 8
        %v2227 = vpop.permute.xlu0 %2226
        %2228 = vrot.lane.b32.xlu0 %v2134, 8
        %v2229 = vpop.permute.xlu0 %2228
        %2230 = vrot.lane.b32.xlu0 %v2135, 8
        %v2231 = vpop.permute.xlu0 %2230
        %s2264 = scalar_lea.vmem [#allocation3], 16
        %vm2265 = vcmask 130112
        %2266 = vst.msk [vmem:[%s2264] sm:$0xff] %vm2265, %v2169
        %2267 = vst.msk [vmem:[%s2264 + $0x8] sm:$0xff] %vm2265, %v2171
        %2268 = vst.msk [vmem:[%s2264 + $0x10] sm:$0xff] %vm2265, %v2173
        %2269 = vst.msk [vmem:[%s2264 + $0x18] sm:$0xff] %vm2265, %v2175
        %2270 = vst.msk [vmem:[%s2264 + $0x20] sm:$0xff] %vm2265, %v2177
        %2271 = vst.msk [vmem:[%s2264 + $0x28] sm:$0xff] %vm2265, %v2179
        %2272 = vst.msk [vmem:[%s2264 + $0x30] sm:$0xff] %vm2265, %v2181
        %2273 = vst.msk [vmem:[%s2264 + $0x38] sm:$0xff] %vm2265, %v2183
        %2274 = vst.msk [vmem:[%s2264 + $0x40] sm:$0xff] %vm2265, %v2185
        %2275 = vst.msk [vmem:[%s2264 + $0x48] sm:$0xff] %vm2265, %v2187
        %2276 = vst.msk [vmem:[%s2264 + $0x50] sm:$0xff] %vm2265, %v2189
        %2277 = vst.msk [vmem:[%s2264 + $0x58] sm:$0xff] %vm2265, %v2191
        %2278 = vst.msk [vmem:[%s2264 + $0x60] sm:$0xff] %vm2265, %v2193
        %2279 = vst.msk [vmem:[%s2264 + $0x68] sm:$0xff] %vm2265, %v2195
        %2280 = vst.msk [vmem:[%s2264 + $0x70] sm:$0xff] %vm2265, %v2197
        %2281 = vst.msk [vmem:[%s2264 + $0x78] sm:$0xff] %vm2265, %v2199
        %2282 = vst.msk [vmem:[%s2264 + $0x80] sm:$0xff] %vm2265, %v2201
        %2283 = vst.msk [vmem:[%s2264 + $0x88] sm:$0xff] %vm2265, %v2203
        %2284 = vst.msk [vmem:[%s2264 + $0x90] sm:$0xff] %vm2265, %v2205
        %2285 = vst.msk [vmem:[%s2264 + $0x98] sm:$0xff] %vm2265, %v2207
        %2286 = vst.msk [vmem:[%s2264 + $0xa0] sm:$0xff] %vm2265, %v2209
        %2287 = vst.msk [vmem:[%s2264 + $0xa8] sm:$0xff] %vm2265, %v2211
        %2288 = vst.msk [vmem:[%s2264 + $0xb0] sm:$0xff] %vm2265, %v2213
        %2289 = vst.msk [vmem:[%s2264 + $0xb8] sm:$0xff] %vm2265, %v2215
        %2290 = vst.msk [vmem:[%s2264 + $0xc0] sm:$0xff] %vm2265, %v2217
        %2291 = vst.msk [vmem:[%s2264 + $0xc8] sm:$0xff] %vm2265, %v2219
        %2292 = vst.msk [vmem:[%s2264 + $0xd0] sm:$0xff] %vm2265, %v2221
        %2293 = vst.msk [vmem:[%s2264 + $0xd8] sm:$0xff] %vm2265, %v2223
        %2294 = vst.msk [vmem:[%s2264 + $0xe0] sm:$0xff] %vm2265, %v2225
        %2295 = vst.msk [vmem:[%s2264 + $0xe8] sm:$0xff] %vm2265, %v2227
        %2296 = vst.msk [vmem:[%s2264 + $0xf0] sm:$0xff] %vm2265, %v2229
        %2297 = vst.msk [vmem:[%s2264 + $0xf8] sm:$0xff] %vm2265, %v2231
        %2298 = vst.msk [vmem:[%s2264 + $0x1] sm:$0xff] %vm1232, %v2104
        %vm2299 = vcmask 63488
        %2300 = vst.msk [vmem:[%s2264 + $0x9] sm:$0x7f] %vm2299, %v2105
        %2301 = vst.msk [vmem:[%s2264 + $0x11] sm:$0xff] %vm1232, %v2106
        %2302 = vst.msk [vmem:[%s2264 + $0x19] sm:$0x7f] %vm2299, %v2107
        %2303 = vst.msk [vmem:[%s2264 + $0x21] sm:$0xff] %vm1232, %v2108
        %2304 = vst.msk [vmem:[%s2264 + $0x29] sm:$0x7f] %vm2299, %v2109
        %2305 = vst.msk [vmem:[%s2264 + $0x31] sm:$0xff] %vm1232, %v2110
        %2306 = vst.msk [vmem:[%s2264 + $0x39] sm:$0x7f] %vm2299, %v2111
        %2307 = vst.msk [vmem:[%s2264 + $0x41] sm:$0xff] %vm1232, %v2112
        %2308 = vst.msk [vmem:[%s2264 + $0x49] sm:$0x7f] %vm2299, %v2113
        %2309 = vst.msk [vmem:[%s2264 + $0x51] sm:$0xff] %vm1232, %v2114
        %2310 = vst.msk [vmem:[%s2264 + $0x59] sm:$0x7f] %vm2299, %v2115
        %2311 = vst.msk [vmem:[%s2264 + $0x61] sm:$0xff] %vm1232, %v2116
        %2312 = vst.msk [vmem:[%s2264 + $0x69] sm:$0x7f] %vm2299, %v2117
        %2313 = vst.msk [vmem:[%s2264 + $0x71] sm:$0xff] %vm1232, %v2118
        %2314 = vst.msk [vmem:[%s2264 + $0x79] sm:$0x7f] %vm2299, %v2119
        %2315 = vst.msk [vmem:[%s2264 + $0x81] sm:$0xff] %vm1232, %v2120
        %2316 = vst.msk [vmem:[%s2264 + $0x89] sm:$0x7f] %vm2299, %v2121
        %2317 = vst.msk [vmem:[%s2264 + $0x91] sm:$0xff] %vm1232, %v2122
        %2318 = vst.msk [vmem:[%s2264 + $0x99] sm:$0x7f] %vm2299, %v2123
        %2319 = vst.msk [vmem:[%s2264 + $0xa1] sm:$0xff] %vm1232, %v2124
        %2320 = vst.msk [vmem:[%s2264 + $0xa9] sm:$0x7f] %vm2299, %v2125
        %2321 = vst.msk [vmem:[%s2264 + $0xb1] sm:$0xff] %vm1232, %v2126
        %2322 = vst.msk [vmem:[%s2264 + $0xb9] sm:$0x7f] %vm2299, %v2127
        %2323 = vst.msk [vmem:[%s2264 + $0xc1] sm:$0xff] %vm1232, %v2128
        %2324 = vst.msk [vmem:[%s2264 + $0xc9] sm:$0x7f] %vm2299, %v2129
        %2325 = vst.msk [vmem:[%s2264 + $0xd1] sm:$0xff] %vm1232, %v2130
        %2326 = vst.msk [vmem:[%s2264 + $0xd9] sm:$0x7f] %vm2299, %v2131
        %2327 = vst.msk [vmem:[%s2264 + $0xe1] sm:$0xff] %vm1232, %v2132
        %2328 = vst.msk [vmem:[%s2264 + $0xe9] sm:$0x7f] %vm2299, %v2133
        %2329 = vst.msk [vmem:[%s2264 + $0xf1] sm:$0xff] %vm1232, %v2134
        %2330 = vst.msk [vmem:[%s2264 + $0xf9] sm:$0x7f] %vm2299, %v2135
        %vm2331 = vcmask 57344
        %2332 = vst.msk [vmem:[%s2264] sm:$0x1] %vm2331, 0.0
        %2333 = vst.msk [vmem:[%s2264 + $0x10] sm:$0x1] %vm2331, 0.0
        %2334 = vst.msk [vmem:[%s2264 + $0x20] sm:$0x1] %vm2331, 0.0
        %2335 = vst.msk [vmem:[%s2264 + $0x30] sm:$0x1] %vm2331, 0.0
        %2336 = vst.msk [vmem:[%s2264 + $0x40] sm:$0x1] %vm2331, 0.0
        %2337 = vst.msk [vmem:[%s2264 + $0x50] sm:$0x1] %vm2331, 0.0
        %2338 = vst.msk [vmem:[%s2264 + $0x60] sm:$0x1] %vm2331, 0.0
        %2339 = vst.msk [vmem:[%s2264 + $0x70] sm:$0x1] %vm2331, 0.0
        %2340 = vst.msk [vmem:[%s2264 + $0x80] sm:$0x1] %vm2331, 0.0
        %2341 = vst.msk [vmem:[%s2264 + $0x90] sm:$0x1] %vm2331, 0.0
        %2342 = vst.msk [vmem:[%s2264 + $0xa0] sm:$0x1] %vm2331, 0.0
        %2343 = vst.msk [vmem:[%s2264 + $0xb0] sm:$0x1] %vm2331, 0.0
        %2344 = vst.msk [vmem:[%s2264 + $0xc0] sm:$0x1] %vm2331, 0.0
        %2345 = vst.msk [vmem:[%s2264 + $0xd0] sm:$0x1] %vm2331, 0.0
        %2346 = vst.msk [vmem:[%s2264 + $0xe0] sm:$0x1] %vm2331, 0.0
        %2347 = vst.msk [vmem:[%s2264 + $0xf0] sm:$0x1] %vm2331, 0.0
        %2348 = vrot.lane.b32.xlu0 %v2104, 16
        %v2349 = vpop.permute.xlu0 %2348
        %2350 = vrot.lane.b32.xlu0 %v2105, 16
        %v2351 = vpop.permute.xlu0 %2350
        %2352 = vrot.lane.b32.xlu0 %v2106, 16
        %v2353 = vpop.permute.xlu0 %2352
        %2354 = vrot.lane.b32.xlu0 %v2107, 16
        %v2355 = vpop.permute.xlu0 %2354
        %2356 = vrot.lane.b32.xlu0 %v2108, 16
        %v2357 = vpop.permute.xlu0 %2356
        %2358 = vrot.lane.b32.xlu0 %v2109, 16
        %v2359 = vpop.permute.xlu0 %2358
        %2360 = vrot.lane.b32.xlu0 %v2110, 16
        %v2361 = vpop.permute.xlu0 %2360
        %2362 = vrot.lane.b32.xlu0 %v2111, 16
        %v2363 = vpop.permute.xlu0 %2362
        %2364 = vrot.lane.b32.xlu0 %v2112, 16
        %v2365 = vpop.permute.xlu0 %2364
        %2366 = vrot.lane.b32.xlu0 %v2113, 16
        %v2367 = vpop.permute.xlu0 %2366
        %2368 = vrot.lane.b32.xlu0 %v2114, 16
        %v2369 = vpop.permute.xlu0 %2368
        %2370 = vrot.lane.b32.xlu0 %v2115, 16
        %v2371 = vpop.permute.xlu0 %2370
        %2372 = vrot.lane.b32.xlu0 %v2116, 16
        %v2373 = vpop.permute.xlu0 %2372
        %2374 = vrot.lane.b32.xlu0 %v2117, 16
        %v2375 = vpop.permute.xlu0 %2374
        %2376 = vrot.lane.b32.xlu0 %v2118, 16
        %v2377 = vpop.permute.xlu0 %2376
        %2378 = vrot.lane.b32.xlu0 %v2119, 16
        %v2379 = vpop.permute.xlu0 %2378
        %2380 = vrot.lane.b32.xlu0 %v2120, 16
        %v2381 = vpop.permute.xlu0 %2380
        %2382 = vrot.lane.b32.xlu0 %v2121, 16
        %v2383 = vpop.permute.xlu0 %2382
        %2384 = vrot.lane.b32.xlu0 %v2122, 16
        %v2385 = vpop.permute.xlu0 %2384
        %2386 = vrot.lane.b32.xlu0 %v2123, 16
        %v2387 = vpop.permute.xlu0 %2386
        %2388 = vrot.lane.b32.xlu0 %v2124, 16
        %v2389 = vpop.permute.xlu0 %2388
        %2390 = vrot.lane.b32.xlu0 %v2125, 16
        %v2391 = vpop.permute.xlu0 %2390
        %2392 = vrot.lane.b32.xlu0 %v2126, 16
        %v2393 = vpop.permute.xlu0 %2392
        %2394 = vrot.lane.b32.xlu0 %v2127, 16
        %v2395 = vpop.permute.xlu0 %2394
        %2396 = vrot.lane.b32.xlu0 %v2128, 16
        %v2397 = vpop.permute.xlu0 %2396
        %2398 = vrot.lane.b32.xlu0 %v2129, 16
        %v2399 = vpop.permute.xlu0 %2398
        %2400 = vrot.lane.b32.xlu0 %v2130, 16
        %v2401 = vpop.permute.xlu0 %2400
        %2402 = vrot.lane.b32.xlu0 %v2131, 16
        %v2403 = vpop.permute.xlu0 %2402
        %2404 = vrot.lane.b32.xlu0 %v2132, 16
        %v2405 = vpop.permute.xlu0 %2404
        %2406 = vrot.lane.b32.xlu0 %v2133, 16
        %v2407 = vpop.permute.xlu0 %2406
        %2408 = vrot.lane.b32.xlu0 %v2134, 16
        %v2409 = vpop.permute.xlu0 %2408
        %2410 = vrot.lane.b32.xlu0 %v2135, 16
        %v2411 = vpop.permute.xlu0 %2410
        %vm2444 = vcmask 195713
        %2445 = vst.msk [vmem:[%s2264 - $0x1] sm:$0xfe] %vm2444, %v2349
        %vm2446 = vcmask 195712
        %2447 = vst.msk [vmem:[%s2264 + $0x7] sm:$0xff] %vm2446, %v2351
        %2448 = vst.msk [vmem:[%s2264 + $0xf] sm:$0xfe] %vm2444, %v2353
        %2449 = vst.msk [vmem:[%s2264 + $0x17] sm:$0xff] %vm2446, %v2355
        %2450 = vst.msk [vmem:[%s2264 + $0x1f] sm:$0xfe] %vm2444, %v2357
        %2451 = vst.msk [vmem:[%s2264 + $0x27] sm:$0xff] %vm2446, %v2359
        %2452 = vst.msk [vmem:[%s2264 + $0x2f] sm:$0xfe] %vm2444, %v2361
        %2453 = vst.msk [vmem:[%s2264 + $0x37] sm:$0xff] %vm2446, %v2363
        %2454 = vst.msk [vmem:[%s2264 + $0x3f] sm:$0xfe] %vm2444, %v2365
        %2455 = vst.msk [vmem:[%s2264 + $0x47] sm:$0xff] %vm2446, %v2367
        %2456 = vst.msk [vmem:[%s2264 + $0x4f] sm:$0xfe] %vm2444, %v2369
        %2457 = vst.msk [vmem:[%s2264 + $0x57] sm:$0xff] %vm2446, %v2371
        %2458 = vst.msk [vmem:[%s2264 + $0x5f] sm:$0xfe] %vm2444, %v2373
        %2459 = vst.msk [vmem:[%s2264 + $0x67] sm:$0xff] %vm2446, %v2375
        %2460 = vst.msk [vmem:[%s2264 + $0x6f] sm:$0xfe] %vm2444, %v2377
        %2461 = vst.msk [vmem:[%s2264 + $0x77] sm:$0xff] %vm2446, %v2379
        %2462 = vst.msk [vmem:[%s2264 + $0x7f] sm:$0xfe] %vm2444, %v2381
        %2463 = vst.msk [vmem:[%s2264 + $0x87] sm:$0xff] %vm2446, %v2383
        %2464 = vst.msk [vmem:[%s2264 + $0x8f] sm:$0xfe] %vm2444, %v2385
        %2465 = vst.msk [vmem:[%s2264 + $0x97] sm:$0xff] %vm2446, %v2387
        %2466 = vst.msk [vmem:[%s2264 + $0x9f] sm:$0xfe] %vm2444, %v2389
        %2467 = vst.msk [vmem:[%s2264 + $0xa7] sm:$0xff] %vm2446, %v2391
        %2468 = vst.msk [vmem:[%s2264 + $0xaf] sm:$0xfe] %vm2444, %v2393
        %2469 = vst.msk [vmem:[%s2264 + $0xb7] sm:$0xff] %vm2446, %v2395
        %2470 = vst.msk [vmem:[%s2264 + $0xbf] sm:$0xfe] %vm2444, %v2397
        %2471 = vst.msk [vmem:[%s2264 + $0xc7] sm:$0xff] %vm2446, %v2399
        %2472 = vst.msk [vmem:[%s2264 + $0xcf] sm:$0xfe] %vm2444, %v2401
        %2473 = vst.msk [vmem:[%s2264 + $0xd7] sm:$0xff] %vm2446, %v2403
        %2474 = vst.msk [vmem:[%s2264 + $0xdf] sm:$0xfe] %vm2444, %v2405
        %2475 = vst.msk [vmem:[%s2264 + $0xe7] sm:$0xff] %vm2446, %v2407
        %2476 = vst.msk [vmem:[%s2264 + $0xef] sm:$0xfe] %vm2444, %v2409
        %2477 = vst.msk [vmem:[%s2264 + $0xf7] sm:$0xff] %vm2446, %v2411
        %vm2478 = vcmask 188544
        %2479 = vst.msk [vmem:[%s2264 + $0xf] sm:$0x1] %vm2478, 0.0
        %2480 = vst.msk [vmem:[%s2264 + $0x1f] sm:$0x1] %vm2478, 0.0
        %2481 = vst.msk [vmem:[%s2264 + $0x2f] sm:$0x1] %vm2478, 0.0
        %2482 = vst.msk [vmem:[%s2264 + $0x3f] sm:$0x1] %vm2478, 0.0
        %2483 = vst.msk [vmem:[%s2264 + $0x4f] sm:$0x1] %vm2478, 0.0
        %2484 = vst.msk [vmem:[%s2264 + $0x5f] sm:$0x1] %vm2478, 0.0
        %2485 = vst.msk [vmem:[%s2264 + $0x6f] sm:$0x1] %vm2478, 0.0
        %2486 = vst.msk [vmem:[%s2264 + $0x7f] sm:$0x1] %vm2478, 0.0
        %2487 = vst.msk [vmem:[%s2264 + $0x8f] sm:$0x1] %vm2478, 0.0
        %2488 = vst.msk [vmem:[%s2264 + $0x9f] sm:$0x1] %vm2478, 0.0
        %2489 = vst.msk [vmem:[%s2264 + $0xaf] sm:$0x1] %vm2478, 0.0
        %2490 = vst.msk [vmem:[%s2264 + $0xbf] sm:$0x1] %vm2478, 0.0
        %2491 = vst.msk [vmem:[%s2264 + $0xcf] sm:$0x1] %vm2478, 0.0
        %2492 = vst.msk [vmem:[%s2264 + $0xdf] sm:$0x1] %vm2478, 0.0
        %2493 = vst.msk [vmem:[%s2264 + $0xef] sm:$0x1] %vm2478, 0.0
        %2494 = vst.msk [vmem:[%s2264 + $0xff] sm:$0x1] %vm2478, 0.0
        %vm2495 = vcmask 195584
        %2496 = vst.msk [vmem:[#allocation3] sm:$0xff] %vm2495, 0.0
        %2497 = vst.msk [vmem:[#allocation3 + $0x8] sm:$0xff] %vm2495, 0.0
        %s2498 = scalar_lea.vmem [#allocation3], 272
        %2499 = vst.msk [vmem:[%s2498] sm:$0xff] %vm2495, 0.0
        %2500 = vst.msk [vmem:[%s2498 + $0x8] sm:$0xff] %vm2495, 0.0
        %v2501 = vld [vmem:[#allocation3] sm:$0xff]
        %v2502 = vld [vmem:[#allocation3 + $0x8] sm:$0xff]
        %v2503 = vld [vmem:[#allocation3 + $0x10] sm:$0xff]
        %v2504 = vld [vmem:[#allocation3 + $0x18] sm:$0xff]
        %v2505 = vld [vmem:[#allocation3 + $0x20] sm:$0xff]
        %v2506 = vld [vmem:[#allocation3 + $0x28] sm:$0xff]
        %v2507 = vld [vmem:[#allocation3 + $0x30] sm:$0xff]
        %v2508 = vld [vmem:[#allocation3 + $0x38] sm:$0xff]
        %v2509 = vld [vmem:[#allocation3 + $0x40] sm:$0xff]
        %v2510 = vld [vmem:[#allocation3 + $0x48] sm:$0xff]
        %v2511 = vld [vmem:[#allocation3 + $0x50] sm:$0xff]
        %v2512 = vld [vmem:[#allocation3 + $0x58] sm:$0xff]
        %v2513 = vld [vmem:[#allocation3 + $0x60] sm:$0xff]
        %v2514 = vld [vmem:[#allocation3 + $0x68] sm:$0xff]
        %v2515 = vld [vmem:[#allocation3 + $0x70] sm:$0xff]
        %v2516 = vld [vmem:[#allocation3 + $0x78] sm:$0xff]
        %v2517 = vld [vmem:[#allocation3 + $0x80] sm:$0xff]
        %v2518 = vld [vmem:[#allocation3 + $0x88] sm:$0xff]
        %v2519 = vld [vmem:[#allocation3 + $0x90] sm:$0xff]
        %v2520 = vld [vmem:[#allocation3 + $0x98] sm:$0xff]
        %v2521 = vld [vmem:[#allocation3 + $0xa0] sm:$0xff]
        %v2522 = vld [vmem:[#allocation3 + $0xa8] sm:$0xff]
        %v2523 = vld [vmem:[#allocation3 + $0xb0] sm:$0xff]
        %v2524 = vld [vmem:[#allocation3 + $0xb8] sm:$0xff]
        %v2525 = vld [vmem:[#allocation3 + $0xc0] sm:$0xff]
        %v2526 = vld [vmem:[#allocation3 + $0xc8] sm:$0xff]
        %v2527 = vld [vmem:[#allocation3 + $0xd0] sm:$0xff]
        %v2528 = vld [vmem:[#allocation3 + $0xd8] sm:$0xff]
        %v2529 = vld [vmem:[#allocation3 + $0xe0] sm:$0xff]
        %v2530 = vld [vmem:[#allocation3 + $0xe8] sm:$0xff]
        %v2531 = vld [vmem:[#allocation3 + $0xf0] sm:$0xff]
        %v2532 = vld [vmem:[#allocation3 + $0xf8] sm:$0xff]
        %v2533 = vpack.c.bf16 %v2502, %v2501
        %v2534 = vpack.c.bf16 %v2504, %v2503
        %v2535 = vpack.c.bf16 %v2506, %v2505
        %v2536 = vpack.c.bf16 %v2508, %v2507
        %v2537 = vpack.c.bf16 %v2510, %v2509
        %v2538 = vpack.c.bf16 %v2512, %v2511
        %v2539 = vpack.c.bf16 %v2514, %v2513
        %v2540 = vpack.c.bf16 %v2516, %v2515
        %v2541 = vpack.c.bf16 %v2518, %v2517
        %v2542 = vpack.c.bf16 %v2520, %v2519
        %v2543 = vpack.c.bf16 %v2522, %v2521
        %v2544 = vpack.c.bf16 %v2524, %v2523
        %v2545 = vpack.c.bf16 %v2526, %v2525
        %v2546 = vpack.c.bf16 %v2528, %v2527
        %v2547 = vpack.c.bf16 %v2530, %v2529
        %v2548 = vpack.c.bf16 %v2532, %v2531
        %v2549 = vld [vmem:[#allocation16] sm:$0xf]
        %v2550 = vld [vmem:[#allocation16 + $0x4] sm:$0xf]
        %v2551 = vld [vmem:[#allocation16 + $0x8] sm:$0xf]
        %v2555 = vunpack.c.l.b16 %v2549
        %v2556 = vunpack.c.l.b16 %v2550
        %v2557 = vunpack.c.l.b16 %v2551
        %v2558 = vpack.c.b16 %v2556, %v2555
        %v2559 = vpack.c.b16 %v2557, %v2557
        %v2562 = vsel %vm2495, %v2533, 0
        %v2565 = vsel %vm2495, %v2534, 0
        %v2568 = vsel %vm2495, %v2535, 0
        %v2571 = vsel %vm2495, %v2536, 0
        %v2574 = vsel %vm2495, %v2537, 0
        %v2577 = vsel %vm2495, %v2538, 0
        %v2580 = vsel %vm2495, %v2539, 0
        %v2583 = vsel %vm2495, %v2540, 0
        %v2586 = vsel %vm2495, %v2541, 0
        %v2589 = vsel %vm2495, %v2542, 0
        %v2592 = vsel %vm2495, %v2543, 0
        %v2595 = vsel %vm2495, %v2544, 0
        %v2598 = vsel %vm2495, %v2545, 0
        %v2601 = vsel %vm2495, %v2546, 0
        %v2604 = vsel %vm2495, %v2547, 0
        %v2607 = vsel %vm2495, %v2548, 0
        %vm2609 = vcmask 1043456
        %v2611 = vsel %vm2609, %v2559, 0
        %2613 = vmatprep.subr.bf16.mxu0 0
        %2614 = vmatpush1.bf16.msra.mxu0 %v2558
        %2615 = vmatprep.subr.bf16.mxu0 0
        %2616 = vmatpush1.bf16.msra.mxu0 %v2611
        %2617 = vmatprep.subr.bf16.mxu0 0
        %2618 = vmatpush1.bf16.msra.mxu0 0
        %2619 = vmatprep.subr.bf16.mxu0 0
        %2620 = vmatpush1.bf16.msra.mxu0 0
        %2621 = vmatprep.subr.bf16.mxu0 0
        %2622 = vmatpush1.bf16.msra.mxu0 0
        %2623 = vmatprep.subr.bf16.mxu0 0
        %2624 = vmatpush1.bf16.msra.mxu0 0
        %2625 = vmatprep.subr.bf16.mxu0 0
        %2626 = vmatpush1.bf16.msra.mxu0 0
        %2627 = vmatprep.subr.bf16.mxu0 0
        %2628 = vmatpush1.bf16.msra.mxu0 0
        %2629 = vmatprep.subr.bf16.mxu0 0
        %2630 = vmatpush1.bf16.msra.mxu0 0
        %2631 = vmatprep.subr.bf16.mxu0 0
        %2632 = vmatpush1.bf16.msra.mxu0 0
        %2633 = vmatprep.subr.bf16.mxu0 0
        %2634 = vmatpush1.bf16.msra.mxu0 0
        %2635 = vmatprep.subr.bf16.mxu0 0
        %2636 = vmatpush1.bf16.msra.mxu0 0
        %2637 = vmatprep.subr.bf16.mxu0 0
        %2638 = vmatpush1.bf16.msra.mxu0 0
        %2639 = vmatprep.subr.bf16.mxu0 0
        %2640 = vmatpush1.bf16.msra.mxu0 0
        %2641 = vmatprep.subr.bf16.mxu0 0
        %2642 = vmatpush1.bf16.msra.mxu0 0
        %2643 = vmatprep.subr.bf16.mxu0 0
        %2644 = vmatpush1.bf16.msra.mxu0 0
        %2645 = vmatprep.mubr.bf16.mxu0 0
        %2646 = vmatmul.mubr.bf16.gmra.mrb[0].mxu0 %v2562
        %v2647 = vpop.f32.mrb[0].mxu0
        %v2648 = vadd.f32 0.0, %v2647
        %v2649 = vpop.f32.mrb[0].mxu0
        %v2650 = vpop.f32.mrb[0].mxu0
        %v2651 = vadd.f32 0.0, %v2650
        %v2652 = vpop.f32.mrb[0].mxu0
        %2653 = vmatprep.mubr.bf16.mxu0 0
        %2654 = vmatmul.mubr.bf16.gmra.mrb[0].mxu0 %v2565
        %v2655 = vpop.f32.mrb[0].mxu0
        %v2656 = vadd.f32 0.0, %v2655
        %v2657 = vpop.f32.mrb[0].mxu0
        %v2658 = vpop.f32.mrb[0].mxu0
        %v2659 = vadd.f32 0.0, %v2658
        %v2660 = vpop.f32.mrb[0].mxu0
        %2661 = vmatprep.mubr.bf16.mxu0 0
        %2662 = vmatmul.mubr.bf16.gmra.mrb[0].mxu0 %v2568
        %v2663 = vpop.f32.mrb[0].mxu0
        %v2664 = vadd.f32 0.0, %v2663
        %v2665 = vpop.f32.mrb[0].mxu0
        %v2666 = vpop.f32.mrb[0].mxu0
        %v2667 = vadd.f32 0.0, %v2666
        %v2668 = vpop.f32.mrb[0].mxu0
        %2669 = vmatprep.mubr.bf16.mxu0 0
        %2670 = vmatmul.mubr.bf16.gmra.mrb[0].mxu0 %v2571
        %v2671 = vpop.f32.mrb[0].mxu0
        %v2672 = vadd.f32 0.0, %v2671
        %v2673 = vpop.f32.mrb[0].mxu0
        %v2674 = vpop.f32.mrb[0].mxu0
        %v2675 = vadd.f32 0.0, %v2674
        %v2676 = vpop.f32.mrb[0].mxu0
        %2677 = vmatprep.mubr.bf16.mxu0 0
        %2678 = vmatmul.mubr.bf16.gmra.mrb[0].mxu0 %v2574
        %v2679 = vpop.f32.mrb[0].mxu0
        %v2680 = vadd.f32 0.0, %v2679
        %v2681 = vpop.f32.mrb[0].mxu0
        %v2682 = vpop.f32.mrb[0].mxu0
        %v2683 = vadd.f32 0.0, %v2682
        %v2684 = vpop.f32.mrb[0].mxu0
        %2685 = vmatprep.mubr.bf16.mxu0 0
        %2686 = vmatmul.mubr.bf16.gmra.mrb[0].mxu0 %v2577
        %v2687 = vpop.f32.mrb[0].mxu0
        %v2688 = vadd.f32 0.0, %v2687
        %v2689 = vpop.f32.mrb[0].mxu0
        %v2690 = vpop.f32.mrb[0].mxu0
        %v2691 = vadd.f32 0.0, %v2690
        %v2692 = vpop.f32.mrb[0].mxu0
        %2693 = vmatprep.mubr.bf16.mxu0 0
        %2694 = vmatmul.mubr.bf16.gmra.mrb[0].mxu0 %v2580
        %v2695 = vpop.f32.mrb[0].mxu0
        %v2696 = vadd.f32 0.0, %v2695
        %v2697 = vpop.f32.mrb[0].mxu0
        %v2698 = vpop.f32.mrb[0].mxu0
        %v2699 = vadd.f32 0.0, %v2698
        %v2700 = vpop.f32.mrb[0].mxu0
        %2701 = vmatprep.mubr.bf16.mxu0 0
        %2702 = vmatmul.mubr.bf16.gmra.mrb[0].mxu0 %v2583
        %v2703 = vpop.f32.mrb[0].mxu0
        %v2704 = vadd.f32 0.0, %v2703
        %v2705 = vpop.f32.mrb[0].mxu0
        %v2706 = vpop.f32.mrb[0].mxu0
        %v2707 = vadd.f32 0.0, %v2706
        %v2708 = vpop.f32.mrb[0].mxu0
        %2709 = vmatprep.mubr.bf16.mxu0 0
        %2710 = vmatmul.mubr.bf16.gmra.mrb[0].mxu0 %v2586
        %v2711 = vpop.f32.mrb[0].mxu0
        %v2712 = vadd.f32 0.0, %v2711
        %v2713 = vpop.f32.mrb[0].mxu0
        %v2714 = vpop.f32.mrb[0].mxu0
        %v2715 = vadd.f32 0.0, %v2714
        %v2716 = vpop.f32.mrb[0].mxu0
        %2717 = vmatprep.mubr.bf16.mxu0 0
        %2718 = vmatmul.mubr.bf16.gmra.mrb[0].mxu0 %v2589
        %v2719 = vpop.f32.mrb[0].mxu0
        %v2720 = vadd.f32 0.0, %v2719
        %v2721 = vpop.f32.mrb[0].mxu0
        %v2722 = vpop.f32.mrb[0].mxu0
        %v2723 = vadd.f32 0.0, %v2722
        %v2724 = vpop.f32.mrb[0].mxu0
        %2725 = vmatprep.mubr.bf16.mxu0 0
        %2726 = vmatmul.mubr.bf16.gmra.mrb[0].mxu0 %v2592
        %v2727 = vpop.f32.mrb[0].mxu0
        %v2728 = vadd.f32 0.0, %v2727
        %v2729 = vpop.f32.mrb[0].mxu0
        %v2730 = vpop.f32.mrb[0].mxu0
        %v2731 = vadd.f32 0.0, %v2730
        %v2732 = vpop.f32.mrb[0].mxu0
        %2733 = vmatprep.mubr.bf16.mxu0 0
        %2734 = vmatmul.mubr.bf16.gmra.mrb[0].mxu0 %v2595
        %v2735 = vpop.f32.mrb[0].mxu0
        %v2736 = vadd.f32 0.0, %v2735
        %v2737 = vpop.f32.mrb[0].mxu0
        %v2738 = vpop.f32.mrb[0].mxu0
        %v2739 = vadd.f32 0.0, %v2738
        %v2740 = vpop.f32.mrb[0].mxu0
        %2741 = vmatprep.mubr.bf16.mxu0 0
        %2742 = vmatmul.mubr.bf16.gmra.mrb[0].mxu0 %v2598
        %v2743 = vpop.f32.mrb[0].mxu0
        %v2744 = vadd.f32 0.0, %v2743
        %v2745 = vpop.f32.mrb[0].mxu0
        %v2746 = vpop.f32.mrb[0].mxu0
        %v2747 = vadd.f32 0.0, %v2746
        %v2748 = vpop.f32.mrb[0].mxu0
        %2749 = vmatprep.mubr.bf16.mxu0 0
        %2750 = vmatmul.mubr.bf16.gmra.mrb[0].mxu0 %v2601
        %v2751 = vpop.f32.mrb[0].mxu0
        %v2752 = vadd.f32 0.0, %v2751
        %v2753 = vpop.f32.mrb[0].mxu0
        %v2754 = vpop.f32.mrb[0].mxu0
        %v2755 = vadd.f32 0.0, %v2754
        %v2756 = vpop.f32.mrb[0].mxu0
        %2757 = vmatprep.mubr.bf16.mxu0 0
        %2758 = vmatmul.mubr.bf16.gmra.mrb[0].mxu0 %v2604
        %v2759 = vpop.f32.mrb[0].mxu0
        %v2760 = vadd.f32 0.0, %v2759
        %v2761 = vpop.f32.mrb[0].mxu0
        %v2762 = vpop.f32.mrb[0].mxu0
        %v2763 = vadd.f32 0.0, %v2762
        %v2764 = vpop.f32.mrb[0].mxu0
        %2765 = vmatprep.mubr.bf16.mxu0 0
        %2766 = vmatmul.mubr.bf16.gmra.mrb[0].mxu0 %v2607
        %v2767 = vpop.f32.mrb[0].mxu0
        %v2768 = vadd.f32 0.0, %v2767
        %v2769 = vpop.f32.mrb[0].mxu0
        %v2770 = vpop.f32.mrb[0].mxu0
        %v2771 = vadd.f32 0.0, %v2770
        %v2772 = vpop.f32.mrb[0].mxu0
        %2773 = vdwg.mxu0
        %2774 = vst.msk [vmem:[#allocation4] sm:$0xff] %vm1232, %v2648
        %2775 = vst.msk [vmem:[#allocation4 + $0x8] sm:$0xff] %vm1232, %v2651
        %2776 = vst.msk [vmem:[#allocation4 + $0x10] sm:$0xff] %vm1232, %v2656
        %2777 = vst.msk [vmem:[#allocation4 + $0x18] sm:$0xff] %vm1232, %v2659
        %2778 = vst.msk [vmem:[#allocation4 + $0x20] sm:$0xff] %vm1232, %v2664
        %2779 = vst.msk [vmem:[#allocation4 + $0x28] sm:$0xff] %vm1232, %v2667
        %2780 = vst.msk [vmem:[#allocation4 + $0x30] sm:$0xff] %vm1232, %v2672
        %2781 = vst.msk [vmem:[#allocation4 + $0x38] sm:$0xff] %vm1232, %v2675
        %2782 = vst.msk [vmem:[#allocation4 + $0x40] sm:$0xff] %vm1232, %v2680
        %2783 = vst.msk [vmem:[#allocation4 + $0x48] sm:$0xff] %vm1232, %v2683
        %2784 = vst.msk [vmem:[#allocation4 + $0x50] sm:$0xff] %vm1232, %v2688
        %2785 = vst.msk [vmem:[#allocation4 + $0x58] sm:$0xff] %vm1232, %v2691
        %2786 = vst.msk [vmem:[#allocation4 + $0x60] sm:$0xff] %vm1232, %v2696
        %2787 = vst.msk [vmem:[#allocation4 + $0x68] sm:$0xff] %vm1232, %v2699
        %2788 = vst.msk [vmem:[#allocation4 + $0x70] sm:$0xff] %vm1232, %v2704
        %2789 = vst.msk [vmem:[#allocation4 + $0x78] sm:$0xff] %vm1232, %v2707
        %2790 = vst.msk [vmem:[#allocation4 + $0x80] sm:$0xff] %vm1232, %v2712
        %2791 = vst.msk [vmem:[#allocation4 + $0x88] sm:$0xff] %vm1232, %v2715
        %2792 = vst.msk [vmem:[#allocation4 + $0x90] sm:$0xff] %vm1232, %v2720
        %2793 = vst.msk [vmem:[#allocation4 + $0x98] sm:$0xff] %vm1232, %v2723
        %2794 = vst.msk [vmem:[#allocation4 + $0xa0] sm:$0xff] %vm1232, %v2728
        %2795 = vst.msk [vmem:[#allocation4 + $0xa8] sm:$0xff] %vm1232, %v2731
        %2796 = vst.msk [vmem:[#allocation4 + $0xb0] sm:$0xff] %vm1232, %v2736
        %2797 = vst.msk [vmem:[#allocation4 + $0xb8] sm:$0xff] %vm1232, %v2739
        %2798 = vst.msk [vmem:[#allocation4 + $0xc0] sm:$0xff] %vm1232, %v2744
        %2799 = vst.msk [vmem:[#allocation4 + $0xc8] sm:$0xff] %vm1232, %v2747
        %2800 = vst.msk [vmem:[#allocation4 + $0xd0] sm:$0xff] %vm1232, %v2752
        %2801 = vst.msk [vmem:[#allocation4 + $0xd8] sm:$0xff] %vm1232, %v2755
        %2802 = vst.msk [vmem:[#allocation4 + $0xe0] sm:$0xff] %vm1232, %v2760
        %2803 = vst.msk [vmem:[#allocation4 + $0xe8] sm:$0xff] %vm1232, %v2763
        %2804 = vst.msk [vmem:[#allocation4 + $0xf0] sm:$0xff] %vm1232, %v2768
        %2805 = vst.msk [vmem:[#allocation4 + $0xf8] sm:$0xff] %vm1232, %v2771
        %v2806 = vld [vmem:[%s2264] sm:$0xff]
        %v2807 = vld [vmem:[%s2264 + $0x8] sm:$0xff]
        %v2808 = vld [vmem:[%s2264 + $0x10] sm:$0xff]
        %v2809 = vld [vmem:[%s2264 + $0x18] sm:$0xff]
        %v2810 = vld [vmem:[%s2264 + $0x20] sm:$0xff]
        %v2811 = vld [vmem:[%s2264 + $0x28] sm:$0xff]
        %v2812 = vld [vmem:[%s2264 + $0x30] sm:$0xff]
        %v2813 = vld [vmem:[%s2264 + $0x38] sm:$0xff]
        %v2814 = vld [vmem:[%s2264 + $0x40] sm:$0xff]
        %v2815 = vld [vmem:[%s2264 + $0x48] sm:$0xff]
        %v2816 = vld [vmem:[%s2264 + $0x50] sm:$0xff]
        %v2817 = vld [vmem:[%s2264 + $0x58] sm:$0xff]
        %v2818 = vld [vmem:[%s2264 + $0x60] sm:$0xff]
        %v2819 = vld [vmem:[%s2264 + $0x68] sm:$0xff]
        %v2820 = vld [vmem:[%s2264 + $0x70] sm:$0xff]
        %v2821 = vld [vmem:[%s2264 + $0x78] sm:$0xff]
        %v2822 = vld [vmem:[%s2264 + $0x80] sm:$0xff]
        %v2823 = vld [vmem:[%s2264 + $0x88] sm:$0xff]
        %v2824 = vld [vmem:[%s2264 + $0x90] sm:$0xff]
        %v2825 = vld [vmem:[%s2264 + $0x98] sm:$0xff]
        %v2826 = vld [vmem:[%s2264 + $0xa0] sm:$0xff]
        %v2827 = vld [vmem:[%s2264 + $0xa8] sm:$0xff]
        %v2828 = vld [vmem:[%s2264 + $0xb0] sm:$0xff]
        %v2829 = vld [vmem:[%s2264 + $0xb8] sm:$0xff]
        %v2830 = vld [vmem:[%s2264 + $0xc0] sm:$0xff]
        %v2831 = vld [vmem:[%s2264 + $0xc8] sm:$0xff]
        %v2832 = vld [vmem:[%s2264 + $0xd0] sm:$0xff]
        %v2833 = vld [vmem:[%s2264 + $0xd8] sm:$0xff]
        %v2834 = vld [vmem:[%s2264 + $0xe0] sm:$0xff]
        %v2835 = vld [vmem:[%s2264 + $0xe8] sm:$0xff]
        %v2836 = vld [vmem:[%s2264 + $0xf0] sm:$0xff]
        %v2837 = vld [vmem:[%s2264 + $0xf8] sm:$0xff]
        %v2838 = vpack.c.bf16 %v2807, %v2806
        %v2839 = vpack.c.bf16 %v2809, %v2808
        %v2840 = vpack.c.bf16 %v2811, %v2810
        %v2841 = vpack.c.bf16 %v2813, %v2812
        %v2842 = vpack.c.bf16 %v2815, %v2814
        %v2843 = vpack.c.bf16 %v2817, %v2816
        %v2844 = vpack.c.bf16 %v2819, %v2818
        %v2845 = vpack.c.bf16 %v2821, %v2820
        %v2846 = vpack.c.bf16 %v2823, %v2822
        %v2847 = vpack.c.bf16 %v2825, %v2824
        %v2848 = vpack.c.bf16 %v2827, %v2826
        %v2849 = vpack.c.bf16 %v2829, %v2828
        %v2850 = vpack.c.bf16 %v2831, %v2830
        %v2851 = vpack.c.bf16 %v2833, %v2832
        %v2852 = vpack.c.bf16 %v2835, %v2834
        %v2853 = vpack.c.bf16 %v2837, %v2836
        %s2854 = scalar_lea.vmem [#allocation16], 12
        %v2855 = vld [vmem:[%s2854] sm:$0xf]
        %v2856 = vld [vmem:[%s2854 + $0x4] sm:$0xf]
        %v2857 = vld [vmem:[%s2854 + $0x8] sm:$0xf]
        %v2861 = vunpack.c.l.b16 %v2855
        %v2862 = vunpack.c.l.b16 %v2856
        %v2863 = vunpack.c.l.b16 %v2857
        %v2864 = vpack.c.b16 %v2862, %v2861
        %v2865 = vpack.c.b16 %v2863, %v2863
        %v2868 = vsel %vm2495, %v2838, 0
        %v2871 = vsel %vm2495, %v2839, 0
        %v2874 = vsel %vm2495, %v2840, 0
        %v2877 = vsel %vm2495, %v2841, 0
        %v2880 = vsel %vm2495, %v2842, 0
        %v2883 = vsel %vm2495, %v2843, 0
        %v2886 = vsel %vm2495, %v2844, 0
        %v2889 = vsel %vm2495, %v2845, 0
        %v2892 = vsel %vm2495, %v2846, 0
        %v2895 = vsel %vm2495, %v2847, 0
        %v2898 = vsel %vm2495, %v2848, 0
        %v2901 = vsel %vm2495, %v2849, 0
        %v2904 = vsel %vm2495, %v2850, 0
        %v2907 = vsel %vm2495, %v2851, 0
        %v2910 = vsel %vm2495, %v2852, 0
        %v2913 = vsel %vm2495, %v2853, 0
        %v2916 = vsel %vm2609, %v2865, 0
        %2918 = vmatprep.subr.bf16.mxu0 0
        %2919 = vmatpush1.bf16.msra.mxu0 %v2864
        %2920 = vmatprep.subr.bf16.mxu0 0
        %2921 = vmatpush1.bf16.msra.mxu0 %v2916
        %2922 = vmatprep.subr.bf16.mxu0 0
        %2923 = vmatpush1.bf16.msra.mxu0 0
        %2924 = vmatprep.subr.bf16.mxu0 0
        %2925 = vmatpush1.bf16.msra.mxu0 0
        %2926 = vmatprep.subr.bf16.mxu0 0
        %2927 = vmatpush1.bf16.msra.mxu0 0
        %2928 = vmatprep.subr.bf16.mxu0 0
        %2929 = vmatpush1.bf16.msra.mxu0 0
        %2930 = vmatprep.subr.bf16.mxu0 0
        %2931 = vmatpush1.bf16.msra.mxu0 0
        %2932 = vmatprep.subr.bf16.mxu0 0
        %2933 = vmatpush1.bf16.msra.mxu0 0
        %2934 = vmatprep.subr.bf16.mxu0 0
        %2935 = vmatpush1.bf16.msra.mxu0 0
        %2936 = vmatprep.subr.bf16.mxu0 0
        %2937 = vmatpush1.bf16.msra.mxu0 0
        %2938 = vmatprep.subr.bf16.mxu0 0
        %2939 = vmatpush1.bf16.msra.mxu0 0
        %2940 = vmatprep.subr.bf16.mxu0 0
        %2941 = vmatpush1.bf16.msra.mxu0 0
        %2942 = vmatprep.subr.bf16.mxu0 0
        %2943 = vmatpush1.bf16.msra.mxu0 0
        %2944 = vmatprep.subr.bf16.mxu0 0
        %2945 = vmatpush1.bf16.msra.mxu0 0
        %2946 = vmatprep.subr.bf16.mxu0 0
        %2947 = vmatpush1.bf16.msra.mxu0 0
        %2948 = vmatprep.subr.bf16.mxu0 0
        %2949 = vmatpush1.bf16.msra.mxu0 0
        %2950 = vmatprep.mubr.bf16.mxu0 0
        %2951 = vmatmul.mubr.bf16.gmra.mrb[0].mxu0 %v2868
        %v2952 = vpop.f32.mrb[0].mxu0
        %v2953 = vadd.f32 0.0, %v2952
        %v2954 = vpop.f32.mrb[0].mxu0
        %v2955 = vpop.f32.mrb[0].mxu0
        %v2956 = vadd.f32 0.0, %v2955
        %v2957 = vpop.f32.mrb[0].mxu0
        %2958 = vmatprep.mubr.bf16.mxu0 0
        %2959 = vmatmul.mubr.bf16.gmra.mrb[0].mxu0 %v2871
        %v2960 = vpop.f32.mrb[0].mxu0
        %v2961 = vadd.f32 0.0, %v2960
        %v2962 = vpop.f32.mrb[0].mxu0
        %v2963 = vpop.f32.mrb[0].mxu0
        %v2964 = vadd.f32 0.0, %v2963
        %v2965 = vpop.f32.mrb[0].mxu0
        %2966 = vmatprep.mubr.bf16.mxu0 0
        %2967 = vmatmul.mubr.bf16.gmra.mrb[0].mxu0 %v2874
        %v2968 = vpop.f32.mrb[0].mxu0
        %v2969 = vadd.f32 0.0, %v2968
        %v2970 = vpop.f32.mrb[0].mxu0
        %v2971 = vpop.f32.mrb[0].mxu0
        %v2972 = vadd.f32 0.0, %v2971
        %v2973 = vpop.f32.mrb[0].mxu0
        %2974 = vmatprep.mubr.bf16.mxu0 0
        %2975 = vmatmul.mubr.bf16.gmra.mrb[0].mxu0 %v2877
        %v2976 = vpop.f32.mrb[0].mxu0
        %v2977 = vadd.f32 0.0, %v2976
        %v2978 = vpop.f32.mrb[0].mxu0
        %v2979 = vpop.f32.mrb[0].mxu0
        %v2980 = vadd.f32 0.0, %v2979
        %v2981 = vpop.f32.mrb[0].mxu0
        %2982 = vmatprep.mubr.bf16.mxu0 0
        %2983 = vmatmul.mubr.bf16.gmra.mrb[0].mxu0 %v2880
        %v2984 = vpop.f32.mrb[0].mxu0
        %v2985 = vadd.f32 0.0, %v2984
        %v2986 = vpop.f32.mrb[0].mxu0
        %v2987 = vpop.f32.mrb[0].mxu0
        %v2988 = vadd.f32 0.0, %v2987
        %v2989 = vpop.f32.mrb[0].mxu0
        %2990 = vmatprep.mubr.bf16.mxu0 0
        %2991 = vmatmul.mubr.bf16.gmra.mrb[0].mxu0 %v2883
        %v2992 = vpop.f32.mrb[0].mxu0
        %v2993 = vadd.f32 0.0, %v2992
        %v2994 = vpop.f32.mrb[0].mxu0
        %v2995 = vpop.f32.mrb[0].mxu0
        %v2996 = vadd.f32 0.0, %v2995
        %v2997 = vpop.f32.mrb[0].mxu0
        %2998 = vmatprep.mubr.bf16.mxu0 0
        %2999 = vmatmul.mubr.bf16.gmra.mrb[0].mxu0 %v2886
        %v3000 = vpop.f32.mrb[0].mxu0
        %v3001 = vadd.f32 0.0, %v3000
        %v3002 = vpop.f32.mrb[0].mxu0
        %v3003 = vpop.f32.mrb[0].mxu0
        %v3004 = vadd.f32 0.0, %v3003
        %v3005 = vpop.f32.mrb[0].mxu0
        %3006 = vmatprep.mubr.bf16.mxu0 0
        %3007 = vmatmul.mubr.bf16.gmra.mrb[0].mxu0 %v2889
        %v3008 = vpop.f32.mrb[0].mxu0
        %v3009 = vadd.f32 0.0, %v3008
        %v3010 = vpop.f32.mrb[0].mxu0
        %v3011 = vpop.f32.mrb[0].mxu0
        %v3012 = vadd.f32 0.0, %v3011
        %v3013 = vpop.f32.mrb[0].mxu0
        %3014 = vmatprep.mubr.bf16.mxu0 0
        %3015 = vmatmul.mubr.bf16.gmra.mrb[0].mxu0 %v2892
        %v3016 = vpop.f32.mrb[0].mxu0
        %v3017 = vadd.f32 0.0, %v3016
        %v3018 = vpop.f32.mrb[0].mxu0
        %v3019 = vpop.f32.mrb[0].mxu0
        %v3020 = vadd.f32 0.0, %v3019
        %v3021 = vpop.f32.mrb[0].mxu0
        %3022 = vmatprep.mubr.bf16.mxu0 0
        %3023 = vmatmul.mubr.bf16.gmra.mrb[0].mxu0 %v2895
        %v3024 = vpop.f32.mrb[0].mxu0
        %v3025 = vadd.f32 0.0, %v3024
        %v3026 = vpop.f32.mrb[0].mxu0
        %v3027 = vpop.f32.mrb[0].mxu0
        %v3028 = vadd.f32 0.0, %v3027
        %v3029 = vpop.f32.mrb[0].mxu0
        %3030 = vmatprep.mubr.bf16.mxu0 0
        %3031 = vmatmul.mubr.bf16.gmra.mrb[0].mxu0 %v2898
        %v3032 = vpop.f32.mrb[0].mxu0
        %v3033 = vadd.f32 0.0, %v3032
        %v3034 = vpop.f32.mrb[0].mxu0
        %v3035 = vpop.f32.mrb[0].mxu0
        %v3036 = vadd.f32 0.0, %v3035
        %v3037 = vpop.f32.mrb[0].mxu0
        %3038 = vmatprep.mubr.bf16.mxu0 0
        %3039 = vmatmul.mubr.bf16.gmra.mrb[0].mxu0 %v2901
        %v3040 = vpop.f32.mrb[0].mxu0
        %v3041 = vadd.f32 0.0, %v3040
        %v3042 = vpop.f32.mrb[0].mxu0
        %v3043 = vpop.f32.mrb[0].mxu0
        %v3044 = vadd.f32 0.0, %v3043
        %v3045 = vpop.f32.mrb[0].mxu0
        %3046 = vmatprep.mubr.bf16.mxu0 0
        %3047 = vmatmul.mubr.bf16.gmra.mrb[0].mxu0 %v2904
        %v3048 = vpop.f32.mrb[0].mxu0
        %v3049 = vadd.f32 0.0, %v3048
        %v3050 = vpop.f32.mrb[0].mxu0
        %v3051 = vpop.f32.mrb[0].mxu0
        %v3052 = vadd.f32 0.0, %v3051
        %v3053 = vpop.f32.mrb[0].mxu0
        %3054 = vmatprep.mubr.bf16.mxu0 0
        %3055 = vmatmul.mubr.bf16.gmra.mrb[0].mxu0 %v2907
        %v3056 = vpop.f32.mrb[0].mxu0
        %v3057 = vadd.f32 0.0, %v3056
        %v3058 = vpop.f32.mrb[0].mxu0
        %v3059 = vpop.f32.mrb[0].mxu0
        %v3060 = vadd.f32 0.0, %v3059
        %v3061 = vpop.f32.mrb[0].mxu0
        %3062 = vmatprep.mubr.bf16.mxu0 0
        %3063 = vmatmul.mubr.bf16.gmra.mrb[0].mxu0 %v2910
        %v3064 = vpop.f32.mrb[0].mxu0
        %v3065 = vadd.f32 0.0, %v3064
        %v3066 = vpop.f32.mrb[0].mxu0
        %v3067 = vpop.f32.mrb[0].mxu0
        %v3068 = vadd.f32 0.0, %v3067
        %v3069 = vpop.f32.mrb[0].mxu0
        %3070 = vmatprep.mubr.bf16.mxu0 0
        %3071 = vmatmul.mubr.bf16.gmra.mrb[0].mxu0 %v2913
        %v3072 = vpop.f32.mrb[0].mxu0
        %v3073 = vadd.f32 0.0, %v3072
        %v3074 = vpop.f32.mrb[0].mxu0
        %v3075 = vpop.f32.mrb[0].mxu0
        %v3076 = vadd.f32 0.0, %v3075
        %v3077 = vpop.f32.mrb[0].mxu0
        %3078 = vdwg.mxu0
        %v3079 = vld [vmem:[#allocation4] sm:$0xff]
        %v3080 = vld [vmem:[#allocation4 + $0x8] sm:$0xff]
        %v3081 = vld [vmem:[#allocation4 + $0x10] sm:$0xff]
        %v3082 = vld [vmem:[#allocation4 + $0x18] sm:$0xff]
        %v3083 = vld [vmem:[#allocation4 + $0x20] sm:$0xff]
        %v3084 = vld [vmem:[#allocation4 + $0x28] sm:$0xff]
        %v3085 = vld [vmem:[#allocation4 + $0x30] sm:$0xff]
        %v3086 = vld [vmem:[#allocation4 + $0x38] sm:$0xff]
        %v3087 = vld [vmem:[#allocation4 + $0x40] sm:$0xff]
        %v3088 = vld [vmem:[#allocation4 + $0x48] sm:$0xff]
        %v3089 = vld [vmem:[#allocation4 + $0x50] sm:$0xff]
        %v3090 = vld [vmem:[#allocation4 + $0x58] sm:$0xff]
        %v3091 = vld [vmem:[#allocation4 + $0x60] sm:$0xff]
        %v3092 = vld [vmem:[#allocation4 + $0x68] sm:$0xff]
        %v3093 = vld [vmem:[#allocation4 + $0x70] sm:$0xff]
        %v3094 = vld [vmem:[#allocation4 + $0x78] sm:$0xff]
        %v3095 = vld [vmem:[#allocation4 + $0x80] sm:$0xff]
        %v3096 = vld [vmem:[#allocation4 + $0x88] sm:$0xff]
        %v3097 = vld [vmem:[#allocation4 + $0x90] sm:$0xff]
        %v3098 = vld [vmem:[#allocation4 + $0x98] sm:$0xff]
        %v3099 = vld [vmem:[#allocation4 + $0xa0] sm:$0xff]
        %v3100 = vld [vmem:[#allocation4 + $0xa8] sm:$0xff]
        %v3101 = vld [vmem:[#allocation4 + $0xb0] sm:$0xff]
        %v3102 = vld [vmem:[#allocation4 + $0xb8] sm:$0xff]
        %v3103 = vld [vmem:[#allocation4 + $0xc0] sm:$0xff]
        %v3104 = vld [vmem:[#allocation4 + $0xc8] sm:$0xff]
        %v3105 = vld [vmem:[#allocation4 + $0xd0] sm:$0xff]
        %v3106 = vld [vmem:[#allocation4 + $0xd8] sm:$0xff]
        %v3107 = vld [vmem:[#allocation4 + $0xe0] sm:$0xff]
        %v3108 = vld [vmem:[#allocation4 + $0xe8] sm:$0xff]
        %v3109 = vld [vmem:[#allocation4 + $0xf0] sm:$0xff]
        %v3110 = vld [vmem:[#allocation4 + $0xf8] sm:$0xff]
        %v3111 = vadd.f32 %v3079, %v2953
        %v3112 = vadd.f32 %v3080, %v2956
        %v3113 = vadd.f32 %v3081, %v2961
        %v3114 = vadd.f32 %v3082, %v2964
        %v3115 = vadd.f32 %v3083, %v2969
        %v3116 = vadd.f32 %v3084, %v2972
        %v3117 = vadd.f32 %v3085, %v2977
        %v3118 = vadd.f32 %v3086, %v2980
        %v3119 = vadd.f32 %v3087, %v2985
        %v3120 = vadd.f32 %v3088, %v2988
        %v3121 = vadd.f32 %v3089, %v2993
        %v3122 = vadd.f32 %v3090, %v2996
        %v3123 = vadd.f32 %v3091, %v3001
        %v3124 = vadd.f32 %v3092, %v3004
        %v3125 = vadd.f32 %v3093, %v3009
        %v3126 = vadd.f32 %v3094, %v3012
        %v3127 = vadd.f32 %v3095, %v3017
        %v3128 = vadd.f32 %v3096, %v3020
        %v3129 = vadd.f32 %v3097, %v3025
        %v3130 = vadd.f32 %v3098, %v3028
        %v3131 = vadd.f32 %v3099, %v3033
        %v3132 = vadd.f32 %v3100, %v3036
        %v3133 = vadd.f32 %v3101, %v3041
        %v3134 = vadd.f32 %v3102, %v3044
        %v3135 = vadd.f32 %v3103, %v3049
        %v3136 = vadd.f32 %v3104, %v3052
        %v3137 = vadd.f32 %v3105, %v3057
        %v3138 = vadd.f32 %v3106, %v3060
        %v3139 = vadd.f32 %v3107, %v3065
        %v3140 = vadd.f32 %v3108, %v3068
        %v3141 = vadd.f32 %v3109, %v3073
        %v3142 = vadd.f32 %v3110, %v3076
        %3143 = vst.msk [vmem:[#allocation4] sm:$0xff] %vm1232, %v3111
        %3144 = vst.msk [vmem:[#allocation4 + $0x8] sm:$0xff] %vm1232, %v3112
        %3145 = vst.msk [vmem:[#allocation4 + $0x10] sm:$0xff] %vm1232, %v3113
        %3146 = vst.msk [vmem:[#allocation4 + $0x18] sm:$0xff] %vm1232, %v3114
        %3147 = vst.msk [vmem:[#allocation4 + $0x20] sm:$0xff] %vm1232, %v3115
        %3148 = vst.msk [vmem:[#allocation4 + $0x28] sm:$0xff] %vm1232, %v3116
        %3149 = vst.msk [vmem:[#allocation4 + $0x30] sm:$0xff] %vm1232, %v3117
        %3150 = vst.msk [vmem:[#allocation4 + $0x38] sm:$0xff] %vm1232, %v3118
        %3151 = vst.msk [vmem:[#allocation4 + $0x40] sm:$0xff] %vm1232, %v3119
        %3152 = vst.msk [vmem:[#allocation4 + $0x48] sm:$0xff] %vm1232, %v3120
        %3153 = vst.msk [vmem:[#allocation4 + $0x50] sm:$0xff] %vm1232, %v3121
        %3154 = vst.msk [vmem:[#allocation4 + $0x58] sm:$0xff] %vm1232, %v3122
        %3155 = vst.msk [vmem:[#allocation4 + $0x60] sm:$0xff] %vm1232, %v3123
        %3156 = vst.msk [vmem:[#allocation4 + $0x68] sm:$0xff] %vm1232, %v3124
        %3157 = vst.msk [vmem:[#allocation4 + $0x70] sm:$0xff] %vm1232, %v3125
        %3158 = vst.msk [vmem:[#allocation4 + $0x78] sm:$0xff] %vm1232, %v3126
        %3159 = vst.msk [vmem:[#allocation4 + $0x80] sm:$0xff] %vm1232, %v3127
        %3160 = vst.msk [vmem:[#allocation4 + $0x88] sm:$0xff] %vm1232, %v3128
        %3161 = vst.msk [vmem:[#allocation4 + $0x90] sm:$0xff] %vm1232, %v3129
        %3162 = vst.msk [vmem:[#allocation4 + $0x98] sm:$0xff] %vm1232, %v3130
        %3163 = vst.msk [vmem:[#allocation4 + $0xa0] sm:$0xff] %vm1232, %v3131
        %3164 = vst.msk [vmem:[#allocation4 + $0xa8] sm:$0xff] %vm1232, %v3132
        %3165 = vst.msk [vmem:[#allocation4 + $0xb0] sm:$0xff] %vm1232, %v3133
        %3166 = vst.msk [vmem:[#allocation4 + $0xb8] sm:$0xff] %vm1232, %v3134
        %3167 = vst.msk [vmem:[#allocation4 + $0xc0] sm:$0xff] %vm1232, %v3135
        %3168 = vst.msk [vmem:[#allocation4 + $0xc8] sm:$0xff] %vm1232, %v3136
        %3169 = vst.msk [vmem:[#allocation4 + $0xd0] sm:$0xff] %vm1232, %v3137
        %3170 = vst.msk [vmem:[#allocation4 + $0xd8] sm:$0xff] %vm1232, %v3138
        %3171 = vst.msk [vmem:[#allocation4 + $0xe0] sm:$0xff] %vm1232, %v3139
        %3172 = vst.msk [vmem:[#allocation4 + $0xe8] sm:$0xff] %vm1232, %v3140
        %3173 = vst.msk [vmem:[#allocation4 + $0xf0] sm:$0xff] %vm1232, %v3141
        %3174 = vst.msk [vmem:[#allocation4 + $0xf8] sm:$0xff] %vm1232, %v3142
        %s3175 = scalar_lea.vmem [#allocation3], 32
        %v3176 = vld [vmem:[%s3175] sm:$0xff]
        %v3177 = vld [vmem:[%s3175 + $0x8] sm:$0xff]
        %v3178 = vld [vmem:[%s3175 + $0x10] sm:$0xff]
        %v3179 = vld [vmem:[%s3175 + $0x18] sm:$0xff]
        %v3180 = vld [vmem:[%s3175 + $0x20] sm:$0xff]
        %v3181 = vld [vmem:[%s3175 + $0x28] sm:$0xff]
        %v3182 = vld [vmem:[%s3175 + $0x30] sm:$0xff]
        %v3183 = vld [vmem:[%s3175 + $0x38] sm:$0xff]
        %v3184 = vld [vmem:[%s3175 + $0x40] sm:$0xff]
        %v3185 = vld [vmem:[%s3175 + $0x48] sm:$0xff]
        %v3186 = vld [vmem:[%s3175 + $0x50] sm:$0xff]
        %v3187 = vld [vmem:[%s3175 + $0x58] sm:$0xff]
        %v3188 = vld [vmem:[%s3175 + $0x60] sm:$0xff]
        %v3189 = vld [vmem:[%s3175 + $0x68] sm:$0xff]
        %v3190 = vld [vmem:[%s3175 + $0x70] sm:$0xff]
        %v3191 = vld [vmem:[%s3175 + $0x78] sm:$0xff]
        %v3192 = vld [vmem:[%s3175 + $0x80] sm:$0xff]
        %v3193 = vld [vmem:[%s3175 + $0x88] sm:$0xff]
        %v3194 = vld [vmem:[%s3175 + $0x90] sm:$0xff]
        %v3195 = vld [vmem:[%s3175 + $0x98] sm:$0xff]
        %v3196 = vld [vmem:[%s3175 + $0xa0] sm:$0xff]
        %v3197 = vld [vmem:[%s3175 + $0xa8] sm:$0xff]
        %v3198 = vld [vmem:[%s3175 + $0xb0] sm:$0xff]
        %v3199 = vld [vmem:[%s3175 + $0xb8] sm:$0xff]
        %v3200 = vld [vmem:[%s3175 + $0xc0] sm:$0xff]
        %v3201 = vld [vmem:[%s3175 + $0xc8] sm:$0xff]
        %v3202 = vld [vmem:[%s3175 + $0xd0] sm:$0xff]
        %v3203 = vld [vmem:[%s3175 + $0xd8] sm:$0xff]
        %v3204 = vld [vmem:[%s3175 + $0xe0] sm:$0xff]
        %v3205 = vld [vmem:[%s3175 + $0xe8] sm:$0xff]
        %v3206 = vld [vmem:[%s3175 + $0xf0] sm:$0xff]
        %v3207 = vld [vmem:[%s3175 + $0xf8] sm:$0xff]
        %v3208 = vpack.c.bf16 %v3177, %v3176
        %v3209 = vpack.c.bf16 %v3179, %v3178
        %v3210 = vpack.c.bf16 %v3181, %v3180
        %v3211 = vpack.c.bf16 %v3183, %v3182
        %v3212 = vpack.c.bf16 %v3185, %v3184
        %v3213 = vpack.c.bf16 %v3187, %v3186
        %v3214 = vpack.c.bf16 %v3189, %v3188
        %v3215 = vpack.c.bf16 %v3191, %v3190
        %v3216 = vpack.c.bf16 %v3193, %v3192
        %v3217 = vpack.c.bf16 %v3195, %v3194
        %v3218 = vpack.c.bf16 %v3197, %v3196
        %v3219 = vpack.c.bf16 %v3199, %v3198
        %v3220 = vpack.c.bf16 %v3201, %v3200
        %v3221 = vpack.c.bf16 %v3203, %v3202
        %v3222 = vpack.c.bf16 %v3205, %v3204
        %v3223 = vpack.c.bf16 %v3207, %v3206
        %s3224 = scalar_lea.vmem [#allocation16], 24
        %v3225 = vld [vmem:[%s3224] sm:$0xf]
        %v3226 = vld [vmem:[%s3224 + $0x4] sm:$0xf]
        %v3227 = vld [vmem:[%s3224 + $0x8] sm:$0xf]
        %v3231 = vunpack.c.l.b16 %v3225
        %v3232 = vunpack.c.l.b16 %v3226
        %v3233 = vunpack.c.l.b16 %v3227
        %v3234 = vpack.c.b16 %v3232, %v3231
        %v3235 = vpack.c.b16 %v3233, %v3233
        %v3238 = vsel %vm2495, %v3208, 0
        %v3241 = vsel %vm2495, %v3209, 0
        %v3244 = vsel %vm2495, %v3210, 0
        %v3247 = vsel %vm2495, %v3211, 0
        %v3250 = vsel %vm2495, %v3212, 0
        %v3253 = vsel %vm2495, %v3213, 0
        %v3256 = vsel %vm2495, %v3214, 0
        %v3259 = vsel %vm2495, %v3215, 0
        %v3262 = vsel %vm2495, %v3216, 0
        %v3265 = vsel %vm2495, %v3217, 0
        %v3268 = vsel %vm2495, %v3218, 0
        %v3271 = vsel %vm2495, %v3219, 0
        %v3274 = vsel %vm2495, %v3220, 0
        %v3277 = vsel %vm2495, %v3221, 0
        %v3280 = vsel %vm2495, %v3222, 0
        %v3283 = vsel %vm2495, %v3223, 0
        %v3286 = vsel %vm2609, %v3235, 0
        %3288 = vmatprep.subr.bf16.mxu0 0
        %3289 = vmatpush1.bf16.msra.mxu0 %v3234
        %3290 = vmatprep.subr.bf16.mxu0 0
        %3291 = vmatpush1.bf16.msra.mxu0 %v3286
        %3292 = vmatprep.subr.bf16.mxu0 0
        %3293 = vmatpush1.bf16.msra.mxu0 0
        %3294 = vmatprep.subr.bf16.mxu0 0
        %3295 = vmatpush1.bf16.msra.mxu0 0
        %3296 = vmatprep.subr.bf16.mxu0 0
        %3297 = vmatpush1.bf16.msra.mxu0 0
        %3298 = vmatprep.subr.bf16.mxu0 0
        %3299 = vmatpush1.bf16.msra.mxu0 0
        %3300 = vmatprep.subr.bf16.mxu0 0
        %3301 = vmatpush1.bf16.msra.mxu0 0
        %3302 = vmatprep.subr.bf16.mxu0 0
        %3303 = vmatpush1.bf16.msra.mxu0 0
        %3304 = vmatprep.subr.bf16.mxu0 0
        %3305 = vmatpush1.bf16.msra.mxu0 0
        %3306 = vmatprep.subr.bf16.mxu0 0
        %3307 = vmatpush1.bf16.msra.mxu0 0
        %3308 = vmatprep.subr.bf16.mxu0 0
        %3309 = vmatpush1.bf16.msra.mxu0 0
        %3310 = vmatprep.subr.bf16.mxu0 0
        %3311 = vmatpush1.bf16.msra.mxu0 0
        %3312 = vmatprep.subr.bf16.mxu0 0
        %3313 = vmatpush1.bf16.msra.mxu0 0
        %3314 = vmatprep.subr.bf16.mxu0 0
        %3315 = vmatpush1.bf16.msra.mxu0 0
        %3316 = vmatprep.subr.bf16.mxu0 0
        %3317 = vmatpush1.bf16.msra.mxu0 0
        %3318 = vmatprep.subr.bf16.mxu0 0
        %3319 = vmatpush1.bf16.msra.mxu0 0
        %3320 = vmatprep.mubr.bf16.mxu0 0
        %3321 = vmatmul.mubr.bf16.gmra.mrb[0].mxu0 %v3238
        %v3322 = vpop.f32.mrb[0].mxu0
        %v3323 = vadd.f32 0.0, %v3322
        %v3324 = vpop.f32.mrb[0].mxu0
        %v3325 = vpop.f32.mrb[0].mxu0
        %v3326 = vadd.f32 0.0, %v3325
        %v3327 = vpop.f32.mrb[0].mxu0
        %3328 = vmatprep.mubr.bf16.mxu0 0
        %3329 = vmatmul.mubr.bf16.gmra.mrb[0].mxu0 %v3241
        %v3330 = vpop.f32.mrb[0].mxu0
        %v3331 = vadd.f32 0.0, %v3330
        %v3332 = vpop.f32.mrb[0].mxu0
        %v3333 = vpop.f32.mrb[0].mxu0
        %v3334 = vadd.f32 0.0, %v3333
        %v3335 = vpop.f32.mrb[0].mxu0
        %3336 = vmatprep.mubr.bf16.mxu0 0
        %3337 = vmatmul.mubr.bf16.gmra.mrb[0].mxu0 %v3244
        %v3338 = vpop.f32.mrb[0].mxu0
        %v3339 = vadd.f32 0.0, %v3338
        %v3340 = vpop.f32.mrb[0].mxu0
        %v3341 = vpop.f32.mrb[0].mxu0
        %v3342 = vadd.f32 0.0, %v3341
        %v3343 = vpop.f32.mrb[0].mxu0
        %3344 = vmatprep.mubr.bf16.mxu0 0
        %3345 = vmatmul.mubr.bf16.gmra.mrb[0].mxu0 %v3247
        %v3346 = vpop.f32.mrb[0].mxu0
        %v3347 = vadd.f32 0.0, %v3346
        %v3348 = vpop.f32.mrb[0].mxu0
        %v3349 = vpop.f32.mrb[0].mxu0
        %v3350 = vadd.f32 0.0, %v3349
        %v3351 = vpop.f32.mrb[0].mxu0
        %3352 = vmatprep.mubr.bf16.mxu0 0
        %3353 = vmatmul.mubr.bf16.gmra.mrb[0].mxu0 %v3250
        %v3354 = vpop.f32.mrb[0].mxu0
        %v3355 = vadd.f32 0.0, %v3354
        %v3356 = vpop.f32.mrb[0].mxu0
        %v3357 = vpop.f32.mrb[0].mxu0
        %v3358 = vadd.f32 0.0, %v3357
        %v3359 = vpop.f32.mrb[0].mxu0
        %3360 = vmatprep.mubr.bf16.mxu0 0
        %3361 = vmatmul.mubr.bf16.gmra.mrb[0].mxu0 %v3253
        %v3362 = vpop.f32.mrb[0].mxu0
        %v3363 = vadd.f32 0.0, %v3362
        %v3364 = vpop.f32.mrb[0].mxu0
        %v3365 = vpop.f32.mrb[0].mxu0
        %v3366 = vadd.f32 0.0, %v3365
        %v3367 = vpop.f32.mrb[0].mxu0
        %3368 = vmatprep.mubr.bf16.mxu0 0
        %3369 = vmatmul.mubr.bf16.gmra.mrb[0].mxu0 %v3256
        %v3370 = vpop.f32.mrb[0].mxu0
        %v3371 = vadd.f32 0.0, %v3370
        %v3372 = vpop.f32.mrb[0].mxu0
        %v3373 = vpop.f32.mrb[0].mxu0
        %v3374 = vadd.f32 0.0, %v3373
        %v3375 = vpop.f32.mrb[0].mxu0
        %3376 = vmatprep.mubr.bf16.mxu0 0
        %3377 = vmatmul.mubr.bf16.gmra.mrb[0].mxu0 %v3259
        %v3378 = vpop.f32.mrb[0].mxu0
        %v3379 = vadd.f32 0.0, %v3378
        %v3380 = vpop.f32.mrb[0].mxu0
        %v3381 = vpop.f32.mrb[0].mxu0
        %v3382 = vadd.f32 0.0, %v3381
        %v3383 = vpop.f32.mrb[0].mxu0
        %3384 = vmatprep.mubr.bf16.mxu0 0
        %3385 = vmatmul.mubr.bf16.gmra.mrb[0].mxu0 %v3262
        %v3386 = vpop.f32.mrb[0].mxu0
        %v3387 = vadd.f32 0.0, %v3386
        %v3388 = vpop.f32.mrb[0].mxu0
        %v3389 = vpop.f32.mrb[0].mxu0
        %v3390 = vadd.f32 0.0, %v3389
        %v3391 = vpop.f32.mrb[0].mxu0
        %3392 = vmatprep.mubr.bf16.mxu0 0
        %3393 = vmatmul.mubr.bf16.gmra.mrb[0].mxu0 %v3265
        %v3394 = vpop.f32.mrb[0].mxu0
        %v3395 = vadd.f32 0.0, %v3394
        %v3396 = vpop.f32.mrb[0].mxu0
        %v3397 = vpop.f32.mrb[0].mxu0
        %v3398 = vadd.f32 0.0, %v3397
        %v3399 = vpop.f32.mrb[0].mxu0
        %3400 = vmatprep.mubr.bf16.mxu0 0
        %3401 = vmatmul.mubr.bf16.gmra.mrb[0].mxu0 %v3268
        %v3402 = vpop.f32.mrb[0].mxu0
        %v3403 = vadd.f32 0.0, %v3402
        %v3404 = vpop.f32.mrb[0].mxu0
        %v3405 = vpop.f32.mrb[0].mxu0
        %v3406 = vadd.f32 0.0, %v3405
        %v3407 = vpop.f32.mrb[0].mxu0
        %3408 = vmatprep.mubr.bf16.mxu0 0
        %3409 = vmatmul.mubr.bf16.gmra.mrb[0].mxu0 %v3271
        %v3410 = vpop.f32.mrb[0].mxu0
        %v3411 = vadd.f32 0.0, %v3410
        %v3412 = vpop.f32.mrb[0].mxu0
        %v3413 = vpop.f32.mrb[0].mxu0
        %v3414 = vadd.f32 0.0, %v3413
        %v3415 = vpop.f32.mrb[0].mxu0
        %3416 = vmatprep.mubr.bf16.mxu0 0
        %3417 = vmatmul.mubr.bf16.gmra.mrb[0].mxu0 %v3274
        %v3418 = vpop.f32.mrb[0].mxu0
        %v3419 = vadd.f32 0.0, %v3418
        %v3420 = vpop.f32.mrb[0].mxu0
        %v3421 = vpop.f32.mrb[0].mxu0
        %v3422 = vadd.f32 0.0, %v3421
        %v3423 = vpop.f32.mrb[0].mxu0
        %3424 = vmatprep.mubr.bf16.mxu0 0
        %3425 = vmatmul.mubr.bf16.gmra.mrb[0].mxu0 %v3277
        %v3426 = vpop.f32.mrb[0].mxu0
        %v3427 = vadd.f32 0.0, %v3426
        %v3428 = vpop.f32.mrb[0].mxu0
        %v3429 = vpop.f32.mrb[0].mxu0
        %v3430 = vadd.f32 0.0, %v3429
        %v3431 = vpop.f32.mrb[0].mxu0
        %3432 = vmatprep.mubr.bf16.mxu0 0
        %3433 = vmatmul.mubr.bf16.gmra.mrb[0].mxu0 %v3280
        %v3434 = vpop.f32.mrb[0].mxu0
        %v3435 = vadd.f32 0.0, %v3434
        %v3436 = vpop.f32.mrb[0].mxu0
        %v3437 = vpop.f32.mrb[0].mxu0
        %v3438 = vadd.f32 0.0, %v3437
        %v3439 = vpop.f32.mrb[0].mxu0
        %3440 = vmatprep.mubr.bf16.mxu0 0
        %3441 = vmatmul.mubr.bf16.gmra.mrb[0].mxu0 %v3283
        %v3442 = vpop.f32.mrb[0].mxu0
        %v3443 = vadd.f32 0.0, %v3442
        %v3444 = vpop.f32.mrb[0].mxu0
        %v3445 = vpop.f32.mrb[0].mxu0
        %v3446 = vadd.f32 0.0, %v3445
        %v3447 = vpop.f32.mrb[0].mxu0
        %3448 = vdwg.mxu0
        %v3449 = vld [vmem:[#allocation4] sm:$0xff]
        %v3450 = vld [vmem:[#allocation4 + $0x8] sm:$0xff]
        %v3451 = vld [vmem:[#allocation4 + $0x10] sm:$0xff]
        %v3452 = vld [vmem:[#allocation4 + $0x18] sm:$0xff]
        %v3453 = vld [vmem:[#allocation4 + $0x20] sm:$0xff]
        %v3454 = vld [vmem:[#allocation4 + $0x28] sm:$0xff]
        %v3455 = vld [vmem:[#allocation4 + $0x30] sm:$0xff]
        %v3456 = vld [vmem:[#allocation4 + $0x38] sm:$0xff]
        %v3457 = vld [vmem:[#allocation4 + $0x40] sm:$0xff]
        %v3458 = vld [vmem:[#allocation4 + $0x48] sm:$0xff]
        %v3459 = vld [vmem:[#allocation4 + $0x50] sm:$0xff]
        %v3460 = vld [vmem:[#allocation4 + $0x58] sm:$0xff]
        %v3461 = vld [vmem:[#allocation4 + $0x60] sm:$0xff]
        %v3462 = vld [vmem:[#allocation4 + $0x68] sm:$0xff]
        %v3463 = vld [vmem:[#allocation4 + $0x70] sm:$0xff]
        %v3464 = vld [vmem:[#allocation4 + $0x78] sm:$0xff]
        %v3465 = vld [vmem:[#allocation4 + $0x80] sm:$0xff]
        %v3466 = vld [vmem:[#allocation4 + $0x88] sm:$0xff]
        %v3467 = vld [vmem:[#allocation4 + $0x90] sm:$0xff]
        %v3468 = vld [vmem:[#allocation4 + $0x98] sm:$0xff]
        %v3469 = vld [vmem:[#allocation4 + $0xa0] sm:$0xff]
        %v3470 = vld [vmem:[#allocation4 + $0xa8] sm:$0xff]
        %v3471 = vld [vmem:[#allocation4 + $0xb0] sm:$0xff]
        %v3472 = vld [vmem:[#allocation4 + $0xb8] sm:$0xff]
        %v3473 = vld [vmem:[#allocation4 + $0xc0] sm:$0xff]
        %v3474 = vld [vmem:[#allocation4 + $0xc8] sm:$0xff]
        %v3475 = vld [vmem:[#allocation4 + $0xd0] sm:$0xff]
        %v3476 = vld [vmem:[#allocation4 + $0xd8] sm:$0xff]
        %v3477 = vld [vmem:[#allocation4 + $0xe0] sm:$0xff]
        %v3478 = vld [vmem:[#allocation4 + $0xe8] sm:$0xff]
        %v3479 = vld [vmem:[#allocation4 + $0xf0] sm:$0xff]
        %v3480 = vld [vmem:[#allocation4 + $0xf8] sm:$0xff]
        %v3481 = vadd.f32 %v3449, %v3323
        %v3482 = vadd.f32 %v3450, %v3326
        %v3483 = vadd.f32 %v3451, %v3331
        %v3484 = vadd.f32 %v3452, %v3334
        %v3485 = vadd.f32 %v3453, %v3339
        %v3486 = vadd.f32 %v3454, %v3342
        %v3487 = vadd.f32 %v3455, %v3347
        %v3488 = vadd.f32 %v3456, %v3350
        %v3489 = vadd.f32 %v3457, %v3355
        %v3490 = vadd.f32 %v3458, %v3358
        %v3491 = vadd.f32 %v3459, %v3363
        %v3492 = vadd.f32 %v3460, %v3366
        %v3493 = vadd.f32 %v3461, %v3371
        %v3494 = vadd.f32 %v3462, %v3374
        %v3495 = vadd.f32 %v3463, %v3379
        %v3496 = vadd.f32 %v3464, %v3382
        %v3497 = vadd.f32 %v3465, %v3387
        %v3498 = vadd.f32 %v3466, %v3390
        %v3499 = vadd.f32 %v3467, %v3395
        %v3500 = vadd.f32 %v3468, %v3398
        %v3501 = vadd.f32 %v3469, %v3403
        %v3502 = vadd.f32 %v3470, %v3406
        %v3503 = vadd.f32 %v3471, %v3411
        %v3504 = vadd.f32 %v3472, %v3414
        %v3505 = vadd.f32 %v3473, %v3419
        %v3506 = vadd.f32 %v3474, %v3422
        %v3507 = vadd.f32 %v3475, %v3427
        %v3508 = vadd.f32 %v3476, %v3430
        %v3509 = vadd.f32 %v3477, %v3435
        %v3510 = vadd.f32 %v3478, %v3438
        %v3511 = vadd.f32 %v3479, %v3443
        %v3512 = vadd.f32 %v3480, %v3446
        %3513 = vst.msk [vmem:[#allocation4] sm:$0xff] %vm1232, %v3481
        %3514 = vst.msk [vmem:[#allocation4 + $0x8] sm:$0xff] %vm1232, %v3482
        %3515 = vst.msk [vmem:[#allocation4 + $0x10] sm:$0xff] %vm1232, %v3483
        %3516 = vst.msk [vmem:[#allocation4 + $0x18] sm:$0xff] %vm1232, %v3484
        %3517 = vst.msk [vmem:[#allocation4 + $0x20] sm:$0xff] %vm1232, %v3485
        %3518 = vst.msk [vmem:[#allocation4 + $0x28] sm:$0xff] %vm1232, %v3486
        %3519 = vst.msk [vmem:[#allocation4 + $0x30] sm:$0xff] %vm1232, %v3487
        %3520 = vst.msk [vmem:[#allocation4 + $0x38] sm:$0xff] %vm1232, %v3488
        %3521 = vst.msk [vmem:[#allocation4 + $0x40] sm:$0xff] %vm1232, %v3489
        %3522 = vst.msk [vmem:[#allocation4 + $0x48] sm:$0xff] %vm1232, %v3490
        %3523 = vst.msk [vmem:[#allocation4 + $0x50] sm:$0xff] %vm1232, %v3491
        %3524 = vst.msk [vmem:[#allocation4 + $0x58] sm:$0xff] %vm1232, %v3492
        %3525 = vst.msk [vmem:[#allocation4 + $0x60] sm:$0xff] %vm1232, %v3493
        %3526 = vst.msk [vmem:[#allocation4 + $0x68] sm:$0xff] %vm1232, %v3494
        %3527 = vst.msk [vmem:[#allocation4 + $0x70] sm:$0xff] %vm1232, %v3495
        %3528 = vst.msk [vmem:[#allocation4 + $0x78] sm:$0xff] %vm1232, %v3496
        %3529 = vst.msk [vmem:[#allocation4 + $0x80] sm:$0xff] %vm1232, %v3497
        %3530 = vst.msk [vmem:[#allocation4 + $0x88] sm:$0xff] %vm1232, %v3498
        %3531 = vst.msk [vmem:[#allocation4 + $0x90] sm:$0xff] %vm1232, %v3499
        %3532 = vst.msk [vmem:[#allocation4 + $0x98] sm:$0xff] %vm1232, %v3500
        %3533 = vst.msk [vmem:[#allocation4 + $0xa0] sm:$0xff] %vm1232, %v3501
        %3534 = vst.msk [vmem:[#allocation4 + $0xa8] sm:$0xff] %vm1232, %v3502
        %3535 = vst.msk [vmem:[#allocation4 + $0xb0] sm:$0xff] %vm1232, %v3503
        %3536 = vst.msk [vmem:[#allocation4 + $0xb8] sm:$0xff] %vm1232, %v3504
        %3537 = vst.msk [vmem:[#allocation4 + $0xc0] sm:$0xff] %vm1232, %v3505
        %3538 = vst.msk [vmem:[#allocation4 + $0xc8] sm:$0xff] %vm1232, %v3506
        %3539 = vst.msk [vmem:[#allocation4 + $0xd0] sm:$0xff] %vm1232, %v3507
        %3540 = vst.msk [vmem:[#allocation4 + $0xd8] sm:$0xff] %vm1232, %v3508
        %3541 = vst.msk [vmem:[#allocation4 + $0xe0] sm:$0xff] %vm1232, %v3509
        %3542 = vst.msk [vmem:[#allocation4 + $0xe8] sm:$0xff] %vm1232, %v3510
        %3543 = vst.msk [vmem:[#allocation4 + $0xf0] sm:$0xff] %vm1232, %v3511
        %3544 = vst.msk [vmem:[#allocation4 + $0xf8] sm:$0xff] %vm1232, %v3512
        %v3545 = vpack.c.bf16 %v457, %v456
        %v3546 = vpack.c.bf16 %v459, %v458
        %v3547 = vpack.c.bf16 %v461, %v460
        %v3548 = vpack.c.bf16 %v463, %v462
        %v3549 = vpack.c.bf16 %v465, %v464
        %v3550 = vpack.c.bf16 %v467, %v466
        %v3551 = vpack.c.bf16 %v469, %v468
        %v3552 = vpack.c.bf16 %v471, %v470
        %v3553 = vpack.c.bf16 %v473, %v472
        %v3554 = vpack.c.bf16 %v475, %v474
        %v3555 = vpack.c.bf16 %v477, %v476
        %v3556 = vpack.c.bf16 %v479, %v478
        %v3557 = vpack.c.bf16 %v481, %v480
        %v3558 = vpack.c.bf16 %v483, %v482
        %v3559 = vpack.c.bf16 %v485, %v484
        %v3560 = vpack.c.bf16 %v487, %v486
        %v3561 = vld [vmem:[#allocation17] sm:$0x3]
        %v3563 = vsel %vm760, %v3545, 0
        %v3566 = vsel %vm760, %v3546, 0
        %v3569 = vsel %vm760, %v3547, 0
        %v3572 = vsel %vm760, %v3548, 0
        %v3575 = vsel %vm760, %v3549, 0
        %v3578 = vsel %vm760, %v3550, 0
        %v3581 = vsel %vm760, %v3551, 0
        %v3584 = vsel %vm760, %v3552, 0
        %v3587 = vsel %vm760, %v3553, 0
        %v3590 = vsel %vm760, %v3554, 0
        %v3593 = vsel %vm760, %v3555, 0
        %v3596 = vsel %vm760, %v3556, 0
        %v3599 = vsel %vm760, %v3557, 0
        %v3602 = vsel %vm760, %v3558, 0
        %v3605 = vsel %vm760, %v3559, 0
        %v3608 = vsel %vm760, %v3560, 0
        %vm3610 = vcmask 1041408
        %v3612 = vsel %vm3610, %v3561, 0
        %3614 = vmatprep.subr.bf16.mxu0 0
        %3615 = vmatpush1.bf16.msra.mxu0 %v3612
        %3616 = vmatprep.subr.bf16.mxu0 0
        %3617 = vmatpush1.bf16.msra.mxu0 0
        %3618 = vmatprep.subr.bf16.mxu0 0
        %3619 = vmatpush1.bf16.msra.mxu0 0
        %3620 = vmatprep.subr.bf16.mxu0 0
        %3621 = vmatpush1.bf16.msra.mxu0 0
        %3622 = vmatprep.subr.bf16.mxu0 0
        %3623 = vmatpush1.bf16.msra.mxu0 0
        %3624 = vmatprep.subr.bf16.mxu0 0
        %3625 = vmatpush1.bf16.msra.mxu0 0
        %3626 = vmatprep.subr.bf16.mxu0 0
        %3627 = vmatpush1.bf16.msra.mxu0 0
        %3628 = vmatprep.subr.bf16.mxu0 0
        %3629 = vmatpush1.bf16.msra.mxu0 0
        %3630 = vmatprep.subr.bf16.mxu0 0
        %3631 = vmatpush1.bf16.msra.mxu0 0
        %3632 = vmatprep.subr.bf16.mxu0 0
        %3633 = vmatpush1.bf16.msra.mxu0 0
        %3634 = vmatprep.subr.bf16.mxu0 0
        %3635 = vmatpush1.bf16.msra.mxu0 0
        %3636 = vmatprep.subr.bf16.mxu0 0
        %3637 = vmatpush1.bf16.msra.mxu0 0
        %3638 = vmatprep.subr.bf16.mxu0 0
        %3639 = vmatpush1.bf16.msra.mxu0 0
        %3640 = vmatprep.subr.bf16.mxu0 0
        %3641 = vmatpush1.bf16.msra.mxu0 0
        %3642 = vmatprep.subr.bf16.mxu0 0
        %3643 = vmatpush1.bf16.msra.mxu0 0
        %3644 = vmatprep.subr.bf16.mxu0 0
        %3645 = vmatpush1.bf16.msra.mxu0 0
        %3646 = vmatprep.mubr.bf16.mxu0 0
        %3647 = vmatmul.mubr.bf16.gmra.mrb[0].mxu0 %v3563
        %v3648 = vpop.f32.mrb[0].mxu0
        %v3649 = vadd.f32 0.0, %v3648
        %v3650 = vpop.f32.mrb[0].mxu0
        %v3651 = vpop.f32.mrb[0].mxu0
        %v3652 = vadd.f32 0.0, %v3651
        %v3653 = vpop.f32.mrb[0].mxu0
        %3654 = vmatprep.mubr.bf16.mxu0 0
        %3655 = vmatmul.mubr.bf16.gmra.mrb[0].mxu0 %v3566
        %v3656 = vpop.f32.mrb[0].mxu0
        %v3657 = vadd.f32 0.0, %v3656
        %v3658 = vpop.f32.mrb[0].mxu0
        %v3659 = vpop.f32.mrb[0].mxu0
        %v3660 = vadd.f32 0.0, %v3659
        %v3661 = vpop.f32.mrb[0].mxu0
        %3662 = vmatprep.mubr.bf16.mxu0 0
        %3663 = vmatmul.mubr.bf16.gmra.mrb[0].mxu0 %v3569
        %v3664 = vpop.f32.mrb[0].mxu0
        %v3665 = vadd.f32 0.0, %v3664
        %v3666 = vpop.f32.mrb[0].mxu0
        %v3667 = vpop.f32.mrb[0].mxu0
        %v3668 = vadd.f32 0.0, %v3667
        %v3669 = vpop.f32.mrb[0].mxu0
        %3670 = vmatprep.mubr.bf16.mxu0 0
        %3671 = vmatmul.mubr.bf16.gmra.mrb[0].mxu0 %v3572
        %v3672 = vpop.f32.mrb[0].mxu0
        %v3673 = vadd.f32 0.0, %v3672
        %v3674 = vpop.f32.mrb[0].mxu0
        %v3675 = vpop.f32.mrb[0].mxu0
        %v3676 = vadd.f32 0.0, %v3675
        %v3677 = vpop.f32.mrb[0].mxu0
        %3678 = vmatprep.mubr.bf16.mxu0 0
        %3679 = vmatmul.mubr.bf16.gmra.mrb[0].mxu0 %v3575
        %v3680 = vpop.f32.mrb[0].mxu0
        %v3681 = vadd.f32 0.0, %v3680
        %v3682 = vpop.f32.mrb[0].mxu0
        %v3683 = vpop.f32.mrb[0].mxu0
        %v3684 = vadd.f32 0.0, %v3683
        %v3685 = vpop.f32.mrb[0].mxu0
        %3686 = vmatprep.mubr.bf16.mxu0 0
        %3687 = vmatmul.mubr.bf16.gmra.mrb[0].mxu0 %v3578
        %v3688 = vpop.f32.mrb[0].mxu0
        %v3689 = vadd.f32 0.0, %v3688
        %v3690 = vpop.f32.mrb[0].mxu0
        %v3691 = vpop.f32.mrb[0].mxu0
        %v3692 = vadd.f32 0.0, %v3691
        %v3693 = vpop.f32.mrb[0].mxu0
        %3694 = vmatprep.mubr.bf16.mxu0 0
        %3695 = vmatmul.mubr.bf16.gmra.mrb[0].mxu0 %v3581
        %v3696 = vpop.f32.mrb[0].mxu0
        %v3697 = vadd.f32 0.0, %v3696
        %v3698 = vpop.f32.mrb[0].mxu0
        %v3699 = vpop.f32.mrb[0].mxu0
        %v3700 = vadd.f32 0.0, %v3699
        %v3701 = vpop.f32.mrb[0].mxu0
        %3702 = vmatprep.mubr.bf16.mxu0 0
        %3703 = vmatmul.mubr.bf16.gmra.mrb[0].mxu0 %v3584
        %v3704 = vpop.f32.mrb[0].mxu0
        %v3705 = vadd.f32 0.0, %v3704
        %v3706 = vpop.f32.mrb[0].mxu0
        %v3707 = vpop.f32.mrb[0].mxu0
        %v3708 = vadd.f32 0.0, %v3707
        %v3709 = vpop.f32.mrb[0].mxu0
        %3710 = vmatprep.mubr.bf16.mxu0 0
        %3711 = vmatmul.mubr.bf16.gmra.mrb[0].mxu0 %v3587
        %v3712 = vpop.f32.mrb[0].mxu0
        %v3713 = vadd.f32 0.0, %v3712
        %v3714 = vpop.f32.mrb[0].mxu0
        %v3715 = vpop.f32.mrb[0].mxu0
        %v3716 = vadd.f32 0.0, %v3715
        %v3717 = vpop.f32.mrb[0].mxu0
        %3718 = vmatprep.mubr.bf16.mxu0 0
        %3719 = vmatmul.mubr.bf16.gmra.mrb[0].mxu0 %v3590
        %v3720 = vpop.f32.mrb[0].mxu0
        %v3721 = vadd.f32 0.0, %v3720
        %v3722 = vpop.f32.mrb[0].mxu0
        %v3723 = vpop.f32.mrb[0].mxu0
        %v3724 = vadd.f32 0.0, %v3723
        %v3725 = vpop.f32.mrb[0].mxu0
        %3726 = vmatprep.mubr.bf16.mxu0 0
        %3727 = vmatmul.mubr.bf16.gmra.mrb[0].mxu0 %v3593
        %v3728 = vpop.f32.mrb[0].mxu0
        %v3729 = vadd.f32 0.0, %v3728
        %v3730 = vpop.f32.mrb[0].mxu0
        %v3731 = vpop.f32.mrb[0].mxu0
        %v3732 = vadd.f32 0.0, %v3731
        %v3733 = vpop.f32.mrb[0].mxu0
        %3734 = vmatprep.mubr.bf16.mxu0 0
        %3735 = vmatmul.mubr.bf16.gmra.mrb[0].mxu0 %v3596
        %v3736 = vpop.f32.mrb[0].mxu0
        %v3737 = vadd.f32 0.0, %v3736
        %v3738 = vpop.f32.mrb[0].mxu0
        %v3739 = vpop.f32.mrb[0].mxu0
        %v3740 = vadd.f32 0.0, %v3739
        %v3741 = vpop.f32.mrb[0].mxu0
        %3742 = vmatprep.mubr.bf16.mxu0 0
        %3743 = vmatmul.mubr.bf16.gmra.mrb[0].mxu0 %v3599
        %v3744 = vpop.f32.mrb[0].mxu0
        %v3745 = vadd.f32 0.0, %v3744
        %v3746 = vpop.f32.mrb[0].mxu0
        %v3747 = vpop.f32.mrb[0].mxu0
        %v3748 = vadd.f32 0.0, %v3747
        %v3749 = vpop.f32.mrb[0].mxu0
        %3750 = vmatprep.mubr.bf16.mxu0 0
        %3751 = vmatmul.mubr.bf16.gmra.mrb[0].mxu0 %v3602
        %v3752 = vpop.f32.mrb[0].mxu0
        %v3753 = vadd.f32 0.0, %v3752
        %v3754 = vpop.f32.mrb[0].mxu0
        %v3755 = vpop.f32.mrb[0].mxu0
        %v3756 = vadd.f32 0.0, %v3755
        %v3757 = vpop.f32.mrb[0].mxu0
        %3758 = vmatprep.mubr.bf16.mxu0 0
        %3759 = vmatmul.mubr.bf16.gmra.mrb[0].mxu0 %v3605
        %v3760 = vpop.f32.mrb[0].mxu0
        %v3761 = vadd.f32 0.0, %v3760
        %v3762 = vpop.f32.mrb[0].mxu0
        %v3763 = vpop.f32.mrb[0].mxu0
        %v3764 = vadd.f32 0.0, %v3763
        %v3765 = vpop.f32.mrb[0].mxu0
        %3766 = vmatprep.mubr.bf16.mxu0 0
        %3767 = vmatmul.mubr.bf16.gmra.mrb[0].mxu0 %v3608
        %v3768 = vpop.f32.mrb[0].mxu0
        %v3769 = vadd.f32 0.0, %v3768
        %v3770 = vpop.f32.mrb[0].mxu0
        %v3771 = vpop.f32.mrb[0].mxu0
        %v3772 = vadd.f32 0.0, %v3771
        %v3773 = vpop.f32.mrb[0].mxu0
        %3774 = vdwg.mxu0
        %v3775 = vld [vmem:[#allocation4] sm:$0xff]
        %v3776 = vld [vmem:[#allocation4 + $0x8] sm:$0xff]
        %v3777 = vld [vmem:[#allocation4 + $0x10] sm:$0xff]
        %v3778 = vld [vmem:[#allocation4 + $0x18] sm:$0xff]
        %v3779 = vld [vmem:[#allocation4 + $0x20] sm:$0xff]
        %v3780 = vld [vmem:[#allocation4 + $0x28] sm:$0xff]
        %v3781 = vld [vmem:[#allocation4 + $0x30] sm:$0xff]
        %v3782 = vld [vmem:[#allocation4 + $0x38] sm:$0xff]
        %v3783 = vld [vmem:[#allocation4 + $0x40] sm:$0xff]
        %v3784 = vld [vmem:[#allocation4 + $0x48] sm:$0xff]
        %v3785 = vld [vmem:[#allocation4 + $0x50] sm:$0xff]
        %v3786 = vld [vmem:[#allocation4 + $0x58] sm:$0xff]
        %v3787 = vld [vmem:[#allocation4 + $0x60] sm:$0xff]
        %v3788 = vld [vmem:[#allocation4 + $0x68] sm:$0xff]
        %v3789 = vld [vmem:[#allocation4 + $0x70] sm:$0xff]
        %v3790 = vld [vmem:[#allocation4 + $0x78] sm:$0xff]
        %v3791 = vld [vmem:[#allocation4 + $0x80] sm:$0xff]
        %v3792 = vld [vmem:[#allocation4 + $0x88] sm:$0xff]
        %v3793 = vld [vmem:[#allocation4 + $0x90] sm:$0xff]
        %v3794 = vld [vmem:[#allocation4 + $0x98] sm:$0xff]
        %v3795 = vld [vmem:[#allocation4 + $0xa0] sm:$0xff]
        %v3796 = vld [vmem:[#allocation4 + $0xa8] sm:$0xff]
        %v3797 = vld [vmem:[#allocation4 + $0xb0] sm:$0xff]
        %v3798 = vld [vmem:[#allocation4 + $0xb8] sm:$0xff]
        %v3799 = vld [vmem:[#allocation4 + $0xc0] sm:$0xff]
        %v3800 = vld [vmem:[#allocation4 + $0xc8] sm:$0xff]
        %v3801 = vld [vmem:[#allocation4 + $0xd0] sm:$0xff]
        %v3802 = vld [vmem:[#allocation4 + $0xd8] sm:$0xff]
        %v3803 = vld [vmem:[#allocation4 + $0xe0] sm:$0xff]
        %v3804 = vld [vmem:[#allocation4 + $0xe8] sm:$0xff]
        %v3805 = vld [vmem:[#allocation4 + $0xf0] sm:$0xff]
        %v3806 = vld [vmem:[#allocation4 + $0xf8] sm:$0xff]
        %v3807 = vadd.f32 %v3775, %v3649
        %v3808 = vadd.f32 %v3776, %v3652
        %v3809 = vadd.f32 %v3777, %v3657
        %v3810 = vadd.f32 %v3778, %v3660
        %v3811 = vadd.f32 %v3779, %v3665
        %v3812 = vadd.f32 %v3780, %v3668
        %v3813 = vadd.f32 %v3781, %v3673
        %v3814 = vadd.f32 %v3782, %v3676
        %v3815 = vadd.f32 %v3783, %v3681
        %v3816 = vadd.f32 %v3784, %v3684
        %v3817 = vadd.f32 %v3785, %v3689
        %v3818 = vadd.f32 %v3786, %v3692
        %v3819 = vadd.f32 %v3787, %v3697
        %v3820 = vadd.f32 %v3788, %v3700
        %v3821 = vadd.f32 %v3789, %v3705
        %v3822 = vadd.f32 %v3790, %v3708
        %v3823 = vadd.f32 %v3791, %v3713
        %v3824 = vadd.f32 %v3792, %v3716
        %v3825 = vadd.f32 %v3793, %v3721
        %v3826 = vadd.f32 %v3794, %v3724
        %v3827 = vadd.f32 %v3795, %v3729
        %v3828 = vadd.f32 %v3796, %v3732
        %v3829 = vadd.f32 %v3797, %v3737
        %v3830 = vadd.f32 %v3798, %v3740
        %v3831 = vadd.f32 %v3799, %v3745
        %v3832 = vadd.f32 %v3800, %v3748
        %v3833 = vadd.f32 %v3801, %v3753
        %v3834 = vadd.f32 %v3802, %v3756
        %v3835 = vadd.f32 %v3803, %v3761
        %v3836 = vadd.f32 %v3804, %v3764
        %v3837 = vadd.f32 %v3805, %v3769
        %v3838 = vadd.f32 %v3806, %v3772
        %v3839 = vld [vmem:[#allocation19] sm:$0x1]
        %v3841 = vlaneseq
        %v3842 = vshrl.u32 %v3841, 7
        %v3843 = vsub.s32 0, %v3842
        %v3844 = vrot.slane %v3839, %v3843
        %v3846 = vadd.f32 %v3807, %v3844
        %v3847 = vadd.f32 %v3808, %v3844
        %v3848 = vadd.f32 %v3809, %v3844
        %v3849 = vadd.f32 %v3810, %v3844
        %v3850 = vadd.f32 %v3811, %v3844
        %v3851 = vadd.f32 %v3812, %v3844
        %v3852 = vadd.f32 %v3813, %v3844
        %v3853 = vadd.f32 %v3814, %v3844
        %v3854 = vadd.f32 %v3815, %v3844
        %v3855 = vadd.f32 %v3816, %v3844
        %v3856 = vadd.f32 %v3817, %v3844
        %v3857 = vadd.f32 %v3818, %v3844
        %v3858 = vadd.f32 %v3819, %v3844
        %v3859 = vadd.f32 %v3820, %v3844
        %v3860 = vadd.f32 %v3821, %v3844
        %v3861 = vadd.f32 %v3822, %v3844
        %v3862 = vadd.f32 %v3823, %v3844
        %v3863 = vadd.f32 %v3824, %v3844
        %v3864 = vadd.f32 %v3825, %v3844
        %v3865 = vadd.f32 %v3826, %v3844
        %v3866 = vadd.f32 %v3827, %v3844
        %v3867 = vadd.f32 %v3828, %v3844
        %v3868 = vadd.f32 %v3829, %v3844
        %v3869 = vadd.f32 %v3830, %v3844
        %v3870 = vadd.f32 %v3831, %v3844
        %v3871 = vadd.f32 %v3832, %v3844
        %v3872 = vadd.f32 %v3833, %v3844
        %v3873 = vadd.f32 %v3834, %v3844
        %v3874 = vadd.f32 %v3835, %v3844
        %v3875 = vadd.f32 %v3836, %v3844
        %v3876 = vadd.f32 %v3837, %v3844
        %v3877 = vadd.f32 %v3838, %v3844
        %3878 = vst.msk [vmem:[%s454] sm:$0xff] %vm1232, %v3846
        %3879 = vst.msk [vmem:[%s454 + $0x8] sm:$0xff] %vm1232, %v3847
        %3880 = vst.msk [vmem:[%s454 + $0x10] sm:$0xff] %vm1232, %v3848
        %3881 = vst.msk [vmem:[%s454 + $0x18] sm:$0xff] %vm1232, %v3849
        %3882 = vst.msk [vmem:[%s454 + $0x20] sm:$0xff] %vm1232, %v3850
        %3883 = vst.msk [vmem:[%s454 + $0x28] sm:$0xff] %vm1232, %v3851
        %3884 = vst.msk [vmem:[%s454 + $0x30] sm:$0xff] %vm1232, %v3852
        %3885 = vst.msk [vmem:[%s454 + $0x38] sm:$0xff] %vm1232, %v3853
        %3886 = vst.msk [vmem:[%s454 + $0x40] sm:$0xff] %vm1232, %v3854
        %3887 = vst.msk [vmem:[%s454 + $0x48] sm:$0xff] %vm1232, %v3855
        %3888 = vst.msk [vmem:[%s454 + $0x50] sm:$0xff] %vm1232, %v3856
        %3889 = vst.msk [vmem:[%s454 + $0x58] sm:$0xff] %vm1232, %v3857
        %3890 = vst.msk [vmem:[%s454 + $0x60] sm:$0xff] %vm1232, %v3858
        %3891 = vst.msk [vmem:[%s454 + $0x68] sm:$0xff] %vm1232, %v3859
        %3892 = vst.msk [vmem:[%s454 + $0x70] sm:$0xff] %vm1232, %v3860
        %3893 = vst.msk [vmem:[%s454 + $0x78] sm:$0xff] %vm1232, %v3861
        %3894 = vst.msk [vmem:[%s454 + $0x80] sm:$0xff] %vm1232, %v3862
        %3895 = vst.msk [vmem:[%s454 + $0x88] sm:$0xff] %vm1232, %v3863
        %3896 = vst.msk [vmem:[%s454 + $0x90] sm:$0xff] %vm1232, %v3864
        %3897 = vst.msk [vmem:[%s454 + $0x98] sm:$0xff] %vm1232, %v3865
        %3898 = vst.msk [vmem:[%s454 + $0xa0] sm:$0xff] %vm1232, %v3866
        %3899 = vst.msk [vmem:[%s454 + $0xa8] sm:$0xff] %vm1232, %v3867
        %3900 = vst.msk [vmem:[%s454 + $0xb0] sm:$0xff] %vm1232, %v3868
        %3901 = vst.msk [vmem:[%s454 + $0xb8] sm:$0xff] %vm1232, %v3869
        %3902 = vst.msk [vmem:[%s454 + $0xc0] sm:$0xff] %vm1232, %v3870
        %3903 = vst.msk [vmem:[%s454 + $0xc8] sm:$0xff] %vm1232, %v3871
        %3904 = vst.msk [vmem:[%s454 + $0xd0] sm:$0xff] %vm1232, %v3872
        %3905 = vst.msk [vmem:[%s454 + $0xd8] sm:$0xff] %vm1232, %v3873
        %3906 = vst.msk [vmem:[%s454 + $0xe0] sm:$0xff] %vm1232, %v3874
        %3907 = vst.msk [vmem:[%s454 + $0xe8] sm:$0xff] %vm1232, %v3875
        %3908 = vst.msk [vmem:[%s454 + $0xf0] sm:$0xff] %vm1232, %v3876
        %3909 = vst.msk [vmem:[%s454 + $0xf8] sm:$0xff] %vm1232, %v3877
        %s3910 = sand.u32 %s232, 1
        %s3911 = scalar_lea.sflag [#allocation7], %s3910
        %s3912 = sand.u32 %s232, 1
        %s3913 = smul.addr %s3912, 256
        %s3914 = scalar_lea.vmem [#allocation20], %s3913
        // Predicated region
        $region93: #{tpu_custom_call.1} parent=55 // pred_check
          %p3915 = pneg %p242
        $region94: #{tpu_custom_call.1} parent=55 // pred_check_branch
          %3917 = sbr.rel (%p3915) target = $region96
        $region95: #{tpu_custom_call.1} parent=55 // pred_region
          %s3919 = ssub.s32 4096, 4096
          %3920 = vsyncadd %s3911, %s3919
          %s3921 = smul.addr %s30, 32
          %s3922 = smul.addr %s3921, 128
          %s3923 = scalar_lea.hbm %s9, %s3922
          %s3924 = sshll.u32 %s3914, 4
          %s3925 = int_to_ptr.vmem [resolvable:$true] %s3924
          %3930 = dma.vmem_to_hbm [thread:$0]  %s3925, 4096, %s3923, %s3911, 128, 128, 8
        $region96: #{tpu_custom_call.1} parent=55 // pred_fallthru
          _
      $region56: #{tpu_custom_call.1} parent=5 // pred_fallthru
        _
      %p3931 = scmp.le.s32.totalorder 2, %s25
      // Predicated region
      $region97: #{tpu_custom_call.1} parent=5 // pred_check
        %p3932 = pneg %p3931
      $region98: #{tpu_custom_call.1} parent=5 // pred_check_branch
        %3934 = sbr.rel (%p3932) target = $region100
      $region99: #{tpu_custom_call.1} parent=5 // pred_region
        %s3935 = ssub.s32 %s25, 2
        // Predicated region
        $region101: #{tpu_custom_call.1} parent=99 // pred_check
          %p3936 = pneg %p248
        $region102: #{tpu_custom_call.1} parent=99 // pred_check_branch
          %3938 = sbr.rel (%p3936) target = $region104
        $region103: #{tpu_custom_call.1} parent=99 // pred_region
          %s3939 = sand.u32 %s233, 1
          %s3940 = scalar_lea.sflag [#allocation7], %s3939
          %s3941 = sand.u32 %s233, 1
          %s3942 = smul.addr %s3941, 256
          %s3943 = scalar_lea.vmem [#allocation20], %s3942
          %3944 = dma.done %s3940, 4096
        $region104: #{tpu_custom_call.1} parent=99 // pred_fallthru
          _
      $region100: #{tpu_custom_call.1} parent=5 // pred_fallthru
        _
    $region6: #{tpu_custom_call.1} parent=1 // loop_footer
      %s29 = sadd.s32 1, %s25
    $region7: #{tpu_custom_call.1} parent=1 // loop_footer_branch
      %24 = sbr.rel target = $region3
    $region8: #{tpu_custom_call.1} parent=1 // loop_exit
      _
    %3945 = vsyncpa [#allocation6], 1
    %s3946 = scalar_lea.sflag [#allocation6], 1
    %3947 = vsyncpa %s3946, 1
    %3948 = vsyncpa [#allocation9], 1
    %3949 = vsyncpa [#allocation12], 1
    %3950 = vsyncpa [#allocation15], 1
    %3951 = vsyncpa [#allocation18], 1
    %3952 = vsyncpa [#allocation7], 1
    %s3953 = scalar_lea.sflag [#allocation7], 1
    %3954 = vsyncpa %s3953, 1

</llo_original>
